<compile_context>
chip_gen: v7x
topology: tpu7x:2x2x1
jax: 0.10.0
libtpu: 0.0.40
codegen_flags: <defaults>
</compile_context>

<pallas_src>
import math
from functools import partial

import jax
import jax.numpy as jnp
from jax.experimental import pallas as pl
from jax.experimental.pallas import tpu as pltpu


# ----------------------------- kernel ---------------------------------------


def _layernorm(x, gamma, beta, eps):
    mean = jnp.mean(x, axis=-1, keepdims=True)
    var = jnp.mean((x - mean) ** 2, axis=-1, keepdims=True)  # biased, like torch
    return (x - mean) * jax.lax.rsqrt(var + eps) * gamma + beta


def encoder_layer_kernel(eps, nhead, approx_recip,
                         x_ref,
                         wqkv_ref, bqkv_ref, wo_ref, bo_ref,
                         w1_ref, b1_ref, w2_ref, b2_ref,
                         g1_ref, be1_ref, g2_ref, be2_ref,
                         o_ref):
    seq, bt, emb = x_ref.shape          # tile in original (S, B_TILE, E) layout
    hd = emb // nhead
    cdt = wqkv_ref.dtype                # matmul compute dtype (bf16 or f32)

    x = x_ref[...].astype(jnp.float32)          # (S, BT, E)
    xm = x.reshape(seq * bt, emb)               # rows in (s, b) order

    # ---- fused QKV projection: one MXU matmul over all S*BT rows ----------
    # (softmax scale pre-folded into the Q columns of wqkv / bqkv)
    qkv = jnp.dot(xm.astype(cdt), wqkv_ref[...],
                  preferred_element_type=jnp.float32) + bqkv_ref[...]   # (S*BT, 3E)

    # ---- head-batched attention --------------------------------------------
    # One static slice + reshape + transpose per operand (no per-head slicing,
    # no stack); last dim stays minor so the relayout is cheap.
    def to_heads(cols):                                   # cols: (S*BT, E)
        t = cols.reshape(seq, bt, nhead, hd)
        t = jnp.transpose(t, (1, 2, 0, 3))                # (BT, nhead, S, hd)
        return t.reshape(bt * nhead, seq, hd).astype(cdt)

    qs = to_heads(qkv[:, :emb])
    ks = to_heads(qkv[:, emb:2 * emb])
    vs = to_heads(qkv[:, 2 * emb:])

    s = jnp.einsum('gqd,gkd->gqk', qs, ks,
                   preferred_element_type=jnp.float32)    # (G, S, S) f32
    # Fused softmax: shifted scores and probabilities never both live in f32.
    p = jnp.exp(s - jnp.max(s, axis=-1, keepdims=True))
    denom = jnp.sum(p, axis=-1, keepdims=True)
    if approx_recip:
        p = (p * pl.reciprocal(denom, approx=True)).astype(cdt)  # EUP slot
    else:
        p = (p / denom).astype(cdt)
    ctx = jnp.einsum('gqk,gkd->gqd', p, vs,
                     preferred_element_type=jnp.float32)  # (G, S, hd) f32

    # ---- output projection: single full-depth (K = E) matmul ---------------
    ctx = ctx.reshape(bt, nhead, seq, hd)
    ctx = jnp.transpose(ctx, (2, 0, 1, 3))                # (S, BT, nhead, hd)
    ctx = ctx.reshape(seq * bt, emb).astype(cdt)          # back to (s, b) rows
    attn = jnp.dot(ctx, wo_ref[...],
                   preferred_element_type=jnp.float32) + bo_ref[...]

    # dropout1 == identity (eval mode)
    y = _layernorm(xm + attn, g1_ref[...], be1_ref[...], eps)

    # ---- feed-forward block (ReLU); dropout == identity ---------------------
    h1 = jnp.dot(y.astype(cdt), w1_ref[...],
                 preferred_element_type=jnp.float32) + b1_ref[...]
    h1 = jnp.maximum(h1, 0.0)
    ffo = jnp.dot(h1.astype(cdt), w2_ref[...],
                  preferred_element_type=jnp.float32) + b2_ref[...]

    # dropout2 == identity (eval mode)
    z = _layernorm(y + ffo, g2_ref[...], be2_ref[...], eps)
    o_ref[...] = z.reshape(seq, bt, emb).astype(o_ref.dtype)


# ----------------------------- wrapper ---------------------------------------


def _vmem_capacity():
    try:
        return pltpu.get_tpu_info().vmem_capacity_bytes
    except Exception:
        return 64 * 1024 * 1024


def _pick_vmem_limit():
    """Raise scoped-VMEM above the 32 MiB default where the chip allows."""
    cap = _vmem_capacity()
    lim = min((3 * cap) // 4, 96 * 1024 * 1024)
    return lim if lim >= 32 * 1024 * 1024 else None


def _tile_vmem_bytes(bt, S, E, ff, nhead, itemsize):
    """Rough peak-VMEM estimate for one grid step (activations only)."""
    rows = bt * S
    g = bt * nhead
    b = 0
    b += 2 * 2 * rows * E * 4            # x tile + out tile, double buffered
    b += rows * 3 * E * 4                # qkv f32
    b += 3 * rows * E * itemsize         # q/k/v head stacks (compute dtype)
    b += 2 * g * S * S * 4               # scores + probs peak (f32)
    b += 3 * rows * E * 4                # ctx / attn / y f32
    b += rows * ff * (4 + itemsize)      # h1 f32 + compute-dtype cast
    b += 2 * rows * E * 4                # ffo / z
    return b


def _choose_b_tile(N, S, E, ff, nhead, cdt):
    """VMEM-budgeted, MXU-alignment-aware batch-tile selection."""
    itemsize = jnp.dtype(cdt).itemsize
    weight_bytes = (4 * E * E + 2 * E * ff) * itemsize + (8 * E + ff) * 4
    budget = int(0.7 * _vmem_capacity()) - 2 * weight_bytes
    # Batch is the second-minor block dim on the (S, N, E) layout, so a
    # partial tile must be sublane (8) aligned; the full batch always works.
    cands = [d for d in range(8, N, 8) if N % d == 0] + [N]
    feasible = [d for d in cands
                if _tile_vmem_bytes(d, S, E, ff, nhead, itemsize) <= budget]
    if not feasible:
        return min(cands)

    def pref(d):   # prefer 256-aligned rows (v6e/v7x MXU), then 128 (v5e), then size
        rows = d * S
        return (rows % 256 == 0, rows % 128 == 0, d)

    best = max(feasible, key=pref)
    # Keep >= 2 grid steps when cheap (v7x has two TensorCores) without
    # shrinking the per-step M below 256 rows.
    multi = [d for d in feasible if N // d >= 2 and d * S >= 256]
    if N // best < 2 and multi:
        best = max(multi, key=pref)
    return best


def prepare_params(params, *, nhead, compute_dtype=jnp.bfloat16):
    """One-time weight preparation (hoisted out of the per-call path):
    fold the 1/sqrt(head_dim) softmax scale into the Q columns of the fused
    QKV projection and cast matmul weights to the MXU compute dtype."""
    E = params["wo_t"].shape[0]
    hd = E // nhead
    scale = 1.0 / math.sqrt(hd)
    return {
        "wqkv_t": params["wqkv_t"].at[:, :E].multiply(scale).astype(compute_dtype),
        "bqkv": params["bqkv"].at[:, :E].multiply(scale).astype(jnp.float32),
        "wo_t": params["wo_t"].astype(compute_dtype),
        "bo": params["bo"].astype(jnp.float32),
        "w1_t": params["w1_t"].astype(compute_dtype),
        "b1": params["b1"].astype(jnp.float32),
        "w2_t": params["w2_t"].astype(compute_dtype),
        "b2": params["b2"].astype(jnp.float32),
        "g1": params["g1"].astype(jnp.float32),
        "be1": params["be1"].astype(jnp.float32),
        "g2": params["g2"].astype(jnp.float32),
        "be2": params["be2"].astype(jnp.float32),
    }


def transformer_encoder_layer(src, prepared, *, nhead, eps=1e-5, b_tile=None):
    """src: (S, N, E) float32 (PyTorch batch_first=False layout).
    `prepared` is the output of prepare_params (weights scaled / pre-cast)."""
    S, N, E = src.shape
    hd = E // nhead
    ff = prepared["w1_t"].shape[1]
    cdt = prepared["wqkv_t"].dtype

    if b_tile is None:
        b_tile = _choose_b_tile(N, S, E, ff, nhead, cdt)
    assert N % b_tile == 0
    assert b_tile == N or b_tile % 8 == 0, "partial batch tiles must be 8-aligned"
    grid = (N // b_tile,)

    # Advisory cost estimate so XLA can schedule neighbors around the kernel.
    rows = N * S
    mm_flops = 2 * rows * (3 * E * E + E * E + 2 * E * ff)
    attn_flops = 4 * N * nhead * S * S * hd
    cost = pl.CostEstimate(
        flops=int(mm_flops + attn_flops),
        transcendentals=int(N * nhead * S * S),
        bytes_accessed=int(2 * rows * E * 4
                           + (4 * E * E + 2 * E * ff) * jnp.dtype(cdt).itemsize),
    )

    cp_kwargs = dict(dimension_semantics=("parallel",))
    vmem_limit = _pick_vmem_limit()
    if vmem_limit is not None:
        cp_kwargs["vmem_limit_bytes"] = vmem_limit

    kernel = partial(encoder_layer_kernel, eps, nhead, cdt != jnp.float32)

    weight_shapes = [
        (E, 3 * E), (1, 3 * E),      # wqkv_t, bqkv
        (E, E), (1, E),              # wo_t, bo
        (E, ff), (1, ff),            # w1_t, b1
        (ff, E), (1, E),             # w2_t, b2
        (1, E), (1, E), (1, E), (1, E),   # g1, be1, g2, be2
    ]
    args = (src,
            prepared["wqkv_t"], prepared["bqkv"], prepared["wo_t"], prepared["bo"],
            prepared["w1_t"], prepared["b1"], prepared["w2_t"], prepared["b2"],
            prepared["g1"], prepared["be1"], prepared["g2"], prepared["be2"])

    def make_call(single_buffer_weights):
        def wspec(shape):
            idx = lambda b, _n=len(shape): (0,) * _n
            if single_buffer_weights:
                try:
                    # Constant-index weights: single buffer (no double buffering).
                    return pl.BlockSpec(shape, idx, pipeline_mode=pl.Buffered(1))
                except TypeError:
                    pass
            return pl.BlockSpec(shape, idx)

        in_specs = [pl.BlockSpec((S, b_tile, E), lambda b: (0, b, 0))]
        in_specs += [wspec(s) for s in weight_shapes]
        return pl.pallas_call(
            kernel,
            out_shape=jax.ShapeDtypeStruct((S, N, E), src.dtype),
            grid=grid,
            in_specs=in_specs,
            out_specs=pl.BlockSpec((S, b_tile, E), lambda b: (0, b, 0)),
            compiler_params=pltpu.CompilerParams(**cp_kwargs),
            cost_estimate=cost,
        )

    try:
        return make_call(True)(*args)
    except Exception:
        # pipeline_mode=Buffered(1) unavailable on this jax version; fall back
        # to default double-buffered weights (same semantics).
        return make_call(False)(*args)


# ------------------------- pure-JAX reference --------------------------------


def reference_layer(src, params, *, nhead, eps=1e-5):
    S, N, E = src.shape
    hd = E // nhead
    scale = 1.0 / math.sqrt(hd)

    def per_batch(xb):                         # xb: (S, E)
        qkv = xb @ params["wqkv_t"] + params["bqkv"][0]
        q, k, v = qkv[:, :E], qkv[:, E:2 * E], qkv[:, 2 * E:]
        outs = []
        for h in range(nhead):
            lo = h * hd
            s = (q[:, lo:lo + hd] * scale) @ k[:, lo:lo + hd].T
            p = jax.nn.softmax(s, axis=-1)
            outs.append(p @ v[:, lo:lo + hd])
        attn = jnp.concatenate(outs, axis=-1) @ params["wo_t"] + params["bo"][0]

        def ln(x, g, b):
            m = jnp.mean(x, -1, keepdims=True)
            va = jnp.mean((x - m) ** 2, -1, keepdims=True)
            return (x - m) * jax.lax.rsqrt(va + eps) * g + b

        y = ln(xb + attn, params["g1"][0], params["be1"][0])
        h1 = jnp.maximum(y @ params["w1_t"] + params["b1"][0], 0.0)
        ffo = h1 @ params["w2_t"] + params["b2"][0]
        return ln(y + ffo, params["g2"][0], params["be2"][0])

    return jnp.transpose(jax.vmap(per_batch)(jnp.transpose(src, (1, 0, 2))),
                         (1, 0, 2))


# ----------------------------- main ------------------------------------------


def init_params(key, d_model, nhead, dim_ff):
    ks = jax.random.split(key, 8)
    # PyTorch-layout weights, stored pre-transposed for x @ W_t.
    wqkv = jax.random.normal(ks[0], (3 * d_model, d_model), jnp.float32) * 0.05
    bqkv = jax.random.normal(ks[1], (3 * d_model,), jnp.float32) * 0.01
    wo = jax.random.normal(ks[2], (d_model, d_model), jnp.float32) * 0.05
    bo = jax.random.normal(ks[3], (d_model,), jnp.float32) * 0.01
    w1 = jax.random.normal(ks[4], (dim_ff, d_model), jnp.float32) * 0.05
    b1 = jax.random.normal(ks[5], (dim_ff,), jnp.float32) * 0.01
    w2 = jax.random.normal(ks[6], (d_model, dim_ff), jnp.float32) * 0.05
    b2 = jax.random.normal(ks[7], (d_model,), jnp.float32) * 0.01
    return {
        "wqkv_t": wqkv.T, "bqkv": bqkv.reshape(1, -1),
        "wo_t": wo.T, "bo": bo.reshape(1, -1),
        "w1_t": w1.T, "b1": b1.reshape(1, -1),
        "w2_t": w2.T, "b2": b2.reshape(1, -1),
        "g1": jnp.ones((1, d_model), jnp.float32),
        "be1": jnp.zeros((1, d_model), jnp.float32),
        "g2": jnp.ones((1, d_model), jnp.float32),
        "be2": jnp.zeros((1, d_model), jnp.float32),
    }


if __name__ == "__main__":
    S, N, d_model, nhead, dim_ff = 8, 2, 32, 4, 64

    key = jax.random.PRNGKey(0)
    k_x, k_p = jax.random.split(key)
    src = jax.random.normal(k_x, (S, N, d_model), jnp.float32)
    params = init_params(k_p, d_model, nhead, dim_ff)

    ref = reference_layer(src, params, nhead=nhead, eps=1e-5)

    # Fast path: bf16 MXU operands (f32 accumulation / softmax / LayerNorm).
    prep_bf16 = prepare_params(params, nhead=nhead, compute_dtype=jnp.bfloat16)
    out_bf16 = jax.block_until_ready(
        transformer_encoder_layer(src, prep_bf16, nhead=nhead, eps=1e-5))
    assert out_bf16.shape == (S, N, d_model)
    assert jnp.allclose(out_bf16, ref, atol=3e-2, rtol=3e-2), \
        f"bf16 max abs diff {jnp.max(jnp.abs(out_bf16 - ref))}"

    # Precise path: f32 matmuls, tighter check against the pure-JAX reference.
    prep_f32 = prepare_params(params, nhead=nhead, compute_dtype=jnp.float32)
    out_f32 = jax.block_until_ready(
        transformer_encoder_layer(src, prep_f32, nhead=nhead, eps=1e-5))
    assert out_f32.shape == (S, N, d_model)
    assert jnp.allclose(out_f32, ref, atol=2e-3, rtol=2e-3), \
        f"f32 max abs diff {jnp.max(jnp.abs(out_f32 - ref))}"

    print("KERNEL_OK")
</pallas_src>

<mosaic_0001>
module attributes {stable_mosaic.version = 11 : i64} {
  func.func @encoder_layer_kernel(%arg0: i32, %arg1: memref<8x2x32xf32, #tpu.memory_space<vmem>>, %arg2: memref<32x96xbf16, #tpu.memory_space<vmem>>, %arg3: memref<1x96xf32, #tpu.memory_space<vmem>>, %arg4: memref<32x32xbf16, #tpu.memory_space<vmem>>, %arg5: memref<1x32xf32, #tpu.memory_space<vmem>>, %arg6: memref<32x64xbf16, #tpu.memory_space<vmem>>, %arg7: memref<1x64xf32, #tpu.memory_space<vmem>>, %arg8: memref<64x32xbf16, #tpu.memory_space<vmem>>, %arg9: memref<1x32xf32, #tpu.memory_space<vmem>>, %arg10: memref<1x32xf32, #tpu.memory_space<vmem>>, %arg11: memref<1x32xf32, #tpu.memory_space<vmem>>, %arg12: memref<1x32xf32, #tpu.memory_space<vmem>>, %arg13: memref<1x32xf32, #tpu.memory_space<vmem>>, %arg14: memref<8x2x32xf32, #tpu.memory_space<vmem>>) attributes {dimension_semantics = [#tpu.dimension_semantics<parallel>], iteration_bounds = array<i64: 1>, scalar_prefetch = 0 : i64, scratch_operands = 0 : i64, tpu.core_type = #tpu.core_type<tc>, window_params = [{transform_indices = @transform_0, window_bounds = array<i64: 8, 2, 32>}, {pipeline_mode = #tpu.pipeline_mode<synchronous>, transform_indices = @transform_1, window_bounds = array<i64: 32, 96>}, {pipeline_mode = #tpu.pipeline_mode<synchronous>, transform_indices = @transform_2, window_bounds = array<i64: 1, 96>}, {pipeline_mode = #tpu.pipeline_mode<synchronous>, transform_indices = @transform_3, window_bounds = array<i64: 32, 32>}, {pipeline_mode = #tpu.pipeline_mode<synchronous>, transform_indices = @transform_4, window_bounds = array<i64: 1, 32>}, {pipeline_mode = #tpu.pipeline_mode<synchronous>, transform_indices = @transform_5, window_bounds = array<i64: 32, 64>}, {pipeline_mode = #tpu.pipeline_mode<synchronous>, transform_indices = @transform_6, window_bounds = array<i64: 1, 64>}, {pipeline_mode = #tpu.pipeline_mode<synchronous>, transform_indices = @transform_7, window_bounds = array<i64: 64, 32>}, {pipeline_mode = #tpu.pipeline_mode<synchronous>, transform_indices = @transform_8, window_bounds = array<i64: 1, 32>}, {pipeline_mode = #tpu.pipeline_mode<synchronous>, transform_indices = @transform_9, window_bounds = array<i64: 1, 32>}, {pipeline_mode = #tpu.pipeline_mode<synchronous>, transform_indices = @transform_10, window_bounds = array<i64: 1, 32>}, {pipeline_mode = #tpu.pipeline_mode<synchronous>, transform_indices = @transform_11, window_bounds = array<i64: 1, 32>}, {pipeline_mode = #tpu.pipeline_mode<synchronous>, transform_indices = @transform_12, window_bounds = array<i64: 1, 32>}, {transform_indices = @transform_13, window_bounds = array<i64: 8, 2, 32>}]} {
    %c0 = arith.constant 0 : index
    %c0_0 = arith.constant 0 : index
    %c0_1 = arith.constant 0 : index
    %0 = vector.load %arg1[%c0, %c0_0, %c0_1] : memref<8x2x32xf32, #tpu.memory_space<vmem>>, vector<8x2x32xf32>
    %1 = vector.shape_cast %0 : vector<8x2x32xf32> to vector<16x32xf32>
    %2 = arith.truncf %1 : vector<16x32xf32> to vector<16x32xbf16>
    %c0_2 = arith.constant 0 : index
    %c0_3 = arith.constant 0 : index
    %3 = vector.load %arg2[%c0_2, %c0_3] : memref<32x96xbf16, #tpu.memory_space<vmem>>, vector<32x96xbf16>
    %cst = arith.constant dense<0.000000e+00> : vector<16x96xf32>
    %4 = tpu.matmul %2, %3, %cst {dimension_numbers = #tpu.dot_dimension_numbers<[1], [0], [0], [1], [0, 0, 1, 1], [], []>} : vector<16x32xbf16>, vector<32x96xbf16>, vector<16x96xf32> -> vector<16x96xf32>
    %c0_4 = arith.constant 0 : index
    %c0_5 = arith.constant 0 : index
    %5 = vector.load %arg3[%c0_4, %c0_5] : memref<1x96xf32, #tpu.memory_space<vmem>>, vector<1x96xf32>
    %6 = vector.broadcast %5 : vector<1x96xf32> to vector<16x96xf32>
    %7 = arith.addf %4, %6 : vector<16x96xf32>
    %8 = vector.extract_strided_slice %7 {offsets = [0, 0], sizes = [16, 32], strides = [1, 1]} : vector<16x96xf32> to vector<16x32xf32>
    %9 = vector.shape_cast %8 : vector<16x32xf32> to vector<8x2x4x8xf32>
    %10 = tpu.transpose %9, [1, 2, 0, 3] : vector<8x2x4x8xf32> -> vector<2x4x8x8xf32>
    %11 = vector.shape_cast %10 : vector<2x4x8x8xf32> to vector<8x8x8xf32>
    %12 = arith.truncf %11 : vector<8x8x8xf32> to vector<8x8x8xbf16>
    %13 = vector.extract_strided_slice %7 {offsets = [0, 32], sizes = [16, 32], strides = [1, 1]} : vector<16x96xf32> to vector<16x32xf32>
    %14 = vector.shape_cast %13 : vector<16x32xf32> to vector<8x2x4x8xf32>
    %15 = tpu.transpose %14, [1, 2, 0, 3] : vector<8x2x4x8xf32> -> vector<2x4x8x8xf32>
    %16 = vector.shape_cast %15 : vector<2x4x8x8xf32> to vector<8x8x8xf32>
    %17 = arith.truncf %16 : vector<8x8x8xf32> to vector<8x8x8xbf16>
    %18 = vector.extract_strided_slice %7 {offsets = [0, 64], sizes = [16, 32], strides = [1, 1]} : vector<16x96xf32> to vector<16x32xf32>
    %19 = vector.shape_cast %18 : vector<16x32xf32> to vector<8x2x4x8xf32>
    %20 = tpu.transpose %19, [1, 2, 0, 3] : vector<8x2x4x8xf32> -> vector<2x4x8x8xf32>
    %21 = vector.shape_cast %20 : vector<2x4x8x8xf32> to vector<8x8x8xf32>
    %22 = arith.truncf %21 : vector<8x8x8xf32> to vector<8x8x8xbf16>
    "tpu.trace_start"() <{level = 10 : i32, message = "gqd,gkd->gqk"}> : () -> ()
    %cst_6 = arith.constant dense<0.000000e+00> : vector<8x8x8xf32>
    %23 = tpu.matmul %12, %17, %cst_6 {dimension_numbers = #tpu.dot_dimension_numbers<[2], [2], [1], [1], [0, 0, 0, 1, 1, 1], [0], [0]>} : vector<8x8x8xbf16>, vector<8x8x8xbf16>, vector<8x8x8xf32> -> vector<8x8x8xf32>
    "tpu.trace_stop"() : () -> ()
    %cst_7 = arith.constant dense<0xFF800000> : vector<8x8xf32>
    %24 = vector.multi_reduction <maximumf>, %23, %cst_7 [2] : vector<8x8x8xf32> to vector<8x8xf32>
    %25 = vector.shape_cast %24 : vector<8x8xf32> to vector<8x8x1xf32>
    %26 = vector.broadcast %25 : vector<8x8x1xf32> to vector<8x8x8xf32>
    %27 = arith.subf %23, %26 : vector<8x8x8xf32>
    %28 = math.exp %27 : vector<8x8x8xf32>
    %cst_8 = arith.constant dense<0.000000e+00> : vector<8x8xf32>
    %29 = vector.multi_reduction <add>, %28, %cst_8 [2] : vector<8x8x8xf32> to vector<8x8xf32>
    %30 = vector.shape_cast %29 : vector<8x8xf32> to vector<8x8x1xf32>
    %31 = tpu.reciprocal %30 {approx = true} : vector<8x8x1xf32> -> vector<8x8x1xf32>
    %32 = vector.broadcast %31 : vector<8x8x1xf32> to vector<8x8x8xf32>
    %33 = arith.mulf %28, %32 : vector<8x8x8xf32>
    %34 = arith.truncf %33 : vector<8x8x8xf32> to vector<8x8x8xbf16>
    "tpu.trace_start"() <{level = 10 : i32, message = "gqk,gkd->gqd"}> : () -> ()
    %cst_9 = arith.constant dense<0.000000e+00> : vector<8x8x8xf32>
    %35 = tpu.matmul %34, %22, %cst_9 {dimension_numbers = #tpu.dot_dimension_numbers<[2], [1], [1], [2], [0, 0, 0, 1, 1, 2], [0], [0]>} : vector<8x8x8xbf16>, vector<8x8x8xbf16>, vector<8x8x8xf32> -> vector<8x8x8xf32>
    "tpu.trace_stop"() : () -> ()
    %36 = vector.shape_cast %35 : vector<8x8x8xf32> to vector<2x4x8x8xf32>
    %37 = tpu.transpose %36, [2, 0, 1, 3] : vector<2x4x8x8xf32> -> vector<8x2x4x8xf32>
    %38 = vector.shape_cast %37 : vector<8x2x4x8xf32> to vector<16x32xf32>
    %39 = arith.truncf %38 : vector<16x32xf32> to vector<16x32xbf16>
    %c0_10 = arith.constant 0 : index
    %c0_11 = arith.constant 0 : index
    %40 = vector.load %arg4[%c0_10, %c0_11] : memref<32x32xbf16, #tpu.memory_space<vmem>>, vector<32x32xbf16>
    %cst_12 = arith.constant dense<0.000000e+00> : vector<16x32xf32>
    %41 = tpu.matmul %39, %40, %cst_12 {dimension_numbers = #tpu.dot_dimension_numbers<[1], [0], [0], [1], [0, 0, 1, 1], [], []>} : vector<16x32xbf16>, vector<32x32xbf16>, vector<16x32xf32> -> vector<16x32xf32>
    %c0_13 = arith.constant 0 : index
    %c0_14 = arith.constant 0 : index
    %42 = vector.load %arg5[%c0_13, %c0_14] : memref<1x32xf32, #tpu.memory_space<vmem>>, vector<1x32xf32>
    %43 = vector.broadcast %42 : vector<1x32xf32> to vector<16x32xf32>
    %44 = arith.addf %41, %43 : vector<16x32xf32>
    %45 = arith.addf %1, %44 : vector<16x32xf32>
    %c0_15 = arith.constant 0 : index
    %c0_16 = arith.constant 0 : index
    %46 = vector.load %arg10[%c0_15, %c0_16] : memref<1x32xf32, #tpu.memory_space<vmem>>, vector<1x32xf32>
    %c0_17 = arith.constant 0 : index
    %c0_18 = arith.constant 0 : index
    %47 = vector.load %arg11[%c0_17, %c0_18] : memref<1x32xf32, #tpu.memory_space<vmem>>, vector<1x32xf32>
    %cst_19 = arith.constant dense<0.000000e+00> : vector<16xf32>
    %48 = vector.multi_reduction <add>, %45, %cst_19 [1] : vector<16x32xf32> to vector<16xf32>
    %49 = vector.shape_cast %48 : vector<16xf32> to vector<16x1xf32>
    %cst_20 = arith.constant 3.200000e+01 : f32
    %50 = vector.broadcast %cst_20 : f32 to vector<16x1xf32>
    %51 = arith.divf %49, %50 : vector<16x1xf32>
    %52 = vector.broadcast %51 : vector<16x1xf32> to vector<16x32xf32>
    %53 = arith.subf %45, %52 : vector<16x32xf32>
    %54 = arith.mulf %53, %53 : vector<16x32xf32>
    %cst_21 = arith.constant dense<0.000000e+00> : vector<16xf32>
    %55 = vector.multi_reduction <add>, %54, %cst_21 [1] : vector<16x32xf32> to vector<16xf32>
    %56 = vector.shape_cast %55 : vector<16xf32> to vector<16x1xf32>
    %cst_22 = arith.constant 3.200000e+01 : f32
    %57 = vector.broadcast %cst_22 : f32 to vector<16x1xf32>
    %58 = arith.divf %56, %57 : vector<16x1xf32>
    %59 = vector.broadcast %51 : vector<16x1xf32> to vector<16x32xf32>
    %60 = arith.subf %45, %59 : vector<16x32xf32>
    %cst_23 = arith.constant 9.99999974E-6 : f32
    %61 = vector.broadcast %cst_23 : f32 to vector<16x1xf32>
    %62 = arith.addf %58, %61 : vector<16x1xf32>
    %63 = math.rsqrt %62 : vector<16x1xf32>
    %64 = vector.broadcast %63 : vector<16x1xf32> to vector<16x32xf32>
    %65 = arith.mulf %60, %64 : vector<16x32xf32>
    %66 = vector.broadcast %46 : vector<1x32xf32> to vector<16x32xf32>
    %67 = arith.mulf %65, %66 : vector<16x32xf32>
    %68 = vector.broadcast %47 : vector<1x32xf32> to vector<16x32xf32>
    %69 = arith.addf %67, %68 : vector<16x32xf32>
    %70 = arith.truncf %69 : vector<16x32xf32> to vector<16x32xbf16>
    %c0_24 = arith.constant 0 : index
    %c0_25 = arith.constant 0 : index
    %71 = vector.load %arg6[%c0_24, %c0_25] : memref<32x64xbf16, #tpu.memory_space<vmem>>, vector<32x64xbf16>
    %cst_26 = arith.constant dense<0.000000e+00> : vector<16x64xf32>
    %72 = tpu.matmul %70, %71, %cst_26 {dimension_numbers = #tpu.dot_dimension_numbers<[1], [0], [0], [1], [0, 0, 1, 1], [], []>} : vector<16x32xbf16>, vector<32x64xbf16>, vector<16x64xf32> -> vector<16x64xf32>
    %c0_27 = arith.constant 0 : index
    %c0_28 = arith.constant 0 : index
    %73 = vector.load %arg7[%c0_27, %c0_28] : memref<1x64xf32, #tpu.memory_space<vmem>>, vector<1x64xf32>
    %74 = vector.broadcast %73 : vector<1x64xf32> to vector<16x64xf32>
    %75 = arith.addf %72, %74 : vector<16x64xf32>
    %cst_29 = arith.constant 0.000000e+00 : f32
    %76 = vector.broadcast %cst_29 : f32 to vector<16x64xf32>
    %77 = arith.maximumf %75, %76 : vector<16x64xf32>
    %78 = arith.truncf %77 : vector<16x64xf32> to vector<16x64xbf16>
    %c0_30 = arith.constant 0 : index
    %c0_31 = arith.constant 0 : index
    %79 = vector.load %arg8[%c0_30, %c0_31] : memref<64x32xbf16, #tpu.memory_space<vmem>>, vector<64x32xbf16>
    %cst_32 = arith.constant dense<0.000000e+00> : vector<16x32xf32>
    %80 = tpu.matmul %78, %79, %cst_32 {dimension_numbers = #tpu.dot_dimension_numbers<[1], [0], [0], [1], [0, 0, 1, 1], [], []>} : vector<16x64xbf16>, vector<64x32xbf16>, vector<16x32xf32> -> vector<16x32xf32>
    %c0_33 = arith.constant 0 : index
    %c0_34 = arith.constant 0 : index
    %81 = vector.load %arg9[%c0_33, %c0_34] : memref<1x32xf32, #tpu.memory_space<vmem>>, vector<1x32xf32>
    %82 = vector.broadcast %81 : vector<1x32xf32> to vector<16x32xf32>
    %83 = arith.addf %80, %82 : vector<16x32xf32>
    %84 = arith.addf %69, %83 : vector<16x32xf32>
    %c0_35 = arith.constant 0 : index
    %c0_36 = arith.constant 0 : index
    %85 = vector.load %arg12[%c0_35, %c0_36] : memref<1x32xf32, #tpu.memory_space<vmem>>, vector<1x32xf32>
    %c0_37 = arith.constant 0 : index
    %c0_38 = arith.constant 0 : index
    %86 = vector.load %arg13[%c0_37, %c0_38] : memref<1x32xf32, #tpu.memory_space<vmem>>, vector<1x32xf32>
    %cst_39 = arith.constant dense<0.000000e+00> : vector<16xf32>
    %87 = vector.multi_reduction <add>, %84, %cst_39 [1] : vector<16x32xf32> to vector<16xf32>
    %88 = vector.shape_cast %87 : vector<16xf32> to vector<16x1xf32>
    %cst_40 = arith.constant 3.200000e+01 : f32
    %89 = vector.broadcast %cst_40 : f32 to vector<16x1xf32>
    %90 = arith.divf %88, %89 : vector<16x1xf32>
    %91 = vector.broadcast %90 : vector<16x1xf32> to vector<16x32xf32>
    %92 = arith.subf %84, %91 : vector<16x32xf32>
    %93 = arith.mulf %92, %92 : vector<16x32xf32>
    %cst_41 = arith.constant dense<0.000000e+00> : vector<16xf32>
    %94 = vector.multi_reduction <add>, %93, %cst_41 [1] : vector<16x32xf32> to vector<16xf32>
    %95 = vector.shape_cast %94 : vector<16xf32> to vector<16x1xf32>
    %cst_42 = arith.constant 3.200000e+01 : f32
    %96 = vector.broadcast %cst_42 : f32 to vector<16x1xf32>
    %97 = arith.divf %95, %96 : vector<16x1xf32>
    %98 = vector.broadcast %90 : vector<16x1xf32> to vector<16x32xf32>
    %99 = arith.subf %84, %98 : vector<16x32xf32>
    %cst_43 = arith.constant 9.99999974E-6 : f32
    %100 = vector.broadcast %cst_43 : f32 to vector<16x1xf32>
    %101 = arith.addf %97, %100 : vector<16x1xf32>
    %102 = math.rsqrt %101 : vector<16x1xf32>
    %103 = vector.broadcast %102 : vector<16x1xf32> to vector<16x32xf32>
    %104 = arith.mulf %99, %103 : vector<16x32xf32>
    %105 = vector.broadcast %85 : vector<1x32xf32> to vector<16x32xf32>
    %106 = arith.mulf %104, %105 : vector<16x32xf32>
    %107 = vector.broadcast %86 : vector<1x32xf32> to vector<16x32xf32>
    %108 = arith.addf %106, %107 : vector<16x32xf32>
    %109 = vector.shape_cast %108 : vector<16x32xf32> to vector<8x2x32xf32>
    %c0_44 = arith.constant 0 : index
    %c0_45 = arith.constant 0 : index
    %c0_46 = arith.constant 0 : index
    %110 = vector.load %arg14[%c0_44, %c0_45, %c0_46] : memref<8x2x32xf32, #tpu.memory_space<vmem>>, vector<8x2x32xf32>
    tpu.vector_store %arg14[%c0_44, %c0_45, %c0_46], %109 {strides = array<i32>} : memref<8x2x32xf32, #tpu.memory_space<vmem>>, vector<8x2x32xf32>,
    return
  }
  func.func @transform_0(%arg0: i32) -> (i32, i32, i32) {
    %c0_i32 = arith.constant 0 : i32
    %c0_i32_0 = arith.constant 0 : i32
    %c0_i32_1 = arith.constant 0 : i32
    return %c0_i32, %arg0, %c0_i32_0 : i32, i32, i32
  }
  func.func @transform_1(%arg0: i32) -> (i32, i32) {
    %c0_i32 = arith.constant 0 : i32
    %c0_i32_0 = arith.constant 0 : i32
    %c0_i32_1 = arith.constant 0 : i32
    return %c0_i32, %c0_i32_0 : i32, i32
  }
  func.func @transform_2(%arg0: i32) -> (i32, i32) {
    %c0_i32 = arith.constant 0 : i32
    %c0_i32_0 = arith.constant 0 : i32
    %c0_i32_1 = arith.constant 0 : i32
    return %c0_i32, %c0_i32_0 : i32, i32
  }
  func.func @transform_3(%arg0: i32) -> (i32, i32) {
    %c0_i32 = arith.constant 0 : i32
    %c0_i32_0 = arith.constant 0 : i32
    %c0_i32_1 = arith.constant 0 : i32
    return %c0_i32, %c0_i32_0 : i32, i32
  }
  func.func @transform_4(%arg0: i32) -> (i32, i32) {
    %c0_i32 = arith.constant 0 : i32
    %c0_i32_0 = arith.constant 0 : i32
    %c0_i32_1 = arith.constant 0 : i32
    return %c0_i32, %c0_i32_0 : i32, i32
  }
  func.func @transform_5(%arg0: i32) -> (i32, i32) {
    %c0_i32 = arith.constant 0 : i32
    %c0_i32_0 = arith.constant 0 : i32
    %c0_i32_1 = arith.constant 0 : i32
    return %c0_i32, %c0_i32_0 : i32, i32
  }
  func.func @transform_6(%arg0: i32) -> (i32, i32) {
    %c0_i32 = arith.constant 0 : i32
    %c0_i32_0 = arith.constant 0 : i32
    %c0_i32_1 = arith.constant 0 : i32
    return %c0_i32, %c0_i32_0 : i32, i32
  }
  func.func @transform_7(%arg0: i32) -> (i32, i32) {
    %c0_i32 = arith.constant 0 : i32
    %c0_i32_0 = arith.constant 0 : i32
    %c0_i32_1 = arith.constant 0 : i32
    return %c0_i32, %c0_i32_0 : i32, i32
  }
  func.func @transform_8(%arg0: i32) -> (i32, i32) {
    %c0_i32 = arith.constant 0 : i32
    %c0_i32_0 = arith.constant 0 : i32
    %c0_i32_1 = arith.constant 0 : i32
    return %c0_i32, %c0_i32_0 : i32, i32
  }
  func.func @transform_9(%arg0: i32) -> (i32, i32) {
    %c0_i32 = arith.constant 0 : i32
    %c0_i32_0 = arith.constant 0 : i32
    %c0_i32_1 = arith.constant 0 : i32
    return %c0_i32, %c0_i32_0 : i32, i32
  }
  func.func @transform_10(%arg0: i32) -> (i32, i32) {
    %c0_i32 = arith.constant 0 : i32
    %c0_i32_0 = arith.constant 0 : i32
    %c0_i32_1 = arith.constant 0 : i32
    return %c0_i32, %c0_i32_0 : i32, i32
  }
  func.func @transform_11(%arg0: i32) -> (i32, i32) {
    %c0_i32 = arith.constant 0 : i32
    %c0_i32_0 = arith.constant 0 : i32
    %c0_i32_1 = arith.constant 0 : i32
    return %c0_i32, %c0_i32_0 : i32, i32
  }
  func.func @transform_12(%arg0: i32) -> (i32, i32) {
    %c0_i32 = arith.constant 0 : i32
    %c0_i32_0 = arith.constant 0 : i32
    %c0_i32_1 = arith.constant 0 : i32
    return %c0_i32, %c0_i32_0 : i32, i32
  }
  func.func @transform_13(%arg0: i32) -> (i32, i32, i32) {
    %c0_i32 = arith.constant 0 : i32
    %c0_i32_0 = arith.constant 0 : i32
    %c0_i32_1 = arith.constant 0 : i32
    return %c0_i32, %arg0, %c0_i32_0 : i32, i32, i32
  }
}

module attributes {stable_mosaic.version = 11 : i64} {
  func.func @encoder_layer_kernel(%arg0: i32, %arg1: memref<8x2x32xf32, #tpu.memory_space<vmem>>, %arg2: memref<32x96xbf16, #tpu.memory_space<vmem>>, %arg3: memref<1x96xf32, #tpu.memory_space<vmem>>, %arg4: memref<32x32xbf16, #tpu.memory_space<vmem>>, %arg5: memref<1x32xf32, #tpu.memory_space<vmem>>, %arg6: memref<32x64xbf16, #tpu.memory_space<vmem>>, %arg7: memref<1x64xf32, #tpu.memory_space<vmem>>, %arg8: memref<64x32xbf16, #tpu.memory_space<vmem>>, %arg9: memref<1x32xf32, #tpu.memory_space<vmem>>, %arg10: memref<1x32xf32, #tpu.memory_space<vmem>>, %arg11: memref<1x32xf32, #tpu.memory_space<vmem>>, %arg12: memref<1x32xf32, #tpu.memory_space<vmem>>, %arg13: memref<1x32xf32, #tpu.memory_space<vmem>>, %arg14: memref<8x2x32xf32, #tpu.memory_space<vmem>>) attributes {dimension_semantics = [#tpu.dimension_semantics<parallel>], iteration_bounds = array<i64: 1>, scalar_prefetch = 0 : i64, scratch_operands = 0 : i64, tpu.core_type = #tpu.core_type<tc>, window_params = [{transform_indices = @transform_0, window_bounds = array<i64: 8, 2, 32>}, {pipeline_mode = #tpu.pipeline_mode<synchronous>, transform_indices = @transform_1, window_bounds = array<i64: 32, 96>}, {pipeline_mode = #tpu.pipeline_mode<synchronous>, transform_indices = @transform_2, window_bounds = array<i64: 1, 96>}, {pipeline_mode = #tpu.pipeline_mode<synchronous>, transform_indices = @transform_3, window_bounds = array<i64: 32, 32>}, {pipeline_mode = #tpu.pipeline_mode<synchronous>, transform_indices = @transform_4, window_bounds = array<i64: 1, 32>}, {pipeline_mode = #tpu.pipeline_mode<synchronous>, transform_indices = @transform_5, window_bounds = array<i64: 32, 64>}, {pipeline_mode = #tpu.pipeline_mode<synchronous>, transform_indices = @transform_6, window_bounds = array<i64: 1, 64>}, {pipeline_mode = #tpu.pipeline_mode<synchronous>, transform_indices = @transform_7, window_bounds = array<i64: 64, 32>}, {pipeline_mode = #tpu.pipeline_mode<synchronous>, transform_indices = @transform_8, window_bounds = array<i64: 1, 32>}, {pipeline_mode = #tpu.pipeline_mode<synchronous>, transform_indices = @transform_9, window_bounds = array<i64: 1, 32>}, {pipeline_mode = #tpu.pipeline_mode<synchronous>, transform_indices = @transform_10, window_bounds = array<i64: 1, 32>}, {pipeline_mode = #tpu.pipeline_mode<synchronous>, transform_indices = @transform_11, window_bounds = array<i64: 1, 32>}, {pipeline_mode = #tpu.pipeline_mode<synchronous>, transform_indices = @transform_12, window_bounds = array<i64: 1, 32>}, {transform_indices = @transform_13, window_bounds = array<i64: 8, 2, 32>}]} {
    %c0 = arith.constant 0 : index
    %c0_0 = arith.constant 0 : index
    %c0_1 = arith.constant 0 : index
    %0 = vector.load %arg1[%c0, %c0_0, %c0_1] : memref<8x2x32xf32, #tpu.memory_space<vmem>>, vector<8x2x32xf32>
    %1 = vector.shape_cast %0 : vector<8x2x32xf32> to vector<16x32xf32>
    %2 = arith.truncf %1 : vector<16x32xf32> to vector<16x32xbf16>
    %c0_2 = arith.constant 0 : index
    %c0_3 = arith.constant 0 : index
    %3 = vector.load %arg2[%c0_2, %c0_3] : memref<32x96xbf16, #tpu.memory_space<vmem>>, vector<32x96xbf16>
    %cst = arith.constant dense<0.000000e+00> : vector<16x96xf32>
    %4 = tpu.matmul %2, %3, %cst {dimension_numbers = #tpu.dot_dimension_numbers<[1], [0], [0], [1], [0, 0, 1, 1], [], []>} : vector<16x32xbf16>, vector<32x96xbf16>, vector<16x96xf32> -> vector<16x96xf32>
    %c0_4 = arith.constant 0 : index
    %c0_5 = arith.constant 0 : index
    %5 = vector.load %arg3[%c0_4, %c0_5] : memref<1x96xf32, #tpu.memory_space<vmem>>, vector<1x96xf32>
    %6 = vector.broadcast %5 : vector<1x96xf32> to vector<16x96xf32>
    %7 = arith.addf %4, %6 : vector<16x96xf32>
    %8 = vector.extract_strided_slice %7 {offsets = [0, 0], sizes = [16, 32], strides = [1, 1]} : vector<16x96xf32> to vector<16x32xf32>
    %9 = vector.shape_cast %8 : vector<16x32xf32> to vector<8x2x4x8xf32>
    %10 = tpu.transpose %9, [1, 2, 0, 3] : vector<8x2x4x8xf32> -> vector<2x4x8x8xf32>
    %11 = vector.shape_cast %10 : vector<2x4x8x8xf32> to vector<8x8x8xf32>
    %12 = arith.truncf %11 : vector<8x8x8xf32> to vector<8x8x8xbf16>
    %13 = vector.extract_strided_slice %7 {offsets = [0, 32], sizes = [16, 32], strides = [1, 1]} : vector<16x96xf32> to vector<16x32xf32>
    %14 = vector.shape_cast %13 : vector<16x32xf32> to vector<8x2x4x8xf32>
    %15 = tpu.transpose %14, [1, 2, 0, 3] : vector<8x2x4x8xf32> -> vector<2x4x8x8xf32>
    %16 = vector.shape_cast %15 : vector<2x4x8x8xf32> to vector<8x8x8xf32>
    %17 = arith.truncf %16 : vector<8x8x8xf32> to vector<8x8x8xbf16>
    %18 = vector.extract_strided_slice %7 {offsets = [0, 64], sizes = [16, 32], strides = [1, 1]} : vector<16x96xf32> to vector<16x32xf32>
    %19 = vector.shape_cast %18 : vector<16x32xf32> to vector<8x2x4x8xf32>
    %20 = tpu.transpose %19, [1, 2, 0, 3] : vector<8x2x4x8xf32> -> vector<2x4x8x8xf32>
    %21 = vector.shape_cast %20 : vector<2x4x8x8xf32> to vector<8x8x8xf32>
    %22 = arith.truncf %21 : vector<8x8x8xf32> to vector<8x8x8xbf16>
    "tpu.trace_start"() <{level = 10 : i32, message = "gqd,gkd->gqk"}> : () -> ()
    %cst_6 = arith.constant dense<0.000000e+00> : vector<8x8x8xf32>
    %23 = tpu.matmul %12, %17, %cst_6 {dimension_numbers = #tpu.dot_dimension_numbers<[2], [2], [1], [1], [0, 0, 0, 1, 1, 1], [0], [0]>} : vector<8x8x8xbf16>, vector<8x8x8xbf16>, vector<8x8x8xf32> -> vector<8x8x8xf32>
    "tpu.trace_stop"() : () -> ()
    %cst_7 = arith.constant dense<0xFF800000> : vector<8x8xf32>
    %24 = vector.multi_reduction <maximumf>, %23, %cst_7 [2] : vector<8x8x8xf32> to vector<8x8xf32>
    %25 = vector.shape_cast %24 : vector<8x8xf32> to vector<8x8x1xf32>
    %26 = vector.broadcast %25 : vector<8x8x1xf32> to vector<8x8x8xf32>
    %27 = arith.subf %23, %26 : vector<8x8x8xf32>
    %28 = math.exp %27 : vector<8x8x8xf32>
    %cst_8 = arith.constant dense<0.000000e+00> : vector<8x8xf32>
    %29 = vector.multi_reduction <add>, %28, %cst_8 [2] : vector<8x8x8xf32> to vector<8x8xf32>
    %30 = vector.shape_cast %29 : vector<8x8xf32> to vector<8x8x1xf32>
    %31 = tpu.reciprocal %30 {approx = true} : vector<8x8x1xf32> -> vector<8x8x1xf32>
    %32 = vector.broadcast %31 : vector<8x8x1xf32> to vector<8x8x8xf32>
    %33 = arith.mulf %28, %32 : vector<8x8x8xf32>
    %34 = arith.truncf %33 : vector<8x8x8xf32> to vector<8x8x8xbf16>
    "tpu.trace_start"() <{level = 10 : i32, message = "gqk,gkd->gqd"}> : () -> ()
    %cst_9 = arith.constant dense<0.000000e+00> : vector<8x8x8xf32>
    %35 = tpu.matmul %34, %22, %cst_9 {dimension_numbers = #tpu.dot_dimension_numbers<[2], [1], [1], [2], [0, 0, 0, 1, 1, 2], [0], [0]>} : vector<8x8x8xbf16>, vector<8x8x8xbf16>, vector<8x8x8xf32> -> vector<8x8x8xf32>
    "tpu.trace_stop"() : () -> ()
    %36 = vector.shape_cast %35 : vector<8x8x8xf32> to vector<2x4x8x8xf32>
    %37 = tpu.transpose %36, [2, 0, 1, 3] : vector<2x4x8x8xf32> -> vector<8x2x4x8xf32>
    %38 = vector.shape_cast %37 : vector<8x2x4x8xf32> to vector<16x32xf32>
    %39 = arith.truncf %38 : vector<16x32xf32> to vector<16x32xbf16>
    %c0_10 = arith.constant 0 : index
    %c0_11 = arith.constant 0 : index
    %40 = vector.load %arg4[%c0_10, %c0_11] : memref<32x32xbf16, #tpu.memory_space<vmem>>, vector<32x32xbf16>
    %cst_12 = arith.constant dense<0.000000e+00> : vector<16x32xf32>
    %41 = tpu.matmul %39, %40, %cst_12 {dimension_numbers = #tpu.dot_dimension_numbers<[1], [0], [0], [1], [0, 0, 1, 1], [], []>} : vector<16x32xbf16>, vector<32x32xbf16>, vector<16x32xf32> -> vector<16x32xf32>
    %c0_13 = arith.constant 0 : index
    %c0_14 = arith.constant 0 : index
    %42 = vector.load %arg5[%c0_13, %c0_14] : memref<1x32xf32, #tpu.memory_space<vmem>>, vector<1x32xf32>
    %43 = vector.broadcast %42 : vector<1x32xf32> to vector<16x32xf32>
    %44 = arith.addf %41, %43 : vector<16x32xf32>
    %45 = arith.addf %1, %44 : vector<16x32xf32>
    %c0_15 = arith.constant 0 : index
    %c0_16 = arith.constant 0 : index
    %46 = vector.load %arg10[%c0_15, %c0_16] : memref<1x32xf32, #tpu.memory_space<vmem>>, vector<1x32xf32>
    %c0_17 = arith.constant 0 : index
    %c0_18 = arith.constant 0 : index
    %47 = vector.load %arg11[%c0_17, %c0_18] : memref<1x32xf32, #tpu.memory_space<vmem>>, vector<1x32xf32>
    %cst_19 = arith.constant dense<0.000000e+00> : vector<16xf32>
    %48 = vector.multi_reduction <add>, %45, %cst_19 [1] : vector<16x32xf32> to vector<16xf32>
    %49 = vector.shape_cast %48 : vector<16xf32> to vector<16x1xf32>
    %cst_20 = arith.constant 3.200000e+01 : f32
    %50 = vector.broadcast %cst_20 : f32 to vector<16x1xf32>
    %51 = arith.divf %49, %50 : vector<16x1xf32>
    %52 = vector.broadcast %51 : vector<16x1xf32> to vector<16x32xf32>
    %53 = arith.subf %45, %52 : vector<16x32xf32>
    %54 = arith.mulf %53, %53 : vector<16x32xf32>
    %cst_21 = arith.constant dense<0.000000e+00> : vector<16xf32>
    %55 = vector.multi_reduction <add>, %54, %cst_21 [1] : vector<16x32xf32> to vector<16xf32>
    %56 = vector.shape_cast %55 : vector<16xf32> to vector<16x1xf32>
    %cst_22 = arith.constant 3.200000e+01 : f32
    %57 = vector.broadcast %cst_22 : f32 to vector<16x1xf32>
    %58 = arith.divf %56, %57 : vector<16x1xf32>
    %59 = vector.broadcast %51 : vector<16x1xf32> to vector<16x32xf32>
    %60 = arith.subf %45, %59 : vector<16x32xf32>
    %cst_23 = arith.constant 9.99999974E-6 : f32
    %61 = vector.broadcast %cst_23 : f32 to vector<16x1xf32>
    %62 = arith.addf %58, %61 : vector<16x1xf32>
    %63 = math.rsqrt %62 : vector<16x1xf32>
    %64 = vector.broadcast %63 : vector<16x1xf32> to vector<16x32xf32>
    %65 = arith.mulf %60, %64 : vector<16x32xf32>
    %66 = vector.broadcast %46 : vector<1x32xf32> to vector<16x32xf32>
    %67 = arith.mulf %65, %66 : vector<16x32xf32>
    %68 = vector.broadcast %47 : vector<1x32xf32> to vector<16x32xf32>
    %69 = arith.addf %67, %68 : vector<16x32xf32>
    %70 = arith.truncf %69 : vector<16x32xf32> to vector<16x32xbf16>
    %c0_24 = arith.constant 0 : index
    %c0_25 = arith.constant 0 : index
    %71 = vector.load %arg6[%c0_24, %c0_25] : memref<32x64xbf16, #tpu.memory_space<vmem>>, vector<32x64xbf16>
    %cst_26 = arith.constant dense<0.000000e+00> : vector<16x64xf32>
    %72 = tpu.matmul %70, %71, %cst_26 {dimension_numbers = #tpu.dot_dimension_numbers<[1], [0], [0], [1], [0, 0, 1, 1], [], []>} : vector<16x32xbf16>, vector<32x64xbf16>, vector<16x64xf32> -> vector<16x64xf32>
    %c0_27 = arith.constant 0 : index
    %c0_28 = arith.constant 0 : index
    %73 = vector.load %arg7[%c0_27, %c0_28] : memref<1x64xf32, #tpu.memory_space<vmem>>, vector<1x64xf32>
    %74 = vector.broadcast %73 : vector<1x64xf32> to vector<16x64xf32>
    %75 = arith.addf %72, %74 : vector<16x64xf32>
    %cst_29 = arith.constant 0.000000e+00 : f32
    %76 = vector.broadcast %cst_29 : f32 to vector<16x64xf32>
    %77 = arith.maximumf %75, %76 : vector<16x64xf32>
    %78 = arith.truncf %77 : vector<16x64xf32> to vector<16x64xbf16>
    %c0_30 = arith.constant 0 : index
    %c0_31 = arith.constant 0 : index
    %79 = vector.load %arg8[%c0_30, %c0_31] : memref<64x32xbf16, #tpu.memory_space<vmem>>, vector<64x32xbf16>
    %cst_32 = arith.constant dense<0.000000e+00> : vector<16x32xf32>
    %80 = tpu.matmul %78, %79, %cst_32 {dimension_numbers = #tpu.dot_dimension_numbers<[1], [0], [0], [1], [0, 0, 1, 1], [], []>} : vector<16x64xbf16>, vector<64x32xbf16>, vector<16x32xf32> -> vector<16x32xf32>
    %c0_33 = arith.constant 0 : index
    %c0_34 = arith.constant 0 : index
    %81 = vector.load %arg9[%c0_33, %c0_34] : memref<1x32xf32, #tpu.memory_space<vmem>>, vector<1x32xf32>
    %82 = vector.broadcast %81 : vector<1x32xf32> to vector<16x32xf32>
    %83 = arith.addf %80, %82 : vector<16x32xf32>
    %84 = arith.addf %69, %83 : vector<16x32xf32>
    %c0_35 = arith.constant 0 : index
    %c0_36 = arith.constant 0 : index
    %85 = vector.load %arg12[%c0_35, %c0_36] : memref<1x32xf32, #tpu.memory_space<vmem>>, vector<1x32xf32>
    %c0_37 = arith.constant 0 : index
    %c0_38 = arith.constant 0 : index
    %86 = vector.load %arg13[%c0_37, %c0_38] : memref<1x32xf32, #tpu.memory_space<vmem>>, vector<1x32xf32>
    %cst_39 = arith.constant dense<0.000000e+00> : vector<16xf32>
    %87 = vector.multi_reduction <add>, %84, %cst_39 [1] : vector<16x32xf32> to vector<16xf32>
    %88 = vector.shape_cast %87 : vector<16xf32> to vector<16x1xf32>
    %cst_40 = arith.constant 3.200000e+01 : f32
    %89 = vector.broadcast %cst_40 : f32 to vector<16x1xf32>
    %90 = arith.divf %88, %89 : vector<16x1xf32>
    %91 = vector.broadcast %90 : vector<16x1xf32> to vector<16x32xf32>
    %92 = arith.subf %84, %91 : vector<16x32xf32>
    %93 = arith.mulf %92, %92 : vector<16x32xf32>
    %cst_41 = arith.constant dense<0.000000e+00> : vector<16xf32>
    %94 = vector.multi_reduction <add>, %93, %cst_41 [1] : vector<16x32xf32> to vector<16xf32>
    %95 = vector.shape_cast %94 : vector<16xf32> to vector<16x1xf32>
    %cst_42 = arith.constant 3.200000e+01 : f32
    %96 = vector.broadcast %cst_42 : f32 to vector<16x1xf32>
    %97 = arith.divf %95, %96 : vector<16x1xf32>
    %98 = vector.broadcast %90 : vector<16x1xf32> to vector<16x32xf32>
    %99 = arith.subf %84, %98 : vector<16x32xf32>
    %cst_43 = arith.constant 9.99999974E-6 : f32
    %100 = vector.broadcast %cst_43 : f32 to vector<16x1xf32>
    %101 = arith.addf %97, %100 : vector<16x1xf32>
    %102 = math.rsqrt %101 : vector<16x1xf32>
    %103 = vector.broadcast %102 : vector<16x1xf32> to vector<16x32xf32>
    %104 = arith.mulf %99, %103 : vector<16x32xf32>
    %105 = vector.broadcast %85 : vector<1x32xf32> to vector<16x32xf32>
    %106 = arith.mulf %104, %105 : vector<16x32xf32>
    %107 = vector.broadcast %86 : vector<1x32xf32> to vector<16x32xf32>
    %108 = arith.addf %106, %107 : vector<16x32xf32>
    %109 = vector.shape_cast %108 : vector<16x32xf32> to vector<8x2x32xf32>
    %c0_44 = arith.constant 0 : index
    %c0_45 = arith.constant 0 : index
    %c0_46 = arith.constant 0 : index
    %110 = vector.load %arg14[%c0_44, %c0_45, %c0_46] : memref<8x2x32xf32, #tpu.memory_space<vmem>>, vector<8x2x32xf32>
    tpu.vector_store %arg14[%c0_44, %c0_45, %c0_46], %109 {strides = array<i32>} : memref<8x2x32xf32, #tpu.memory_space<vmem>>, vector<8x2x32xf32>,
    return
  }
  func.func @transform_0(%arg0: i32) -> (i32, i32, i32) {
    %c0_i32 = arith.constant 0 : i32
    %c0_i32_0 = arith.constant 0 : i32
    %c0_i32_1 = arith.constant 0 : i32
    return %c0_i32, %arg0, %c0_i32_0 : i32, i32, i32
  }
  func.func @transform_1(%arg0: i32) -> (i32, i32) {
    %c0_i32 = arith.constant 0 : i32
    %c0_i32_0 = arith.constant 0 : i32
    %c0_i32_1 = arith.constant 0 : i32
    return %c0_i32, %c0_i32_0 : i32, i32
  }
  func.func @transform_2(%arg0: i32) -> (i32, i32) {
    %c0_i32 = arith.constant 0 : i32
    %c0_i32_0 = arith.constant 0 : i32
    %c0_i32_1 = arith.constant 0 : i32
    return %c0_i32, %c0_i32_0 : i32, i32
  }
  func.func @transform_3(%arg0: i32) -> (i32, i32) {
    %c0_i32 = arith.constant 0 : i32
    %c0_i32_0 = arith.constant 0 : i32
    %c0_i32_1 = arith.constant 0 : i32
    return %c0_i32, %c0_i32_0 : i32, i32
  }
  func.func @transform_4(%arg0: i32) -> (i32, i32) {
    %c0_i32 = arith.constant 0 : i32
    %c0_i32_0 = arith.constant 0 : i32
    %c0_i32_1 = arith.constant 0 : i32
    return %c0_i32, %c0_i32_0 : i32, i32
  }
  func.func @transform_5(%arg0: i32) -> (i32, i32) {
    %c0_i32 = arith.constant 0 : i32
    %c0_i32_0 = arith.constant 0 : i32
    %c0_i32_1 = arith.constant 0 : i32
    return %c0_i32, %c0_i32_0 : i32, i32
  }
  func.func @transform_6(%arg0: i32) -> (i32, i32) {
    %c0_i32 = arith.constant 0 : i32
    %c0_i32_0 = arith.constant 0 : i32
    %c0_i32_1 = arith.constant 0 : i32
    return %c0_i32, %c0_i32_0 : i32, i32
  }
  func.func @transform_7(%arg0: i32) -> (i32, i32) {
    %c0_i32 = arith.constant 0 : i32
    %c0_i32_0 = arith.constant 0 : i32
    %c0_i32_1 = arith.constant 0 : i32
    return %c0_i32, %c0_i32_0 : i32, i32
  }
  func.func @transform_8(%arg0: i32) -> (i32, i32) {
    %c0_i32 = arith.constant 0 : i32
    %c0_i32_0 = arith.constant 0 : i32
    %c0_i32_1 = arith.constant 0 : i32
    return %c0_i32, %c0_i32_0 : i32, i32
  }
  func.func @transform_9(%arg0: i32) -> (i32, i32) {
    %c0_i32 = arith.constant 0 : i32
    %c0_i32_0 = arith.constant 0 : i32
    %c0_i32_1 = arith.constant 0 : i32
    return %c0_i32, %c0_i32_0 : i32, i32
  }
  func.func @transform_10(%arg0: i32) -> (i32, i32) {
    %c0_i32 = arith.constant 0 : i32
    %c0_i32_0 = arith.constant 0 : i32
    %c0_i32_1 = arith.constant 0 : i32
    return %c0_i32, %c0_i32_0 : i32, i32
  }
  func.func @transform_11(%arg0: i32) -> (i32, i32) {
    %c0_i32 = arith.constant 0 : i32
    %c0_i32_0 = arith.constant 0 : i32
    %c0_i32_1 = arith.constant 0 : i32
    return %c0_i32, %c0_i32_0 : i32, i32
  }
  func.func @transform_12(%arg0: i32) -> (i32, i32) {
    %c0_i32 = arith.constant 0 : i32
    %c0_i32_0 = arith.constant 0 : i32
    %c0_i32_1 = arith.constant 0 : i32
    return %c0_i32, %c0_i32_0 : i32, i32
  }
  func.func @transform_13(%arg0: i32) -> (i32, i32, i32) {
    %c0_i32 = arith.constant 0 : i32
    %c0_i32_0 = arith.constant 0 : i32
    %c0_i32_1 = arith.constant 0 : i32
    return %c0_i32, %arg0, %c0_i32_0 : i32, i32, i32
  }
}

</mosaic_0001>

<llo_original>
// kernel: tpu_custom_call.1
$region0: #{tpu_custom_call.1}
  #allocation0 [shape = 'u32[]', space=smem, size = 0x4, offset = 0x4, fixed_abs, tag = 'smem constant byte address 0x4 - core index']
  #allocation1 [shape = 'u32[144,128]{1,0:T(1,128)}', space=vmem, size = 0x12000, scoped, tag = 'internal scratch']
  %s0 = inlined_call_operand.vmem [shape: f32[8,2,32], index: 0, kind: input, shape index: {}]
  %s1 = inlined_call_operand.vmem [shape: bf16[32,96], index: 1, kind: input, shape index: {}]
  %s2 = inlined_call_operand.vmem [shape: f32[1,96], index: 2, kind: input, shape index: {}]
  %s3 = inlined_call_operand.vmem [shape: bf16[32,32], index: 3, kind: input, shape index: {}]
  %s4 = inlined_call_operand.vmem [shape: f32[1,32], index: 4, kind: input, shape index: {}]
  %s5 = inlined_call_operand.hbm [shape: bf16[32,64], index: 5, kind: input, shape index: {}]
  %s6 = inlined_call_operand.vmem [shape: f32[1,64], index: 6, kind: input, shape index: {}]
  %s7 = inlined_call_operand.vmem [shape: bf16[64,32], index: 7, kind: input, shape index: {}]
  %s8 = inlined_call_operand.vmem [shape: f32[1,32], index: 8, kind: input, shape index: {}]
  %s9 = inlined_call_operand.vmem [shape: f32[1,32], index: 9, kind: input, shape index: {}]
  %s10 = inlined_call_operand.vmem [shape: f32[1,32], index: 10, kind: input, shape index: {}]
  %s11 = inlined_call_operand.vmem [shape: f32[1,32], index: 11, kind: input, shape index: {}]
  %s12 = inlined_call_operand.vmem [shape: f32[1,32], index: 12, kind: input, shape index: {}]
  %s13 = inlined_call_operand.hbm [shape: f32[8,2,32], index: 13, kind: output, shape index: {}]
  %s14 = sld [smem:[#allocation0]]
  $region66: #{tpu_custom_call.1} parent=0
    _
  %s16 = ssub.s32 1, %s14
  %s17 = scalar_select 0, %s16, %s14
  $region1: #{tpu_custom_call.1} parent=0
    #allocation2 [shape = 'u8[8192]{0}', space=vmem, size = 0x2000, scoped, tag = 'input window, operand 5, single buffered']
    #allocation3 [shape = 's32[1]{0}', space=sflag, size = 0x4, scoped, tag = 'scoped memory for tpu_custom_call.1']
    #allocation4 [shape = 's32[1]{0}', space=sflag, size = 0x4, scoped, tag = 'scoped memory for tpu_custom_call.1']
    #allocation5 [shape = 'u8[8192]{0}', space=vmem, size = 0x2000, scoped, tag = 'output window, operand 0, single buffered']
    %18 = vsyncpa [#allocation3], 0
    %19 = vsyncpa [#allocation4], 0
    // Predicated region
    $region2: #{tpu_custom_call.1} parent=1 // pred_check
      _
    $region3: #{tpu_custom_call.1} parent=1 // pred_check_branch
      %21 = sbr.rel (0) target = $region5
    $region4: #{tpu_custom_call.1} parent=1 // pred_region
      _
    $region5: #{tpu_custom_call.1} parent=1 // pred_fallthru
      _
    // Predicated region
    $region6: #{tpu_custom_call.1} parent=1 // pred_check
      _
    $region7: #{tpu_custom_call.1} parent=1 // pred_check_branch
      %23 = sbr.rel (0) target = $region9
    $region8: #{tpu_custom_call.1} parent=1 // pred_region
      _
    $region9: #{tpu_custom_call.1} parent=1 // pred_fallthru
      _
    // Predicated region
    $region10: #{tpu_custom_call.1} parent=1 // pred_check
      _
    $region11: #{tpu_custom_call.1} parent=1 // pred_check_branch
      %25 = sbr.rel (0) target = $region13
    $region12: #{tpu_custom_call.1} parent=1 // pred_region
      _
    $region13: #{tpu_custom_call.1} parent=1 // pred_fallthru
      _
    // Predicated region
    $region14: #{tpu_custom_call.1} parent=1 // pred_check
      _
    $region15: #{tpu_custom_call.1} parent=1 // pred_check_branch
      %27 = sbr.rel (0) target = $region17
    $region16: #{tpu_custom_call.1} parent=1 // pred_region
      _
    $region17: #{tpu_custom_call.1} parent=1 // pred_fallthru
      _
    // Predicated region
    $region18: #{tpu_custom_call.1} parent=1 // pred_check
      _
    $region19: #{tpu_custom_call.1} parent=1 // pred_check_branch
      %29 = sbr.rel (0) target = $region21
    $region20: #{tpu_custom_call.1} parent=1 // pred_region
      _
    $region21: #{tpu_custom_call.1} parent=1 // pred_fallthru
      _
    // Predicated region
    $region22: #{tpu_custom_call.1} parent=1 // pred_check
      _
    $region23: #{tpu_custom_call.1} parent=1 // pred_check_branch
      %31 = sbr.rel (0) target = $region25
    $region24: #{tpu_custom_call.1} parent=1 // pred_region
      %s33 = ssub.s32 256, 256
      %34 = vsyncadd [#allocation3], %s33
      %s35 = sshll.u32 [#allocation2], 4
      %s36 = int_to_ptr.vmem [resolvable:$true] %s35
      %41 = dma.hbm_to_vmem [thread:$0]  %s5, 256, %s36, [#allocation3], 64, 64, 4
    $region25: #{tpu_custom_call.1} parent=1 // pred_fallthru
      _
    // Predicated region
    $region26: #{tpu_custom_call.1} parent=1 // pred_check
      _
    $region27: #{tpu_custom_call.1} parent=1 // pred_check_branch
      %43 = sbr.rel (0) target = $region29
    $region28: #{tpu_custom_call.1} parent=1 // pred_region
      _
    $region29: #{tpu_custom_call.1} parent=1 // pred_fallthru
      _
    // Predicated region
    $region30: #{tpu_custom_call.1} parent=1 // pred_check
      _
    $region31: #{tpu_custom_call.1} parent=1 // pred_check_branch
      %45 = sbr.rel (0) target = $region33
    $region32: #{tpu_custom_call.1} parent=1 // pred_region
      _
    $region33: #{tpu_custom_call.1} parent=1 // pred_fallthru
      _
    // Predicated region
    $region34: #{tpu_custom_call.1} parent=1 // pred_check
      _
    $region35: #{tpu_custom_call.1} parent=1 // pred_check_branch
      %47 = sbr.rel (0) target = $region37
    $region36: #{tpu_custom_call.1} parent=1 // pred_region
      _
    $region37: #{tpu_custom_call.1} parent=1 // pred_fallthru
      _
    // Predicated region
    $region38: #{tpu_custom_call.1} parent=1 // pred_check
      _
    $region39: #{tpu_custom_call.1} parent=1 // pred_check_branch
      %49 = sbr.rel (0) target = $region41
    $region40: #{tpu_custom_call.1} parent=1 // pred_region
      _
    $region41: #{tpu_custom_call.1} parent=1 // pred_fallthru
      _
    // Predicated region
    $region42: #{tpu_custom_call.1} parent=1 // pred_check
      _
    $region43: #{tpu_custom_call.1} parent=1 // pred_check_branch
      %51 = sbr.rel (0) target = $region45
    $region44: #{tpu_custom_call.1} parent=1 // pred_region
      _
    $region45: #{tpu_custom_call.1} parent=1 // pred_fallthru
      _
    // Predicated region
    $region46: #{tpu_custom_call.1} parent=1 // pred_check
      _
    $region47: #{tpu_custom_call.1} parent=1 // pred_check_branch
      %53 = sbr.rel (0) target = $region49
    $region48: #{tpu_custom_call.1} parent=1 // pred_region
      _
    $region49: #{tpu_custom_call.1} parent=1 // pred_fallthru
      _
    // Predicated region
    $region50: #{tpu_custom_call.1} parent=1 // pred_check
      _
    $region51: #{tpu_custom_call.1} parent=1 // pred_check_branch
      %55 = sbr.rel (0) target = $region53
    $region52: #{tpu_custom_call.1} parent=1 // pred_region
      _
    $region53: #{tpu_custom_call.1} parent=1 // pred_fallthru
      _
    // Predicated region
    $region54: #{tpu_custom_call.1} parent=1 // pred_check
      _
    $region55: #{tpu_custom_call.1} parent=1 // pred_check_branch
      %57 = sbr.rel (0) target = $region57
    $region56: #{tpu_custom_call.1} parent=1 // pred_region
      %58 = dma.done [#allocation3], 256
    $region57: #{tpu_custom_call.1} parent=1 // pred_fallthru
      _
    %v60 = vld [vmem:[%s0] sm:$0x3]
    %v61 = vld [vmem:[%s0 + $0x2] sm:$0x3]
    %v62 = vld [vmem:[%s0 + $0x4] sm:$0x3]
    %v63 = vld [vmem:[%s0 + $0x6] sm:$0x3]
    %v64 = vld [vmem:[%s0 + $0x8] sm:$0x3]
    %v65 = vld [vmem:[%s0 + $0xa] sm:$0x3]
    %v66 = vld [vmem:[%s0 + $0xc] sm:$0x3]
    %v67 = vld [vmem:[%s0 + $0xe] sm:$0x3]
    %v76 = vcombine.low %v60, %v61
    %v77 = vcombine.low %v62, %v63
    %v79 = vunpack.c.l.s4 1983009808
    %v80 = vunpack.c.0.s8 %v79
    %v81 = vlaneseq
    %v82 = vshrl.u32 %v81, 7
    %v83 = vsub.s32 %v80, %v82
    %v84 = vrot.slane %v76, %v83
    %v86 = vunpack.c.l.s4 1983009808
    %v87 = vunpack.c.0.s8 %v86
    %v88 = vlaneseq
    %v89 = vshrl.u32 %v88, 7
    %v90 = vsub.s32 %v87, %v89
    %v91 = vrot.slane %v77, %v90
    %v92 = vcombine.low %v84, %v91
    %v93 = vcombine.low %v64, %v65
    %v94 = vcombine.low %v66, %v67
    %v96 = vunpack.c.l.s4 1983009808
    %v97 = vunpack.c.0.s8 %v96
    %v98 = vlaneseq
    %v99 = vshrl.u32 %v98, 7
    %v100 = vsub.s32 %v97, %v99
    %v101 = vrot.slane %v93, %v100
    %v103 = vunpack.c.l.s4 1983009808
    %v104 = vunpack.c.0.s8 %v103
    %v105 = vlaneseq
    %v106 = vshrl.u32 %v105, 7
    %v107 = vsub.s32 %v104, %v106
    %v108 = vrot.slane %v94, %v107
    %v109 = vcombine.low %v101, %v108
    %v112 = vpack.c.bf16 %v109, %v92
    %v113 = vld [vmem:[%s1] sm:$0xf]
    %v114 = vld [vmem:[%s1 + $0x4] sm:$0xf]
    %v115 = vld [vmem:[%s1 + $0x8] sm:$0xf]
    %v116 = vld [vmem:[%s1 + $0xc] sm:$0xf]
    %v117 = vld [vmem:[%s2] sm:$0x1]
    %v119 = vlaneseq
    %v120 = vshrl.u32 %v119, 7
    %v121 = vsub.s32 0, %v120
    %v122 = vrot.slane %v117, %v121
    %v128 = vunpack.c.l.b16 %v113
    %v129 = vunpack.c.l.b16 %v114
    %v130 = vunpack.c.l.b16 %v115
    %v131 = vunpack.c.l.b16 %v116
    %v132 = vpack.c.b16 %v129, %v128
    %v133 = vpack.c.b16 %v131, %v130
    %vm136 = vcmask 261120
    %v138 = vsel %vm136, %v112, 0
    %140 = vmatprep.subr.bf16.mxu0 0
    %141 = vmatpush1.bf16.msra.mxu0 %v132
    %142 = vmatprep.subr.bf16.mxu0 0
    %143 = vmatpush1.bf16.msra.mxu0 %v133
    %144 = vmatprep.subr.bf16.mxu0 0
    %145 = vmatpush1.bf16.msra.mxu0 0
    %146 = vmatprep.subr.bf16.mxu0 0
    %147 = vmatpush1.bf16.msra.mxu0 0
    %148 = vmatprep.subr.bf16.mxu0 0
    %149 = vmatpush1.bf16.msra.mxu0 0
    %150 = vmatprep.subr.bf16.mxu0 0
    %151 = vmatpush1.bf16.msra.mxu0 0
    %152 = vmatprep.subr.bf16.mxu0 0
    %153 = vmatpush1.bf16.msra.mxu0 0
    %154 = vmatprep.subr.bf16.mxu0 0
    %155 = vmatpush1.bf16.msra.mxu0 0
    %156 = vmatprep.subr.bf16.mxu0 0
    %157 = vmatpush1.bf16.msra.mxu0 0
    %158 = vmatprep.subr.bf16.mxu0 0
    %159 = vmatpush1.bf16.msra.mxu0 0
    %160 = vmatprep.subr.bf16.mxu0 0
    %161 = vmatpush1.bf16.msra.mxu0 0
    %162 = vmatprep.subr.bf16.mxu0 0
    %163 = vmatpush1.bf16.msra.mxu0 0
    %164 = vmatprep.subr.bf16.mxu0 0
    %165 = vmatpush1.bf16.msra.mxu0 0
    %166 = vmatprep.subr.bf16.mxu0 0
    %167 = vmatpush1.bf16.msra.mxu0 0
    %168 = vmatprep.subr.bf16.mxu0 0
    %169 = vmatpush1.bf16.msra.mxu0 0
    %170 = vmatprep.subr.bf16.mxu0 0
    %171 = vmatpush1.bf16.msra.mxu0 0
    %172 = vmatprep.mubr.bf16.mxu0 0
    %173 = vmatmul.mubr.bf16.gmra.mrb[0].mxu0 %v138
    %v174 = vpop.f32.mrb[0].mxu0
    %v175 = vadd.f32 %v122, %v174
    %v176 = vpop.f32.mrb[0].mxu0
    %v177 = vpop.f32.mrb[0].mxu0
    %v178 = vadd.f32 %v122, %v177
    %v179 = vpop.f32.mrb[0].mxu0
    %180 = vdwg.mxu0
    %183 = vrot.lane.b32.xlu0 %v175, 120
    %v184 = vpop.permute.xlu0 %183
    %185 = vrot.lane.b32.xlu0 %v178, 120
    %v186 = vpop.permute.xlu0 %185
    %189 = vrot.lane.b32.xlu0 %v175, 112
    %v190 = vpop.permute.xlu0 %189
    %191 = vrot.lane.b32.xlu0 %v178, 112
    %v192 = vpop.permute.xlu0 %191
    %195 = vrot.lane.b32.xlu0 %v175, 104
    %v196 = vpop.permute.xlu0 %195
    %197 = vrot.lane.b32.xlu0 %v178, 104
    %v198 = vpop.permute.xlu0 %197
    %v201 = vcombine.low %v175, %v190
    %v202 = vcombine.high %v175, %v190
    %v204 = vunpack.c.l.s4 1983009808
    %v205 = vunpack.c.0.s8 %v204
    %v206 = vlaneseq
    %v207 = vshrl.u32 %v206, 7
    %v208 = vsub.s32 %v205, %v207
    %v209 = vrot.slane %v201, %v208
    %v211 = vunpack.c.l.s4 1983009808
    %v212 = vunpack.c.0.s8 %v211
    %v213 = vlaneseq
    %v214 = vshrl.u32 %v213, 7
    %v215 = vsub.s32 %v212, %v214
    %v216 = vrot.slane %v202, %v215
    %v217 = vcombine.low %v184, %v196
    %v218 = vcombine.high %v184, %v196
    %v220 = vunpack.c.l.s4 1983009808
    %v221 = vunpack.c.0.s8 %v220
    %v222 = vlaneseq
    %v223 = vshrl.u32 %v222, 7
    %v224 = vsub.s32 %v221, %v223
    %v225 = vrot.slane %v217, %v224
    %v227 = vunpack.c.l.s4 1983009808
    %v228 = vunpack.c.0.s8 %v227
    %v229 = vlaneseq
    %v230 = vshrl.u32 %v229, 7
    %v231 = vsub.s32 %v228, %v230
    %v232 = vrot.slane %v218, %v231
    %v233 = vcombine.low %v209, %v225
    %v234 = vcombine.high %v209, %v225
    %v236 = vunpack.c.l.s4 1934713408
    %v237 = vunpack.c.0.s8 %v236
    %v238 = vlaneseq
    %v239 = vshrl.u32 %v238, 7
    %v240 = vsub.s32 %v237, %v239
    %v241 = vrot.slane %v233, %v240
    %v243 = vunpack.c.l.s4 1934713408
    %v244 = vunpack.c.0.s8 %v243
    %v245 = vlaneseq
    %v246 = vshrl.u32 %v245, 7
    %v247 = vsub.s32 %v244, %v246
    %v248 = vrot.slane %v234, %v247
    %v249 = vcombine.low %v216, %v232
    %v250 = vcombine.high %v216, %v232
    %v252 = vunpack.c.l.s4 1934713408
    %v253 = vunpack.c.0.s8 %v252
    %v254 = vlaneseq
    %v255 = vshrl.u32 %v254, 7
    %v256 = vsub.s32 %v253, %v255
    %v257 = vrot.slane %v249, %v256
    %v259 = vunpack.c.l.s4 1934713408
    %v260 = vunpack.c.0.s8 %v259
    %v261 = vlaneseq
    %v262 = vshrl.u32 %v261, 7
    %v263 = vsub.s32 %v260, %v262
    %v264 = vrot.slane %v250, %v263
    %v265 = vcombine.high %v241, 0.0
    %v266 = vcombine.high %v248, 0.0
    %v267 = vcombine.high %v257, 0.0
    %v268 = vcombine.high %v264, 0.0
    %v269 = vcombine.low %v178, %v192
    %v270 = vcombine.high %v178, %v192
    %v272 = vunpack.c.l.s4 1983009808
    %v273 = vunpack.c.0.s8 %v272
    %v274 = vlaneseq
    %v275 = vshrl.u32 %v274, 7
    %v276 = vsub.s32 %v273, %v275
    %v277 = vrot.slane %v269, %v276
    %v279 = vunpack.c.l.s4 1983009808
    %v280 = vunpack.c.0.s8 %v279
    %v281 = vlaneseq
    %v282 = vshrl.u32 %v281, 7
    %v283 = vsub.s32 %v280, %v282
    %v284 = vrot.slane %v270, %v283
    %v285 = vcombine.low %v186, %v198
    %v286 = vcombine.high %v186, %v198
    %v288 = vunpack.c.l.s4 1983009808
    %v289 = vunpack.c.0.s8 %v288
    %v290 = vlaneseq
    %v291 = vshrl.u32 %v290, 7
    %v292 = vsub.s32 %v289, %v291
    %v293 = vrot.slane %v285, %v292
    %v295 = vunpack.c.l.s4 1983009808
    %v296 = vunpack.c.0.s8 %v295
    %v297 = vlaneseq
    %v298 = vshrl.u32 %v297, 7
    %v299 = vsub.s32 %v296, %v298
    %v300 = vrot.slane %v286, %v299
    %v301 = vcombine.low %v277, %v293
    %v302 = vcombine.high %v277, %v293
    %v304 = vunpack.c.l.s4 1934713408
    %v305 = vunpack.c.0.s8 %v304
    %v306 = vlaneseq
    %v307 = vshrl.u32 %v306, 7
    %v308 = vsub.s32 %v305, %v307
    %v309 = vrot.slane %v301, %v308
    %v311 = vunpack.c.l.s4 1934713408
    %v312 = vunpack.c.0.s8 %v311
    %v313 = vlaneseq
    %v314 = vshrl.u32 %v313, 7
    %v315 = vsub.s32 %v312, %v314
    %v316 = vrot.slane %v302, %v315
    %v317 = vcombine.low %v284, %v300
    %v318 = vcombine.high %v284, %v300
    %v320 = vunpack.c.l.s4 1934713408
    %v321 = vunpack.c.0.s8 %v320
    %v322 = vlaneseq
    %v323 = vshrl.u32 %v322, 7
    %v324 = vsub.s32 %v321, %v323
    %v325 = vrot.slane %v317, %v324
    %v327 = vunpack.c.l.s4 1934713408
    %v328 = vunpack.c.0.s8 %v327
    %v329 = vlaneseq
    %v330 = vshrl.u32 %v329, 7
    %v331 = vsub.s32 %v328, %v330
    %v332 = vrot.slane %v318, %v331
    %v333 = vcombine.high %v309, 0.0
    %v334 = vcombine.high %v316, 0.0
    %v335 = vcombine.high %v325, 0.0
    %v336 = vcombine.high %v332, 0.0
    %v337 = vcombine.low %v241, %v257
    %v339 = vunpack.c.l.s4 1983009808
    %v340 = vunpack.c.0.s8 %v339
    %v341 = vlaneseq
    %v342 = vshrl.u32 %v341, 7
    %v343 = vsub.s32 %v340, %v342
    %v344 = vrot.slane %v337, %v343
    %v345 = vcombine.low %v248, %v264
    %v347 = vunpack.c.l.s4 1983009808
    %v348 = vunpack.c.0.s8 %v347
    %v349 = vlaneseq
    %v350 = vshrl.u32 %v349, 7
    %v351 = vsub.s32 %v348, %v350
    %v352 = vrot.slane %v345, %v351
    %v353 = vcombine.low %v309, %v325
    %v355 = vunpack.c.l.s4 1983009808
    %v356 = vunpack.c.0.s8 %v355
    %v357 = vlaneseq
    %v358 = vshrl.u32 %v357, 7
    %v359 = vsub.s32 %v356, %v358
    %v360 = vrot.slane %v353, %v359
    %v361 = vcombine.low %v316, %v332
    %v363 = vunpack.c.l.s4 1983009808
    %v364 = vunpack.c.0.s8 %v363
    %v365 = vlaneseq
    %v366 = vshrl.u32 %v365, 7
    %v367 = vsub.s32 %v364, %v366
    %v368 = vrot.slane %v361, %v367
    %v369 = vcombine.low %v344, %v352
    %v370 = vcombine.high %v344, %v352
    %v372 = vunpack.c.l.s4 1934713408
    %v373 = vunpack.c.0.s8 %v372
    %v374 = vlaneseq
    %v375 = vshrl.u32 %v374, 7
    %v376 = vsub.s32 %v373, %v375
    %v377 = vrot.slane %v369, %v376
    %v379 = vunpack.c.l.s4 1934713408
    %v380 = vunpack.c.0.s8 %v379
    %v381 = vlaneseq
    %v382 = vshrl.u32 %v381, 7
    %v383 = vsub.s32 %v380, %v382
    %v384 = vrot.slane %v370, %v383
    %v385 = vcombine.low %v360, %v368
    %v386 = vcombine.high %v360, %v368
    %v388 = vunpack.c.l.s4 1934713408
    %v389 = vunpack.c.0.s8 %v388
    %v390 = vlaneseq
    %v391 = vshrl.u32 %v390, 7
    %v392 = vsub.s32 %v389, %v391
    %v393 = vrot.slane %v385, %v392
    %v395 = vunpack.c.l.s4 1934713408
    %v396 = vunpack.c.0.s8 %v395
    %v397 = vlaneseq
    %v398 = vshrl.u32 %v397, 7
    %v399 = vsub.s32 %v396, %v398
    %v400 = vrot.slane %v386, %v399
    %v401 = vcombine.low %v377, %v393
    %v402 = vcombine.high %v377, %v393
    %v403 = vcombine.low %v384, %v400
    %v404 = vcombine.high %v384, %v400
    %v405 = vcombine.low %v265, %v267
    %v407 = vunpack.c.l.s4 1983009808
    %v408 = vunpack.c.0.s8 %v407
    %v409 = vlaneseq
    %v410 = vshrl.u32 %v409, 7
    %v411 = vsub.s32 %v408, %v410
    %v412 = vrot.slane %v405, %v411
    %v413 = vcombine.low %v266, %v268
    %v415 = vunpack.c.l.s4 1983009808
    %v416 = vunpack.c.0.s8 %v415
    %v417 = vlaneseq
    %v418 = vshrl.u32 %v417, 7
    %v419 = vsub.s32 %v416, %v418
    %v420 = vrot.slane %v413, %v419
    %v421 = vcombine.low %v333, %v335
    %v423 = vunpack.c.l.s4 1983009808
    %v424 = vunpack.c.0.s8 %v423
    %v425 = vlaneseq
    %v426 = vshrl.u32 %v425, 7
    %v427 = vsub.s32 %v424, %v426
    %v428 = vrot.slane %v421, %v427
    %v429 = vcombine.low %v334, %v336
    %v431 = vunpack.c.l.s4 1983009808
    %v432 = vunpack.c.0.s8 %v431
    %v433 = vlaneseq
    %v434 = vshrl.u32 %v433, 7
    %v435 = vsub.s32 %v432, %v434
    %v436 = vrot.slane %v429, %v435
    %v437 = vcombine.low %v412, %v420
    %v438 = vcombine.high %v412, %v420
    %v440 = vunpack.c.l.s4 1934713408
    %v441 = vunpack.c.0.s8 %v440
    %v442 = vlaneseq
    %v443 = vshrl.u32 %v442, 7
    %v444 = vsub.s32 %v441, %v443
    %v445 = vrot.slane %v437, %v444
    %v447 = vunpack.c.l.s4 1934713408
    %v448 = vunpack.c.0.s8 %v447
    %v449 = vlaneseq
    %v450 = vshrl.u32 %v449, 7
    %v451 = vsub.s32 %v448, %v450
    %v452 = vrot.slane %v438, %v451
    %v453 = vcombine.low %v428, %v436
    %v454 = vcombine.high %v428, %v436
    %v456 = vunpack.c.l.s4 1934713408
    %v457 = vunpack.c.0.s8 %v456
    %v458 = vlaneseq
    %v459 = vshrl.u32 %v458, 7
    %v460 = vsub.s32 %v457, %v459
    %v461 = vrot.slane %v453, %v460
    %v463 = vunpack.c.l.s4 1934713408
    %v464 = vunpack.c.0.s8 %v463
    %v465 = vlaneseq
    %v466 = vshrl.u32 %v465, 7
    %v467 = vsub.s32 %v464, %v466
    %v468 = vrot.slane %v454, %v467
    %v469 = vcombine.low %v445, %v461
    %v470 = vcombine.high %v445, %v461
    %v471 = vcombine.low %v452, %v468
    %v472 = vcombine.high %v452, %v468
    %v473 = vpack.c.bf16 %v401, %v401
    %v474 = vpack.c.bf16 %v402, %v402
    %v475 = vpack.c.bf16 %v403, %v403
    %v476 = vpack.c.bf16 %v404, %v404
    %v477 = vpack.c.bf16 %v469, %v469
    %v478 = vpack.c.bf16 %v470, %v470
    %v479 = vpack.c.bf16 %v471, %v471
    %v480 = vpack.c.bf16 %v472, %v472
    %481 = vrot.lane.b32.xlu0 %v175, 96
    %v482 = vpop.permute.xlu0 %481
    %483 = vrot.lane.b32.xlu0 %v178, 96
    %v484 = vpop.permute.xlu0 %483
    %485 = vrot.lane.b32.xlu0 %v184, 96
    %v486 = vpop.permute.xlu0 %485
    %487 = vrot.lane.b32.xlu0 %v186, 96
    %v488 = vpop.permute.xlu0 %487
    %489 = vrot.lane.b32.xlu0 %v190, 96
    %v490 = vpop.permute.xlu0 %489
    %491 = vrot.lane.b32.xlu0 %v192, 96
    %v492 = vpop.permute.xlu0 %491
    %493 = vrot.lane.b32.xlu0 %v196, 96
    %v494 = vpop.permute.xlu0 %493
    %495 = vrot.lane.b32.xlu0 %v198, 96
    %v496 = vpop.permute.xlu0 %495
    %v505 = vcombine.low %v482, %v490
    %v506 = vcombine.high %v482, %v490
    %v508 = vunpack.c.l.s4 1983009808
    %v509 = vunpack.c.0.s8 %v508
    %v510 = vlaneseq
    %v511 = vshrl.u32 %v510, 7
    %v512 = vsub.s32 %v509, %v511
    %v513 = vrot.slane %v505, %v512
    %v515 = vunpack.c.l.s4 1983009808
    %v516 = vunpack.c.0.s8 %v515
    %v517 = vlaneseq
    %v518 = vshrl.u32 %v517, 7
    %v519 = vsub.s32 %v516, %v518
    %v520 = vrot.slane %v506, %v519
    %v521 = vcombine.low %v486, %v494
    %v522 = vcombine.high %v486, %v494
    %v524 = vunpack.c.l.s4 1983009808
    %v525 = vunpack.c.0.s8 %v524
    %v526 = vlaneseq
    %v527 = vshrl.u32 %v526, 7
    %v528 = vsub.s32 %v525, %v527
    %v529 = vrot.slane %v521, %v528
    %v531 = vunpack.c.l.s4 1983009808
    %v532 = vunpack.c.0.s8 %v531
    %v533 = vlaneseq
    %v534 = vshrl.u32 %v533, 7
    %v535 = vsub.s32 %v532, %v534
    %v536 = vrot.slane %v522, %v535
    %v537 = vcombine.low %v513, %v529
    %v538 = vcombine.high %v513, %v529
    %v540 = vunpack.c.l.s4 1934713408
    %v541 = vunpack.c.0.s8 %v540
    %v542 = vlaneseq
    %v543 = vshrl.u32 %v542, 7
    %v544 = vsub.s32 %v541, %v543
    %v545 = vrot.slane %v537, %v544
    %v547 = vunpack.c.l.s4 1934713408
    %v548 = vunpack.c.0.s8 %v547
    %v549 = vlaneseq
    %v550 = vshrl.u32 %v549, 7
    %v551 = vsub.s32 %v548, %v550
    %v552 = vrot.slane %v538, %v551
    %v553 = vcombine.low %v520, %v536
    %v554 = vcombine.high %v520, %v536
    %v556 = vunpack.c.l.s4 1934713408
    %v557 = vunpack.c.0.s8 %v556
    %v558 = vlaneseq
    %v559 = vshrl.u32 %v558, 7
    %v560 = vsub.s32 %v557, %v559
    %v561 = vrot.slane %v553, %v560
    %v563 = vunpack.c.l.s4 1934713408
    %v564 = vunpack.c.0.s8 %v563
    %v565 = vlaneseq
    %v566 = vshrl.u32 %v565, 7
    %v567 = vsub.s32 %v564, %v566
    %v568 = vrot.slane %v554, %v567
    %v569 = vcombine.high %v545, 0.0
    %v570 = vcombine.high %v552, 0.0
    %v571 = vcombine.high %v561, 0.0
    %v572 = vcombine.high %v568, 0.0
    %v573 = vcombine.low %v484, %v492
    %v574 = vcombine.high %v484, %v492
    %v576 = vunpack.c.l.s4 1983009808
    %v577 = vunpack.c.0.s8 %v576
    %v578 = vlaneseq
    %v579 = vshrl.u32 %v578, 7
    %v580 = vsub.s32 %v577, %v579
    %v581 = vrot.slane %v573, %v580
    %v583 = vunpack.c.l.s4 1983009808
    %v584 = vunpack.c.0.s8 %v583
    %v585 = vlaneseq
    %v586 = vshrl.u32 %v585, 7
    %v587 = vsub.s32 %v584, %v586
    %v588 = vrot.slane %v574, %v587
    %v589 = vcombine.low %v488, %v496
    %v590 = vcombine.high %v488, %v496
    %v592 = vunpack.c.l.s4 1983009808
    %v593 = vunpack.c.0.s8 %v592
    %v594 = vlaneseq
    %v595 = vshrl.u32 %v594, 7
    %v596 = vsub.s32 %v593, %v595
    %v597 = vrot.slane %v589, %v596
    %v599 = vunpack.c.l.s4 1983009808
    %v600 = vunpack.c.0.s8 %v599
    %v601 = vlaneseq
    %v602 = vshrl.u32 %v601, 7
    %v603 = vsub.s32 %v600, %v602
    %v604 = vrot.slane %v590, %v603
    %v605 = vcombine.low %v581, %v597
    %v606 = vcombine.high %v581, %v597
    %v608 = vunpack.c.l.s4 1934713408
    %v609 = vunpack.c.0.s8 %v608
    %v610 = vlaneseq
    %v611 = vshrl.u32 %v610, 7
    %v612 = vsub.s32 %v609, %v611
    %v613 = vrot.slane %v605, %v612
    %v615 = vunpack.c.l.s4 1934713408
    %v616 = vunpack.c.0.s8 %v615
    %v617 = vlaneseq
    %v618 = vshrl.u32 %v617, 7
    %v619 = vsub.s32 %v616, %v618
    %v620 = vrot.slane %v606, %v619
    %v621 = vcombine.low %v588, %v604
    %v622 = vcombine.high %v588, %v604
    %v624 = vunpack.c.l.s4 1934713408
    %v625 = vunpack.c.0.s8 %v624
    %v626 = vlaneseq
    %v627 = vshrl.u32 %v626, 7
    %v628 = vsub.s32 %v625, %v627
    %v629 = vrot.slane %v621, %v628
    %v631 = vunpack.c.l.s4 1934713408
    %v632 = vunpack.c.0.s8 %v631
    %v633 = vlaneseq
    %v634 = vshrl.u32 %v633, 7
    %v635 = vsub.s32 %v632, %v634
    %v636 = vrot.slane %v622, %v635
    %v637 = vcombine.high %v613, 0.0
    %v638 = vcombine.high %v620, 0.0
    %v639 = vcombine.high %v629, 0.0
    %v640 = vcombine.high %v636, 0.0
    %v641 = vcombine.low %v545, %v561
    %v643 = vunpack.c.l.s4 1983009808
    %v644 = vunpack.c.0.s8 %v643
    %v645 = vlaneseq
    %v646 = vshrl.u32 %v645, 7
    %v647 = vsub.s32 %v644, %v646
    %v648 = vrot.slane %v641, %v647
    %v649 = vcombine.low %v552, %v568
    %v651 = vunpack.c.l.s4 1983009808
    %v652 = vunpack.c.0.s8 %v651
    %v653 = vlaneseq
    %v654 = vshrl.u32 %v653, 7
    %v655 = vsub.s32 %v652, %v654
    %v656 = vrot.slane %v649, %v655
    %v657 = vcombine.low %v613, %v629
    %v659 = vunpack.c.l.s4 1983009808
    %v660 = vunpack.c.0.s8 %v659
    %v661 = vlaneseq
    %v662 = vshrl.u32 %v661, 7
    %v663 = vsub.s32 %v660, %v662
    %v664 = vrot.slane %v657, %v663
    %v665 = vcombine.low %v620, %v636
    %v667 = vunpack.c.l.s4 1983009808
    %v668 = vunpack.c.0.s8 %v667
    %v669 = vlaneseq
    %v670 = vshrl.u32 %v669, 7
    %v671 = vsub.s32 %v668, %v670
    %v672 = vrot.slane %v665, %v671
    %v673 = vcombine.low %v648, %v656
    %v674 = vcombine.high %v648, %v656
    %v676 = vunpack.c.l.s4 1934713408
    %v677 = vunpack.c.0.s8 %v676
    %v678 = vlaneseq
    %v679 = vshrl.u32 %v678, 7
    %v680 = vsub.s32 %v677, %v679
    %v681 = vrot.slane %v673, %v680
    %v683 = vunpack.c.l.s4 1934713408
    %v684 = vunpack.c.0.s8 %v683
    %v685 = vlaneseq
    %v686 = vshrl.u32 %v685, 7
    %v687 = vsub.s32 %v684, %v686
    %v688 = vrot.slane %v674, %v687
    %v689 = vcombine.low %v664, %v672
    %v690 = vcombine.high %v664, %v672
    %v692 = vunpack.c.l.s4 1934713408
    %v693 = vunpack.c.0.s8 %v692
    %v694 = vlaneseq
    %v695 = vshrl.u32 %v694, 7
    %v696 = vsub.s32 %v693, %v695
    %v697 = vrot.slane %v689, %v696
    %v699 = vunpack.c.l.s4 1934713408
    %v700 = vunpack.c.0.s8 %v699
    %v701 = vlaneseq
    %v702 = vshrl.u32 %v701, 7
    %v703 = vsub.s32 %v700, %v702
    %v704 = vrot.slane %v690, %v703
    %v705 = vcombine.low %v681, %v697
    %v706 = vcombine.high %v681, %v697
    %v707 = vcombine.low %v688, %v704
    %v708 = vcombine.high %v688, %v704
    %v709 = vcombine.low %v569, %v571
    %v711 = vunpack.c.l.s4 1983009808
    %v712 = vunpack.c.0.s8 %v711
    %v713 = vlaneseq
    %v714 = vshrl.u32 %v713, 7
    %v715 = vsub.s32 %v712, %v714
    %v716 = vrot.slane %v709, %v715
    %v717 = vcombine.low %v570, %v572
    %v719 = vunpack.c.l.s4 1983009808
    %v720 = vunpack.c.0.s8 %v719
    %v721 = vlaneseq
    %v722 = vshrl.u32 %v721, 7
    %v723 = vsub.s32 %v720, %v722
    %v724 = vrot.slane %v717, %v723
    %v725 = vcombine.low %v637, %v639
    %v727 = vunpack.c.l.s4 1983009808
    %v728 = vunpack.c.0.s8 %v727
    %v729 = vlaneseq
    %v730 = vshrl.u32 %v729, 7
    %v731 = vsub.s32 %v728, %v730
    %v732 = vrot.slane %v725, %v731
    %v733 = vcombine.low %v638, %v640
    %v735 = vunpack.c.l.s4 1983009808
    %v736 = vunpack.c.0.s8 %v735
    %v737 = vlaneseq
    %v738 = vshrl.u32 %v737, 7
    %v739 = vsub.s32 %v736, %v738
    %v740 = vrot.slane %v733, %v739
    %v741 = vcombine.low %v716, %v724
    %v742 = vcombine.high %v716, %v724
    %v744 = vunpack.c.l.s4 1934713408
    %v745 = vunpack.c.0.s8 %v744
    %v746 = vlaneseq
    %v747 = vshrl.u32 %v746, 7
    %v748 = vsub.s32 %v745, %v747
    %v749 = vrot.slane %v741, %v748
    %v751 = vunpack.c.l.s4 1934713408
    %v752 = vunpack.c.0.s8 %v751
    %v753 = vlaneseq
    %v754 = vshrl.u32 %v753, 7
    %v755 = vsub.s32 %v752, %v754
    %v756 = vrot.slane %v742, %v755
    %v757 = vcombine.low %v732, %v740
    %v758 = vcombine.high %v732, %v740
    %v760 = vunpack.c.l.s4 1934713408
    %v761 = vunpack.c.0.s8 %v760
    %v762 = vlaneseq
    %v763 = vshrl.u32 %v762, 7
    %v764 = vsub.s32 %v761, %v763
    %v765 = vrot.slane %v757, %v764
    %v767 = vunpack.c.l.s4 1934713408
    %v768 = vunpack.c.0.s8 %v767
    %v769 = vlaneseq
    %v770 = vshrl.u32 %v769, 7
    %v771 = vsub.s32 %v768, %v770
    %v772 = vrot.slane %v758, %v771
    %v773 = vcombine.low %v749, %v765
    %v774 = vcombine.high %v749, %v765
    %v775 = vcombine.low %v756, %v772
    %v776 = vcombine.high %v756, %v772
    %v777 = vpack.c.bf16 %v705, %v705
    %v778 = vpack.c.bf16 %v706, %v706
    %v779 = vpack.c.bf16 %v707, %v707
    %v780 = vpack.c.bf16 %v708, %v708
    %v781 = vpack.c.bf16 %v773, %v773
    %v782 = vpack.c.bf16 %v774, %v774
    %v783 = vpack.c.bf16 %v775, %v775
    %v784 = vpack.c.bf16 %v776, %v776
    %785 = vrot.lane.b32.xlu0 %v175, 64
    %v786 = vpop.permute.xlu0 %785
    %787 = vrot.lane.b32.xlu0 %v178, 64
    %v788 = vpop.permute.xlu0 %787
    %789 = vrot.lane.b32.xlu0 %v184, 64
    %v790 = vpop.permute.xlu0 %789
    %791 = vrot.lane.b32.xlu0 %v186, 64
    %v792 = vpop.permute.xlu0 %791
    %793 = vrot.lane.b32.xlu0 %v190, 64
    %v794 = vpop.permute.xlu0 %793
    %795 = vrot.lane.b32.xlu0 %v192, 64
    %v796 = vpop.permute.xlu0 %795
    %797 = vrot.lane.b32.xlu0 %v196, 64
    %v798 = vpop.permute.xlu0 %797
    %799 = vrot.lane.b32.xlu0 %v198, 64
    %v800 = vpop.permute.xlu0 %799
    %v809 = vcombine.low %v786, %v794
    %v810 = vcombine.high %v786, %v794
    %v812 = vunpack.c.l.s4 1983009808
    %v813 = vunpack.c.0.s8 %v812
    %v814 = vlaneseq
    %v815 = vshrl.u32 %v814, 7
    %v816 = vsub.s32 %v813, %v815
    %v817 = vrot.slane %v809, %v816
    %v819 = vunpack.c.l.s4 1983009808
    %v820 = vunpack.c.0.s8 %v819
    %v821 = vlaneseq
    %v822 = vshrl.u32 %v821, 7
    %v823 = vsub.s32 %v820, %v822
    %v824 = vrot.slane %v810, %v823
    %v825 = vcombine.low %v790, %v798
    %v826 = vcombine.high %v790, %v798
    %v828 = vunpack.c.l.s4 1983009808
    %v829 = vunpack.c.0.s8 %v828
    %v830 = vlaneseq
    %v831 = vshrl.u32 %v830, 7
    %v832 = vsub.s32 %v829, %v831
    %v833 = vrot.slane %v825, %v832
    %v835 = vunpack.c.l.s4 1983009808
    %v836 = vunpack.c.0.s8 %v835
    %v837 = vlaneseq
    %v838 = vshrl.u32 %v837, 7
    %v839 = vsub.s32 %v836, %v838
    %v840 = vrot.slane %v826, %v839
    %v841 = vcombine.low %v817, %v833
    %v842 = vcombine.high %v817, %v833
    %v844 = vunpack.c.l.s4 1934713408
    %v845 = vunpack.c.0.s8 %v844
    %v846 = vlaneseq
    %v847 = vshrl.u32 %v846, 7
    %v848 = vsub.s32 %v845, %v847
    %v849 = vrot.slane %v841, %v848
    %v851 = vunpack.c.l.s4 1934713408
    %v852 = vunpack.c.0.s8 %v851
    %v853 = vlaneseq
    %v854 = vshrl.u32 %v853, 7
    %v855 = vsub.s32 %v852, %v854
    %v856 = vrot.slane %v842, %v855
    %v857 = vcombine.low %v824, %v840
    %v858 = vcombine.high %v824, %v840
    %v860 = vunpack.c.l.s4 1934713408
    %v861 = vunpack.c.0.s8 %v860
    %v862 = vlaneseq
    %v863 = vshrl.u32 %v862, 7
    %v864 = vsub.s32 %v861, %v863
    %v865 = vrot.slane %v857, %v864
    %v867 = vunpack.c.l.s4 1934713408
    %v868 = vunpack.c.0.s8 %v867
    %v869 = vlaneseq
    %v870 = vshrl.u32 %v869, 7
    %v871 = vsub.s32 %v868, %v870
    %v872 = vrot.slane %v858, %v871
    %v873 = vcombine.high %v849, 0.0
    %v874 = vcombine.high %v856, 0.0
    %v875 = vcombine.high %v865, 0.0
    %v876 = vcombine.high %v872, 0.0
    %v877 = vcombine.low %v788, %v796
    %v878 = vcombine.high %v788, %v796
    %v880 = vunpack.c.l.s4 1983009808
    %v881 = vunpack.c.0.s8 %v880
    %v882 = vlaneseq
    %v883 = vshrl.u32 %v882, 7
    %v884 = vsub.s32 %v881, %v883
    %v885 = vrot.slane %v877, %v884
    %v887 = vunpack.c.l.s4 1983009808
    %v888 = vunpack.c.0.s8 %v887
    %v889 = vlaneseq
    %v890 = vshrl.u32 %v889, 7
    %v891 = vsub.s32 %v888, %v890
    %v892 = vrot.slane %v878, %v891
    %v893 = vcombine.low %v792, %v800
    %v894 = vcombine.high %v792, %v800
    %v896 = vunpack.c.l.s4 1983009808
    %v897 = vunpack.c.0.s8 %v896
    %v898 = vlaneseq
    %v899 = vshrl.u32 %v898, 7
    %v900 = vsub.s32 %v897, %v899
    %v901 = vrot.slane %v893, %v900
    %v903 = vunpack.c.l.s4 1983009808
    %v904 = vunpack.c.0.s8 %v903
    %v905 = vlaneseq
    %v906 = vshrl.u32 %v905, 7
    %v907 = vsub.s32 %v904, %v906
    %v908 = vrot.slane %v894, %v907
    %v909 = vcombine.low %v885, %v901
    %v910 = vcombine.high %v885, %v901
    %v912 = vunpack.c.l.s4 1934713408
    %v913 = vunpack.c.0.s8 %v912
    %v914 = vlaneseq
    %v915 = vshrl.u32 %v914, 7
    %v916 = vsub.s32 %v913, %v915
    %v917 = vrot.slane %v909, %v916
    %v919 = vunpack.c.l.s4 1934713408
    %v920 = vunpack.c.0.s8 %v919
    %v921 = vlaneseq
    %v922 = vshrl.u32 %v921, 7
    %v923 = vsub.s32 %v920, %v922
    %v924 = vrot.slane %v910, %v923
    %v925 = vcombine.low %v892, %v908
    %v926 = vcombine.high %v892, %v908
    %v928 = vunpack.c.l.s4 1934713408
    %v929 = vunpack.c.0.s8 %v928
    %v930 = vlaneseq
    %v931 = vshrl.u32 %v930, 7
    %v932 = vsub.s32 %v929, %v931
    %v933 = vrot.slane %v925, %v932
    %v935 = vunpack.c.l.s4 1934713408
    %v936 = vunpack.c.0.s8 %v935
    %v937 = vlaneseq
    %v938 = vshrl.u32 %v937, 7
    %v939 = vsub.s32 %v936, %v938
    %v940 = vrot.slane %v926, %v939
    %v941 = vcombine.high %v917, 0.0
    %v942 = vcombine.high %v924, 0.0
    %v943 = vcombine.high %v933, 0.0
    %v944 = vcombine.high %v940, 0.0
    %v945 = vcombine.low %v849, %v865
    %v947 = vunpack.c.l.s4 1983009808
    %v948 = vunpack.c.0.s8 %v947
    %v949 = vlaneseq
    %v950 = vshrl.u32 %v949, 7
    %v951 = vsub.s32 %v948, %v950
    %v952 = vrot.slane %v945, %v951
    %v953 = vcombine.low %v856, %v872
    %v955 = vunpack.c.l.s4 1983009808
    %v956 = vunpack.c.0.s8 %v955
    %v957 = vlaneseq
    %v958 = vshrl.u32 %v957, 7
    %v959 = vsub.s32 %v956, %v958
    %v960 = vrot.slane %v953, %v959
    %v961 = vcombine.low %v917, %v933
    %v963 = vunpack.c.l.s4 1983009808
    %v964 = vunpack.c.0.s8 %v963
    %v965 = vlaneseq
    %v966 = vshrl.u32 %v965, 7
    %v967 = vsub.s32 %v964, %v966
    %v968 = vrot.slane %v961, %v967
    %v969 = vcombine.low %v924, %v940
    %v971 = vunpack.c.l.s4 1983009808
    %v972 = vunpack.c.0.s8 %v971
    %v973 = vlaneseq
    %v974 = vshrl.u32 %v973, 7
    %v975 = vsub.s32 %v972, %v974
    %v976 = vrot.slane %v969, %v975
    %v977 = vcombine.low %v952, %v960
    %v978 = vcombine.high %v952, %v960
    %v980 = vunpack.c.l.s4 1934713408
    %v981 = vunpack.c.0.s8 %v980
    %v982 = vlaneseq
    %v983 = vshrl.u32 %v982, 7
    %v984 = vsub.s32 %v981, %v983
    %v985 = vrot.slane %v977, %v984
    %v987 = vunpack.c.l.s4 1934713408
    %v988 = vunpack.c.0.s8 %v987
    %v989 = vlaneseq
    %v990 = vshrl.u32 %v989, 7
    %v991 = vsub.s32 %v988, %v990
    %v992 = vrot.slane %v978, %v991
    %v993 = vcombine.low %v968, %v976
    %v994 = vcombine.high %v968, %v976
    %v996 = vunpack.c.l.s4 1934713408
    %v997 = vunpack.c.0.s8 %v996
    %v998 = vlaneseq
    %v999 = vshrl.u32 %v998, 7
    %v1000 = vsub.s32 %v997, %v999
    %v1001 = vrot.slane %v993, %v1000
    %v1003 = vunpack.c.l.s4 1934713408
    %v1004 = vunpack.c.0.s8 %v1003
    %v1005 = vlaneseq
    %v1006 = vshrl.u32 %v1005, 7
    %v1007 = vsub.s32 %v1004, %v1006
    %v1008 = vrot.slane %v994, %v1007
    %v1009 = vcombine.low %v985, %v1001
    %v1010 = vcombine.high %v985, %v1001
    %v1011 = vcombine.low %v992, %v1008
    %v1012 = vcombine.high %v992, %v1008
    %v1013 = vcombine.low %v873, %v875
    %v1015 = vunpack.c.l.s4 1983009808
    %v1016 = vunpack.c.0.s8 %v1015
    %v1017 = vlaneseq
    %v1018 = vshrl.u32 %v1017, 7
    %v1019 = vsub.s32 %v1016, %v1018
    %v1020 = vrot.slane %v1013, %v1019
    %v1021 = vcombine.low %v874, %v876
    %v1023 = vunpack.c.l.s4 1983009808
    %v1024 = vunpack.c.0.s8 %v1023
    %v1025 = vlaneseq
    %v1026 = vshrl.u32 %v1025, 7
    %v1027 = vsub.s32 %v1024, %v1026
    %v1028 = vrot.slane %v1021, %v1027
    %v1029 = vcombine.low %v941, %v943
    %v1031 = vunpack.c.l.s4 1983009808
    %v1032 = vunpack.c.0.s8 %v1031
    %v1033 = vlaneseq
    %v1034 = vshrl.u32 %v1033, 7
    %v1035 = vsub.s32 %v1032, %v1034
    %v1036 = vrot.slane %v1029, %v1035
    %v1037 = vcombine.low %v942, %v944
    %v1039 = vunpack.c.l.s4 1983009808
    %v1040 = vunpack.c.0.s8 %v1039
    %v1041 = vlaneseq
    %v1042 = vshrl.u32 %v1041, 7
    %v1043 = vsub.s32 %v1040, %v1042
    %v1044 = vrot.slane %v1037, %v1043
    %v1045 = vcombine.low %v1020, %v1028
    %v1046 = vcombine.high %v1020, %v1028
    %v1048 = vunpack.c.l.s4 1934713408
    %v1049 = vunpack.c.0.s8 %v1048
    %v1050 = vlaneseq
    %v1051 = vshrl.u32 %v1050, 7
    %v1052 = vsub.s32 %v1049, %v1051
    %v1053 = vrot.slane %v1045, %v1052
    %v1055 = vunpack.c.l.s4 1934713408
    %v1056 = vunpack.c.0.s8 %v1055
    %v1057 = vlaneseq
    %v1058 = vshrl.u32 %v1057, 7
    %v1059 = vsub.s32 %v1056, %v1058
    %v1060 = vrot.slane %v1046, %v1059
    %v1061 = vcombine.low %v1036, %v1044
    %v1062 = vcombine.high %v1036, %v1044
    %v1064 = vunpack.c.l.s4 1934713408
    %v1065 = vunpack.c.0.s8 %v1064
    %v1066 = vlaneseq
    %v1067 = vshrl.u32 %v1066, 7
    %v1068 = vsub.s32 %v1065, %v1067
    %v1069 = vrot.slane %v1061, %v1068
    %v1071 = vunpack.c.l.s4 1934713408
    %v1072 = vunpack.c.0.s8 %v1071
    %v1073 = vlaneseq
    %v1074 = vshrl.u32 %v1073, 7
    %v1075 = vsub.s32 %v1072, %v1074
    %v1076 = vrot.slane %v1062, %v1075
    %v1077 = vcombine.low %v1053, %v1069
    %v1078 = vcombine.high %v1053, %v1069
    %v1079 = vcombine.low %v1060, %v1076
    %v1080 = vcombine.high %v1060, %v1076
    %v1081 = vpack.c.bf16 %v1009, %v1009
    %v1082 = vpack.c.bf16 %v1010, %v1010
    %v1083 = vpack.c.bf16 %v1011, %v1011
    %v1084 = vpack.c.bf16 %v1012, %v1012
    %v1085 = vpack.c.bf16 %v1077, %v1077
    %v1086 = vpack.c.bf16 %v1078, %v1078
    %v1087 = vpack.c.bf16 %v1079, %v1079
    %v1088 = vpack.c.bf16 %v1080, %v1080
    %vm1089 = vcmask 64512
    %v1091 = vsel %vm1089, %v473, 0
    %v1094 = vsel %vm1089, %v777, 0
    %1096 = vmatprep.subr.bf16.mxu0 0
    %1097 = vmatpush1.bf16.xpose.msra.mxu0 %v1094
    %1098 = vmatprep.subr.bf16.mxu0 0
    %1099 = vmatpush1.bf16.xpose.msra.mxu0 0
    %1100 = vmatprep.subr.bf16.mxu0 0
    %1101 = vmatpush1.bf16.xpose.msra.mxu0 0
    %1102 = vmatprep.subr.bf16.mxu0 0
    %1103 = vmatpush1.bf16.xpose.msra.mxu0 0
    %1104 = vmatprep.subr.bf16.mxu0 0
    %1105 = vmatpush1.bf16.xpose.msra.mxu0 0
    %1106 = vmatprep.subr.bf16.mxu0 0
    %1107 = vmatpush1.bf16.xpose.msra.mxu0 0
    %1108 = vmatprep.subr.bf16.mxu0 0
    %1109 = vmatpush1.bf16.xpose.msra.mxu0 0
    %1110 = vmatprep.subr.bf16.mxu0 0
    %1111 = vmatpush1.bf16.xpose.msra.mxu0 0
    %1112 = vmatprep.subr.bf16.mxu0 0
    %1113 = vmatpush1.bf16.xpose.msra.mxu0 0
    %1114 = vmatprep.subr.bf16.mxu0 0
    %1115 = vmatpush1.bf16.xpose.msra.mxu0 0
    %1116 = vmatprep.subr.bf16.mxu0 0
    %1117 = vmatpush1.bf16.xpose.msra.mxu0 0
    %1118 = vmatprep.subr.bf16.mxu0 0
    %1119 = vmatpush1.bf16.xpose.msra.mxu0 0
    %1120 = vmatprep.subr.bf16.mxu0 0
    %1121 = vmatpush1.bf16.xpose.msra.mxu0 0
    %1122 = vmatprep.subr.bf16.mxu0 0
    %1123 = vmatpush1.bf16.xpose.msra.mxu0 0
    %1124 = vmatprep.subr.bf16.mxu0 0
    %1125 = vmatpush1.bf16.xpose.msra.mxu0 0
    %1126 = vmatprep.subr.bf16.mxu0 0
    %1127 = vmatpush1.bf16.xpose.msra.mxu0 0
    %1128 = vmatprep.mubr.bf16.mxu0 0
    %1129 = vmatmul.mubr.bf16.gmra.mrb[0].mxu0 %v1091
    %v1130 = vpop.f32.mrb[0].mxu0
    %v1131 = vadd.f32 0.0, %v1130
    %v1132 = vpop.f32.mrb[0].mxu0
    %v1133 = vpop.f32.mrb[0].mxu0
    %v1134 = vpop.f32.mrb[0].mxu0
    %1135 = vdwg.mxu0
    %v1137 = vsel %vm1089, %v474, 0
    %v1140 = vsel %vm1089, %v778, 0
    %1142 = vmatprep.subr.bf16.mxu0 0
    %1143 = vmatpush1.bf16.xpose.msra.mxu0 %v1140
    %1144 = vmatprep.subr.bf16.mxu0 0
    %1145 = vmatpush1.bf16.xpose.msra.mxu0 0
    %1146 = vmatprep.subr.bf16.mxu0 0
    %1147 = vmatpush1.bf16.xpose.msra.mxu0 0
    %1148 = vmatprep.subr.bf16.mxu0 0
    %1149 = vmatpush1.bf16.xpose.msra.mxu0 0
    %1150 = vmatprep.subr.bf16.mxu0 0
    %1151 = vmatpush1.bf16.xpose.msra.mxu0 0
    %1152 = vmatprep.subr.bf16.mxu0 0
    %1153 = vmatpush1.bf16.xpose.msra.mxu0 0
    %1154 = vmatprep.subr.bf16.mxu0 0
    %1155 = vmatpush1.bf16.xpose.msra.mxu0 0
    %1156 = vmatprep.subr.bf16.mxu0 0
    %1157 = vmatpush1.bf16.xpose.msra.mxu0 0
    %1158 = vmatprep.subr.bf16.mxu0 0
    %1159 = vmatpush1.bf16.xpose.msra.mxu0 0
    %1160 = vmatprep.subr.bf16.mxu0 0
    %1161 = vmatpush1.bf16.xpose.msra.mxu0 0
    %1162 = vmatprep.subr.bf16.mxu0 0
    %1163 = vmatpush1.bf16.xpose.msra.mxu0 0
    %1164 = vmatprep.subr.bf16.mxu0 0
    %1165 = vmatpush1.bf16.xpose.msra.mxu0 0
    %1166 = vmatprep.subr.bf16.mxu0 0
    %1167 = vmatpush1.bf16.xpose.msra.mxu0 0
    %1168 = vmatprep.subr.bf16.mxu0 0
    %1169 = vmatpush1.bf16.xpose.msra.mxu0 0
    %1170 = vmatprep.subr.bf16.mxu0 0
    %1171 = vmatpush1.bf16.xpose.msra.mxu0 0
    %1172 = vmatprep.subr.bf16.mxu0 0
    %1173 = vmatpush1.bf16.xpose.msra.mxu0 0
    %1174 = vmatprep.mubr.bf16.mxu0 0
    %1175 = vmatmul.mubr.bf16.gmra.mrb[0].mxu0 %v1137
    %v1176 = vpop.f32.mrb[0].mxu0
    %v1177 = vadd.f32 0.0, %v1176
    %v1178 = vpop.f32.mrb[0].mxu0
    %v1179 = vpop.f32.mrb[0].mxu0
    %v1180 = vpop.f32.mrb[0].mxu0
    %1181 = vdwg.mxu0
    %v1183 = vsel %vm1089, %v475, 0
    %v1186 = vsel %vm1089, %v779, 0
    %1188 = vmatprep.subr.bf16.mxu0 0
    %1189 = vmatpush1.bf16.xpose.msra.mxu0 %v1186
    %1190 = vmatprep.subr.bf16.mxu0 0
    %1191 = vmatpush1.bf16.xpose.msra.mxu0 0
    %1192 = vmatprep.subr.bf16.mxu0 0
    %1193 = vmatpush1.bf16.xpose.msra.mxu0 0
    %1194 = vmatprep.subr.bf16.mxu0 0
    %1195 = vmatpush1.bf16.xpose.msra.mxu0 0
    %1196 = vmatprep.subr.bf16.mxu0 0
    %1197 = vmatpush1.bf16.xpose.msra.mxu0 0
    %1198 = vmatprep.subr.bf16.mxu0 0
    %1199 = vmatpush1.bf16.xpose.msra.mxu0 0
    %1200 = vmatprep.subr.bf16.mxu0 0
    %1201 = vmatpush1.bf16.xpose.msra.mxu0 0
    %1202 = vmatprep.subr.bf16.mxu0 0
    %1203 = vmatpush1.bf16.xpose.msra.mxu0 0
    %1204 = vmatprep.subr.bf16.mxu0 0
    %1205 = vmatpush1.bf16.xpose.msra.mxu0 0
    %1206 = vmatprep.subr.bf16.mxu0 0
    %1207 = vmatpush1.bf16.xpose.msra.mxu0 0
    %1208 = vmatprep.subr.bf16.mxu0 0
    %1209 = vmatpush1.bf16.xpose.msra.mxu0 0
    %1210 = vmatprep.subr.bf16.mxu0 0
    %1211 = vmatpush1.bf16.xpose.msra.mxu0 0
    %1212 = vmatprep.subr.bf16.mxu0 0
    %1213 = vmatpush1.bf16.xpose.msra.mxu0 0
    %1214 = vmatprep.subr.bf16.mxu0 0
    %1215 = vmatpush1.bf16.xpose.msra.mxu0 0
    %1216 = vmatprep.subr.bf16.mxu0 0
    %1217 = vmatpush1.bf16.xpose.msra.mxu0 0
    %1218 = vmatprep.subr.bf16.mxu0 0
    %1219 = vmatpush1.bf16.xpose.msra.mxu0 0
    %1220 = vmatprep.mubr.bf16.mxu0 0
    %1221 = vmatmul.mubr.bf16.gmra.mrb[0].mxu0 %v1183
    %v1222 = vpop.f32.mrb[0].mxu0
    %v1223 = vadd.f32 0.0, %v1222
    %v1224 = vpop.f32.mrb[0].mxu0
    %v1225 = vpop.f32.mrb[0].mxu0
    %v1226 = vpop.f32.mrb[0].mxu0
    %1227 = vdwg.mxu0
    %v1229 = vsel %vm1089, %v476, 0
    %v1232 = vsel %vm1089, %v780, 0
    %1234 = vmatprep.subr.bf16.mxu0 0
    %1235 = vmatpush1.bf16.xpose.msra.mxu0 %v1232
    %1236 = vmatprep.subr.bf16.mxu0 0
    %1237 = vmatpush1.bf16.xpose.msra.mxu0 0
    %1238 = vmatprep.subr.bf16.mxu0 0
    %1239 = vmatpush1.bf16.xpose.msra.mxu0 0
    %1240 = vmatprep.subr.bf16.mxu0 0
    %1241 = vmatpush1.bf16.xpose.msra.mxu0 0
    %1242 = vmatprep.subr.bf16.mxu0 0
    %1243 = vmatpush1.bf16.xpose.msra.mxu0 0
    %1244 = vmatprep.subr.bf16.mxu0 0
    %1245 = vmatpush1.bf16.xpose.msra.mxu0 0
    %1246 = vmatprep.subr.bf16.mxu0 0
    %1247 = vmatpush1.bf16.xpose.msra.mxu0 0
    %1248 = vmatprep.subr.bf16.mxu0 0
    %1249 = vmatpush1.bf16.xpose.msra.mxu0 0
    %1250 = vmatprep.subr.bf16.mxu0 0
    %1251 = vmatpush1.bf16.xpose.msra.mxu0 0
    %1252 = vmatprep.subr.bf16.mxu0 0
    %1253 = vmatpush1.bf16.xpose.msra.mxu0 0
    %1254 = vmatprep.subr.bf16.mxu0 0
    %1255 = vmatpush1.bf16.xpose.msra.mxu0 0
    %1256 = vmatprep.subr.bf16.mxu0 0
    %1257 = vmatpush1.bf16.xpose.msra.mxu0 0
    %1258 = vmatprep.subr.bf16.mxu0 0
    %1259 = vmatpush1.bf16.xpose.msra.mxu0 0
    %1260 = vmatprep.subr.bf16.mxu0 0
    %1261 = vmatpush1.bf16.xpose.msra.mxu0 0
    %1262 = vmatprep.subr.bf16.mxu0 0
    %1263 = vmatpush1.bf16.xpose.msra.mxu0 0
    %1264 = vmatprep.subr.bf16.mxu0 0
    %1265 = vmatpush1.bf16.xpose.msra.mxu0 0
    %1266 = vmatprep.mubr.bf16.mxu0 0
    %1267 = vmatmul.mubr.bf16.gmra.mrb[0].mxu0 %v1229
    %v1268 = vpop.f32.mrb[0].mxu0
    %v1269 = vadd.f32 0.0, %v1268
    %v1270 = vpop.f32.mrb[0].mxu0
    %v1271 = vpop.f32.mrb[0].mxu0
    %v1272 = vpop.f32.mrb[0].mxu0
    %1273 = vdwg.mxu0
    %v1275 = vsel %vm1089, %v477, 0
    %v1278 = vsel %vm1089, %v781, 0
    %1280 = vmatprep.subr.bf16.mxu0 0
    %1281 = vmatpush1.bf16.xpose.msra.mxu0 %v1278
    %1282 = vmatprep.subr.bf16.mxu0 0
    %1283 = vmatpush1.bf16.xpose.msra.mxu0 0
    %1284 = vmatprep.subr.bf16.mxu0 0
    %1285 = vmatpush1.bf16.xpose.msra.mxu0 0
    %1286 = vmatprep.subr.bf16.mxu0 0
    %1287 = vmatpush1.bf16.xpose.msra.mxu0 0
    %1288 = vmatprep.subr.bf16.mxu0 0
    %1289 = vmatpush1.bf16.xpose.msra.mxu0 0
    %1290 = vmatprep.subr.bf16.mxu0 0
    %1291 = vmatpush1.bf16.xpose.msra.mxu0 0
    %1292 = vmatprep.subr.bf16.mxu0 0
    %1293 = vmatpush1.bf16.xpose.msra.mxu0 0
    %1294 = vmatprep.subr.bf16.mxu0 0
    %1295 = vmatpush1.bf16.xpose.msra.mxu0 0
    %1296 = vmatprep.subr.bf16.mxu0 0
    %1297 = vmatpush1.bf16.xpose.msra.mxu0 0
    %1298 = vmatprep.subr.bf16.mxu0 0
    %1299 = vmatpush1.bf16.xpose.msra.mxu0 0
    %1300 = vmatprep.subr.bf16.mxu0 0
    %1301 = vmatpush1.bf16.xpose.msra.mxu0 0
    %1302 = vmatprep.subr.bf16.mxu0 0
    %1303 = vmatpush1.bf16.xpose.msra.mxu0 0
    %1304 = vmatprep.subr.bf16.mxu0 0
    %1305 = vmatpush1.bf16.xpose.msra.mxu0 0
    %1306 = vmatprep.subr.bf16.mxu0 0
    %1307 = vmatpush1.bf16.xpose.msra.mxu0 0
    %1308 = vmatprep.subr.bf16.mxu0 0
    %1309 = vmatpush1.bf16.xpose.msra.mxu0 0
    %1310 = vmatprep.subr.bf16.mxu0 0
    %1311 = vmatpush1.bf16.xpose.msra.mxu0 0
    %1312 = vmatprep.mubr.bf16.mxu0 0
    %1313 = vmatmul.mubr.bf16.gmra.mrb[0].mxu0 %v1275
    %v1314 = vpop.f32.mrb[0].mxu0
    %v1315 = vadd.f32 0.0, %v1314
    %v1316 = vpop.f32.mrb[0].mxu0
    %v1317 = vpop.f32.mrb[0].mxu0
    %v1318 = vpop.f32.mrb[0].mxu0
    %1319 = vdwg.mxu0
    %v1321 = vsel %vm1089, %v478, 0
    %v1324 = vsel %vm1089, %v782, 0
    %1326 = vmatprep.subr.bf16.mxu0 0
    %1327 = vmatpush1.bf16.xpose.msra.mxu0 %v1324
    %1328 = vmatprep.subr.bf16.mxu0 0
    %1329 = vmatpush1.bf16.xpose.msra.mxu0 0
    %1330 = vmatprep.subr.bf16.mxu0 0
    %1331 = vmatpush1.bf16.xpose.msra.mxu0 0
    %1332 = vmatprep.subr.bf16.mxu0 0
    %1333 = vmatpush1.bf16.xpose.msra.mxu0 0
    %1334 = vmatprep.subr.bf16.mxu0 0
    %1335 = vmatpush1.bf16.xpose.msra.mxu0 0
    %1336 = vmatprep.subr.bf16.mxu0 0
    %1337 = vmatpush1.bf16.xpose.msra.mxu0 0
    %1338 = vmatprep.subr.bf16.mxu0 0
    %1339 = vmatpush1.bf16.xpose.msra.mxu0 0
    %1340 = vmatprep.subr.bf16.mxu0 0
    %1341 = vmatpush1.bf16.xpose.msra.mxu0 0
    %1342 = vmatprep.subr.bf16.mxu0 0
    %1343 = vmatpush1.bf16.xpose.msra.mxu0 0
    %1344 = vmatprep.subr.bf16.mxu0 0
    %1345 = vmatpush1.bf16.xpose.msra.mxu0 0
    %1346 = vmatprep.subr.bf16.mxu0 0
    %1347 = vmatpush1.bf16.xpose.msra.mxu0 0
    %1348 = vmatprep.subr.bf16.mxu0 0
    %1349 = vmatpush1.bf16.xpose.msra.mxu0 0
    %1350 = vmatprep.subr.bf16.mxu0 0
    %1351 = vmatpush1.bf16.xpose.msra.mxu0 0
    %1352 = vmatprep.subr.bf16.mxu0 0
    %1353 = vmatpush1.bf16.xpose.msra.mxu0 0
    %1354 = vmatprep.subr.bf16.mxu0 0
    %1355 = vmatpush1.bf16.xpose.msra.mxu0 0
    %1356 = vmatprep.subr.bf16.mxu0 0
    %1357 = vmatpush1.bf16.xpose.msra.mxu0 0
    %1358 = vmatprep.mubr.bf16.mxu0 0
    %1359 = vmatmul.mubr.bf16.gmra.mrb[0].mxu0 %v1321
    %v1360 = vpop.f32.mrb[0].mxu0
    %v1361 = vadd.f32 0.0, %v1360
    %v1362 = vpop.f32.mrb[0].mxu0
    %v1363 = vpop.f32.mrb[0].mxu0
    %v1364 = vpop.f32.mrb[0].mxu0
    %1365 = vdwg.mxu0
    %v1367 = vsel %vm1089, %v479, 0
    %v1370 = vsel %vm1089, %v783, 0
    %1372 = vmatprep.subr.bf16.mxu0 0
    %1373 = vmatpush1.bf16.xpose.msra.mxu0 %v1370
    %1374 = vmatprep.subr.bf16.mxu0 0
    %1375 = vmatpush1.bf16.xpose.msra.mxu0 0
    %1376 = vmatprep.subr.bf16.mxu0 0
    %1377 = vmatpush1.bf16.xpose.msra.mxu0 0
    %1378 = vmatprep.subr.bf16.mxu0 0
    %1379 = vmatpush1.bf16.xpose.msra.mxu0 0
    %1380 = vmatprep.subr.bf16.mxu0 0
    %1381 = vmatpush1.bf16.xpose.msra.mxu0 0
    %1382 = vmatprep.subr.bf16.mxu0 0
    %1383 = vmatpush1.bf16.xpose.msra.mxu0 0
    %1384 = vmatprep.subr.bf16.mxu0 0
    %1385 = vmatpush1.bf16.xpose.msra.mxu0 0
    %1386 = vmatprep.subr.bf16.mxu0 0
    %1387 = vmatpush1.bf16.xpose.msra.mxu0 0
    %1388 = vmatprep.subr.bf16.mxu0 0
    %1389 = vmatpush1.bf16.xpose.msra.mxu0 0
    %1390 = vmatprep.subr.bf16.mxu0 0
    %1391 = vmatpush1.bf16.xpose.msra.mxu0 0
    %1392 = vmatprep.subr.bf16.mxu0 0
    %1393 = vmatpush1.bf16.xpose.msra.mxu0 0
    %1394 = vmatprep.subr.bf16.mxu0 0
    %1395 = vmatpush1.bf16.xpose.msra.mxu0 0
    %1396 = vmatprep.subr.bf16.mxu0 0
    %1397 = vmatpush1.bf16.xpose.msra.mxu0 0
    %1398 = vmatprep.subr.bf16.mxu0 0
    %1399 = vmatpush1.bf16.xpose.msra.mxu0 0
    %1400 = vmatprep.subr.bf16.mxu0 0
    %1401 = vmatpush1.bf16.xpose.msra.mxu0 0
    %1402 = vmatprep.subr.bf16.mxu0 0
    %1403 = vmatpush1.bf16.xpose.msra.mxu0 0
    %1404 = vmatprep.mubr.bf16.mxu0 0
    %1405 = vmatmul.mubr.bf16.gmra.mrb[0].mxu0 %v1367
    %v1406 = vpop.f32.mrb[0].mxu0
    %v1407 = vadd.f32 0.0, %v1406
    %v1408 = vpop.f32.mrb[0].mxu0
    %v1409 = vpop.f32.mrb[0].mxu0
    %v1410 = vpop.f32.mrb[0].mxu0
    %1411 = vdwg.mxu0
    %v1413 = vsel %vm1089, %v480, 0
    %v1416 = vsel %vm1089, %v784, 0
    %1418 = vmatprep.subr.bf16.mxu0 0
    %1419 = vmatpush1.bf16.xpose.msra.mxu0 %v1416
    %1420 = vmatprep.subr.bf16.mxu0 0
    %1421 = vmatpush1.bf16.xpose.msra.mxu0 0
    %1422 = vmatprep.subr.bf16.mxu0 0
    %1423 = vmatpush1.bf16.xpose.msra.mxu0 0
    %1424 = vmatprep.subr.bf16.mxu0 0
    %1425 = vmatpush1.bf16.xpose.msra.mxu0 0
    %1426 = vmatprep.subr.bf16.mxu0 0
    %1427 = vmatpush1.bf16.xpose.msra.mxu0 0
    %1428 = vmatprep.subr.bf16.mxu0 0
    %1429 = vmatpush1.bf16.xpose.msra.mxu0 0
    %1430 = vmatprep.subr.bf16.mxu0 0
    %1431 = vmatpush1.bf16.xpose.msra.mxu0 0
    %1432 = vmatprep.subr.bf16.mxu0 0
    %1433 = vmatpush1.bf16.xpose.msra.mxu0 0
    %1434 = vmatprep.subr.bf16.mxu0 0
    %1435 = vmatpush1.bf16.xpose.msra.mxu0 0
    %1436 = vmatprep.subr.bf16.mxu0 0
    %1437 = vmatpush1.bf16.xpose.msra.mxu0 0
    %1438 = vmatprep.subr.bf16.mxu0 0
    %1439 = vmatpush1.bf16.xpose.msra.mxu0 0
    %1440 = vmatprep.subr.bf16.mxu0 0
    %1441 = vmatpush1.bf16.xpose.msra.mxu0 0
    %1442 = vmatprep.subr.bf16.mxu0 0
    %1443 = vmatpush1.bf16.xpose.msra.mxu0 0
    %1444 = vmatprep.subr.bf16.mxu0 0
    %1445 = vmatpush1.bf16.xpose.msra.mxu0 0
    %1446 = vmatprep.subr.bf16.mxu0 0
    %1447 = vmatpush1.bf16.xpose.msra.mxu0 0
    %1448 = vmatprep.subr.bf16.mxu0 0
    %1449 = vmatpush1.bf16.xpose.msra.mxu0 0
    %1450 = vmatprep.mubr.bf16.mxu0 0
    %1451 = vmatmul.mubr.bf16.gmra.mrb[0].mxu0 %v1413
    %v1452 = vpop.f32.mrb[0].mxu0
    %v1453 = vadd.f32 0.0, %v1452
    %v1454 = vpop.f32.mrb[0].mxu0
    %v1455 = vpop.f32.mrb[0].mxu0
    %v1456 = vpop.f32.mrb[0].mxu0
    %1457 = vdwg.mxu0
    %v1458 = vsel %vm1089, %v1131, -inf
    %1459 = vmax.xlane.f32.xlu0 %v1458
    %v1460 = vpop.xlane.xlu0 %1459
    %v1461 = vsel %vm1089, %v1177, -inf
    %1462 = vmax.xlane.f32.xlu0 %v1461
    %v1463 = vpop.xlane.xlu0 %1462
    %v1464 = vsel %vm1089, %v1223, -inf
    %1465 = vmax.xlane.f32.xlu0 %v1464
    %v1466 = vpop.xlane.xlu0 %1465
    %v1467 = vsel %vm1089, %v1269, -inf
    %1468 = vmax.xlane.f32.xlu0 %v1467
    %v1469 = vpop.xlane.xlu0 %1468
    %v1470 = vsel %vm1089, %v1315, -inf
    %1471 = vmax.xlane.f32.xlu0 %v1470
    %v1472 = vpop.xlane.xlu0 %1471
    %v1473 = vsel %vm1089, %v1361, -inf
    %1474 = vmax.xlane.f32.xlu0 %v1473
    %v1475 = vpop.xlane.xlu0 %1474
    %v1476 = vsel %vm1089, %v1407, -inf
    %1477 = vmax.xlane.f32.xlu0 %v1476
    %v1478 = vpop.xlane.xlu0 %1477
    %v1479 = vsel %vm1089, %v1453, -inf
    %1480 = vmax.xlane.f32.xlu0 %v1479
    %v1481 = vpop.xlane.xlu0 %1480
    %v1482 = vsub.f32 %v1131, %v1460
    %v1483 = vsub.f32 %v1177, %v1463
    %v1484 = vsub.f32 %v1223, %v1466
    %v1485 = vsub.f32 %v1269, %v1469
    %v1486 = vsub.f32 %v1315, %v1472
    %v1487 = vsub.f32 %v1361, %v1475
    %v1488 = vsub.f32 %v1407, %v1478
    %v1489 = vsub.f32 %v1453, %v1481
    %v1490 = vmul.f32 %v1482, 1.442695
    %v1491 = vpow.pop %v1490
    %v1492 = vmul.f32 %v1483, 1.442695
    %v1493 = vpow.pop %v1492
    %v1494 = vmul.f32 %v1484, 1.442695
    %v1495 = vpow.pop %v1494
    %v1496 = vmul.f32 %v1485, 1.442695
    %v1497 = vpow.pop %v1496
    %v1498 = vmul.f32 %v1486, 1.442695
    %v1499 = vpow.pop %v1498
    %v1500 = vmul.f32 %v1487, 1.442695
    %v1501 = vpow.pop %v1500
    %v1502 = vmul.f32 %v1488, 1.442695
    %v1503 = vpow.pop %v1502
    %v1504 = vmul.f32 %v1489, 1.442695
    %v1505 = vpow.pop %v1504
    %v1506 = vsel %vm1089, %v1491, 0.0
    %1507 = vadd.xlane.f32.xlu0 %v1506
    %v1508 = vpop.xlane.xlu0 %1507
    %v1509 = vsel %vm1089, %v1493, 0.0
    %1510 = vadd.xlane.f32.xlu0 %v1509
    %v1511 = vpop.xlane.xlu0 %1510
    %v1512 = vsel %vm1089, %v1495, 0.0
    %1513 = vadd.xlane.f32.xlu0 %v1512
    %v1514 = vpop.xlane.xlu0 %1513
    %v1515 = vsel %vm1089, %v1497, 0.0
    %1516 = vadd.xlane.f32.xlu0 %v1515
    %v1517 = vpop.xlane.xlu0 %1516
    %v1518 = vsel %vm1089, %v1499, 0.0
    %1519 = vadd.xlane.f32.xlu0 %v1518
    %v1520 = vpop.xlane.xlu0 %1519
    %v1521 = vsel %vm1089, %v1501, 0.0
    %1522 = vadd.xlane.f32.xlu0 %v1521
    %v1523 = vpop.xlane.xlu0 %1522
    %v1524 = vsel %vm1089, %v1503, 0.0
    %1525 = vadd.xlane.f32.xlu0 %v1524
    %v1526 = vpop.xlane.xlu0 %1525
    %v1527 = vsel %vm1089, %v1505, 0.0
    %1528 = vadd.xlane.f32.xlu0 %v1527
    %v1529 = vpop.xlane.xlu0 %1528
    %v1530 = vrcp.pop %v1508
    %v1531 = vrcp.pop %v1511
    %v1532 = vrcp.pop %v1514
    %v1533 = vrcp.pop %v1517
    %v1534 = vrcp.pop %v1520
    %v1535 = vrcp.pop %v1523
    %v1536 = vrcp.pop %v1526
    %v1537 = vrcp.pop %v1529
    %v1538 = vmul.f32 %v1491, %v1530
    %v1539 = vmul.f32 %v1493, %v1531
    %v1540 = vmul.f32 %v1495, %v1532
    %v1541 = vmul.f32 %v1497, %v1533
    %v1542 = vmul.f32 %v1499, %v1534
    %v1543 = vmul.f32 %v1501, %v1535
    %v1544 = vmul.f32 %v1503, %v1536
    %v1545 = vmul.f32 %v1505, %v1537
    %v1546 = vpack.c.bf16 %v1538, %v1538
    %v1547 = vpack.c.bf16 %v1539, %v1539
    %v1548 = vpack.c.bf16 %v1540, %v1540
    %v1549 = vpack.c.bf16 %v1541, %v1541
    %v1550 = vpack.c.bf16 %v1542, %v1542
    %v1551 = vpack.c.bf16 %v1543, %v1543
    %v1552 = vpack.c.bf16 %v1544, %v1544
    %v1553 = vpack.c.bf16 %v1545, %v1545
    %v1555 = vsel %vm1089, %v1546, 0
    %vm1557 = vcmask 1043456
    %v1559 = vsel %vm1557, %v1081, 0
    %1561 = vmatprep.subr.bf16.mxu0 0
    %1562 = vmatpush1.bf16.msra.mxu0 %v1559
    %1563 = vmatprep.subr.bf16.mxu0 0
    %1564 = vmatpush1.bf16.msra.mxu0 0
    %1565 = vmatprep.subr.bf16.mxu0 0
    %1566 = vmatpush1.bf16.msra.mxu0 0
    %1567 = vmatprep.subr.bf16.mxu0 0
    %1568 = vmatpush1.bf16.msra.mxu0 0
    %1569 = vmatprep.subr.bf16.mxu0 0
    %1570 = vmatpush1.bf16.msra.mxu0 0
    %1571 = vmatprep.subr.bf16.mxu0 0
    %1572 = vmatpush1.bf16.msra.mxu0 0
    %1573 = vmatprep.subr.bf16.mxu0 0
    %1574 = vmatpush1.bf16.msra.mxu0 0
    %1575 = vmatprep.subr.bf16.mxu0 0
    %1576 = vmatpush1.bf16.msra.mxu0 0
    %1577 = vmatprep.subr.bf16.mxu0 0
    %1578 = vmatpush1.bf16.msra.mxu0 0
    %1579 = vmatprep.subr.bf16.mxu0 0
    %1580 = vmatpush1.bf16.msra.mxu0 0
    %1581 = vmatprep.subr.bf16.mxu0 0
    %1582 = vmatpush1.bf16.msra.mxu0 0
    %1583 = vmatprep.subr.bf16.mxu0 0
    %1584 = vmatpush1.bf16.msra.mxu0 0
    %1585 = vmatprep.subr.bf16.mxu0 0
    %1586 = vmatpush1.bf16.msra.mxu0 0
    %1587 = vmatprep.subr.bf16.mxu0 0
    %1588 = vmatpush1.bf16.msra.mxu0 0
    %1589 = vmatprep.subr.bf16.mxu0 0
    %1590 = vmatpush1.bf16.msra.mxu0 0
    %1591 = vmatprep.subr.bf16.mxu0 0
    %1592 = vmatpush1.bf16.msra.mxu0 0
    %1593 = vmatprep.mubr.bf16.mxu0 0
    %1594 = vmatmul.mubr.bf16.gmra.mrb[0].mxu0 %v1555
    %v1595 = vpop.f32.mrb[0].mxu0
    %v1596 = vadd.f32 0.0, %v1595
    %v1597 = vpop.f32.mrb[0].mxu0
    %v1598 = vpop.f32.mrb[0].mxu0
    %v1599 = vpop.f32.mrb[0].mxu0
    %1600 = vdwg.mxu0
    %v1602 = vsel %vm1089, %v1547, 0
    %v1605 = vsel %vm1557, %v1082, 0
    %1607 = vmatprep.subr.bf16.mxu0 0
    %1608 = vmatpush1.bf16.msra.mxu0 %v1605
    %1609 = vmatprep.subr.bf16.mxu0 0
    %1610 = vmatpush1.bf16.msra.mxu0 0
    %1611 = vmatprep.subr.bf16.mxu0 0
    %1612 = vmatpush1.bf16.msra.mxu0 0
    %1613 = vmatprep.subr.bf16.mxu0 0
    %1614 = vmatpush1.bf16.msra.mxu0 0
    %1615 = vmatprep.subr.bf16.mxu0 0
    %1616 = vmatpush1.bf16.msra.mxu0 0
    %1617 = vmatprep.subr.bf16.mxu0 0
    %1618 = vmatpush1.bf16.msra.mxu0 0
    %1619 = vmatprep.subr.bf16.mxu0 0
    %1620 = vmatpush1.bf16.msra.mxu0 0
    %1621 = vmatprep.subr.bf16.mxu0 0
    %1622 = vmatpush1.bf16.msra.mxu0 0
    %1623 = vmatprep.subr.bf16.mxu0 0
    %1624 = vmatpush1.bf16.msra.mxu0 0
    %1625 = vmatprep.subr.bf16.mxu0 0
    %1626 = vmatpush1.bf16.msra.mxu0 0
    %1627 = vmatprep.subr.bf16.mxu0 0
    %1628 = vmatpush1.bf16.msra.mxu0 0
    %1629 = vmatprep.subr.bf16.mxu0 0
    %1630 = vmatpush1.bf16.msra.mxu0 0
    %1631 = vmatprep.subr.bf16.mxu0 0
    %1632 = vmatpush1.bf16.msra.mxu0 0
    %1633 = vmatprep.subr.bf16.mxu0 0
    %1634 = vmatpush1.bf16.msra.mxu0 0
    %1635 = vmatprep.subr.bf16.mxu0 0
    %1636 = vmatpush1.bf16.msra.mxu0 0
    %1637 = vmatprep.subr.bf16.mxu0 0
    %1638 = vmatpush1.bf16.msra.mxu0 0
    %1639 = vmatprep.mubr.bf16.mxu0 0
    %1640 = vmatmul.mubr.bf16.gmra.mrb[0].mxu0 %v1602
    %v1641 = vpop.f32.mrb[0].mxu0
    %v1642 = vadd.f32 0.0, %v1641
    %v1643 = vpop.f32.mrb[0].mxu0
    %v1644 = vpop.f32.mrb[0].mxu0
    %v1645 = vpop.f32.mrb[0].mxu0
    %1646 = vdwg.mxu0
    %v1648 = vsel %vm1089, %v1548, 0
    %v1651 = vsel %vm1557, %v1083, 0
    %1653 = vmatprep.subr.bf16.mxu0 0
    %1654 = vmatpush1.bf16.msra.mxu0 %v1651
    %1655 = vmatprep.subr.bf16.mxu0 0
    %1656 = vmatpush1.bf16.msra.mxu0 0
    %1657 = vmatprep.subr.bf16.mxu0 0
    %1658 = vmatpush1.bf16.msra.mxu0 0
    %1659 = vmatprep.subr.bf16.mxu0 0
    %1660 = vmatpush1.bf16.msra.mxu0 0
    %1661 = vmatprep.subr.bf16.mxu0 0
    %1662 = vmatpush1.bf16.msra.mxu0 0
    %1663 = vmatprep.subr.bf16.mxu0 0
    %1664 = vmatpush1.bf16.msra.mxu0 0
    %1665 = vmatprep.subr.bf16.mxu0 0
    %1666 = vmatpush1.bf16.msra.mxu0 0
    %1667 = vmatprep.subr.bf16.mxu0 0
    %1668 = vmatpush1.bf16.msra.mxu0 0
    %1669 = vmatprep.subr.bf16.mxu0 0
    %1670 = vmatpush1.bf16.msra.mxu0 0
    %1671 = vmatprep.subr.bf16.mxu0 0
    %1672 = vmatpush1.bf16.msra.mxu0 0
    %1673 = vmatprep.subr.bf16.mxu0 0
    %1674 = vmatpush1.bf16.msra.mxu0 0
    %1675 = vmatprep.subr.bf16.mxu0 0
    %1676 = vmatpush1.bf16.msra.mxu0 0
    %1677 = vmatprep.subr.bf16.mxu0 0
    %1678 = vmatpush1.bf16.msra.mxu0 0
    %1679 = vmatprep.subr.bf16.mxu0 0
    %1680 = vmatpush1.bf16.msra.mxu0 0
    %1681 = vmatprep.subr.bf16.mxu0 0
    %1682 = vmatpush1.bf16.msra.mxu0 0
    %1683 = vmatprep.subr.bf16.mxu0 0
    %1684 = vmatpush1.bf16.msra.mxu0 0
    %1685 = vmatprep.mubr.bf16.mxu0 0
    %1686 = vmatmul.mubr.bf16.gmra.mrb[0].mxu0 %v1648
    %v1687 = vpop.f32.mrb[0].mxu0
    %v1688 = vadd.f32 0.0, %v1687
    %v1689 = vpop.f32.mrb[0].mxu0
    %v1690 = vpop.f32.mrb[0].mxu0
    %v1691 = vpop.f32.mrb[0].mxu0
    %1692 = vdwg.mxu0
    %v1694 = vsel %vm1089, %v1549, 0
    %v1697 = vsel %vm1557, %v1084, 0
    %1699 = vmatprep.subr.bf16.mxu0 0
    %1700 = vmatpush1.bf16.msra.mxu0 %v1697
    %1701 = vmatprep.subr.bf16.mxu0 0
    %1702 = vmatpush1.bf16.msra.mxu0 0
    %1703 = vmatprep.subr.bf16.mxu0 0
    %1704 = vmatpush1.bf16.msra.mxu0 0
    %1705 = vmatprep.subr.bf16.mxu0 0
    %1706 = vmatpush1.bf16.msra.mxu0 0
    %1707 = vmatprep.subr.bf16.mxu0 0
    %1708 = vmatpush1.bf16.msra.mxu0 0
    %1709 = vmatprep.subr.bf16.mxu0 0
    %1710 = vmatpush1.bf16.msra.mxu0 0
    %1711 = vmatprep.subr.bf16.mxu0 0
    %1712 = vmatpush1.bf16.msra.mxu0 0
    %1713 = vmatprep.subr.bf16.mxu0 0
    %1714 = vmatpush1.bf16.msra.mxu0 0
    %1715 = vmatprep.subr.bf16.mxu0 0
    %1716 = vmatpush1.bf16.msra.mxu0 0
    %1717 = vmatprep.subr.bf16.mxu0 0
    %1718 = vmatpush1.bf16.msra.mxu0 0
    %1719 = vmatprep.subr.bf16.mxu0 0
    %1720 = vmatpush1.bf16.msra.mxu0 0
    %1721 = vmatprep.subr.bf16.mxu0 0
    %1722 = vmatpush1.bf16.msra.mxu0 0
    %1723 = vmatprep.subr.bf16.mxu0 0
    %1724 = vmatpush1.bf16.msra.mxu0 0
    %1725 = vmatprep.subr.bf16.mxu0 0
    %1726 = vmatpush1.bf16.msra.mxu0 0
    %1727 = vmatprep.subr.bf16.mxu0 0
    %1728 = vmatpush1.bf16.msra.mxu0 0
    %1729 = vmatprep.subr.bf16.mxu0 0
    %1730 = vmatpush1.bf16.msra.mxu0 0
    %1731 = vmatprep.mubr.bf16.mxu0 0
    %1732 = vmatmul.mubr.bf16.gmra.mrb[0].mxu0 %v1694
    %v1733 = vpop.f32.mrb[0].mxu0
    %v1734 = vadd.f32 0.0, %v1733
    %v1735 = vpop.f32.mrb[0].mxu0
    %v1736 = vpop.f32.mrb[0].mxu0
    %v1737 = vpop.f32.mrb[0].mxu0
    %1738 = vdwg.mxu0
    %v1740 = vsel %vm1089, %v1550, 0
    %v1743 = vsel %vm1557, %v1085, 0
    %1745 = vmatprep.subr.bf16.mxu0 0
    %1746 = vmatpush1.bf16.msra.mxu0 %v1743
    %1747 = vmatprep.subr.bf16.mxu0 0
    %1748 = vmatpush1.bf16.msra.mxu0 0
    %1749 = vmatprep.subr.bf16.mxu0 0
    %1750 = vmatpush1.bf16.msra.mxu0 0
    %1751 = vmatprep.subr.bf16.mxu0 0
    %1752 = vmatpush1.bf16.msra.mxu0 0
    %1753 = vmatprep.subr.bf16.mxu0 0
    %1754 = vmatpush1.bf16.msra.mxu0 0
    %1755 = vmatprep.subr.bf16.mxu0 0
    %1756 = vmatpush1.bf16.msra.mxu0 0
    %1757 = vmatprep.subr.bf16.mxu0 0
    %1758 = vmatpush1.bf16.msra.mxu0 0
    %1759 = vmatprep.subr.bf16.mxu0 0
    %1760 = vmatpush1.bf16.msra.mxu0 0
    %1761 = vmatprep.subr.bf16.mxu0 0
    %1762 = vmatpush1.bf16.msra.mxu0 0
    %1763 = vmatprep.subr.bf16.mxu0 0
    %1764 = vmatpush1.bf16.msra.mxu0 0
    %1765 = vmatprep.subr.bf16.mxu0 0
    %1766 = vmatpush1.bf16.msra.mxu0 0
    %1767 = vmatprep.subr.bf16.mxu0 0
    %1768 = vmatpush1.bf16.msra.mxu0 0
    %1769 = vmatprep.subr.bf16.mxu0 0
    %1770 = vmatpush1.bf16.msra.mxu0 0
    %1771 = vmatprep.subr.bf16.mxu0 0
    %1772 = vmatpush1.bf16.msra.mxu0 0
    %1773 = vmatprep.subr.bf16.mxu0 0
    %1774 = vmatpush1.bf16.msra.mxu0 0
    %1775 = vmatprep.subr.bf16.mxu0 0
    %1776 = vmatpush1.bf16.msra.mxu0 0
    %1777 = vmatprep.mubr.bf16.mxu0 0
    %1778 = vmatmul.mubr.bf16.gmra.mrb[0].mxu0 %v1740
    %v1779 = vpop.f32.mrb[0].mxu0
    %v1780 = vadd.f32 0.0, %v1779
    %v1781 = vpop.f32.mrb[0].mxu0
    %v1782 = vpop.f32.mrb[0].mxu0
    %v1783 = vpop.f32.mrb[0].mxu0
    %1784 = vdwg.mxu0
    %v1786 = vsel %vm1089, %v1551, 0
    %v1789 = vsel %vm1557, %v1086, 0
    %1791 = vmatprep.subr.bf16.mxu0 0
    %1792 = vmatpush1.bf16.msra.mxu0 %v1789
    %1793 = vmatprep.subr.bf16.mxu0 0
    %1794 = vmatpush1.bf16.msra.mxu0 0
    %1795 = vmatprep.subr.bf16.mxu0 0
    %1796 = vmatpush1.bf16.msra.mxu0 0
    %1797 = vmatprep.subr.bf16.mxu0 0
    %1798 = vmatpush1.bf16.msra.mxu0 0
    %1799 = vmatprep.subr.bf16.mxu0 0
    %1800 = vmatpush1.bf16.msra.mxu0 0
    %1801 = vmatprep.subr.bf16.mxu0 0
    %1802 = vmatpush1.bf16.msra.mxu0 0
    %1803 = vmatprep.subr.bf16.mxu0 0
    %1804 = vmatpush1.bf16.msra.mxu0 0
    %1805 = vmatprep.subr.bf16.mxu0 0
    %1806 = vmatpush1.bf16.msra.mxu0 0
    %1807 = vmatprep.subr.bf16.mxu0 0
    %1808 = vmatpush1.bf16.msra.mxu0 0
    %1809 = vmatprep.subr.bf16.mxu0 0
    %1810 = vmatpush1.bf16.msra.mxu0 0
    %1811 = vmatprep.subr.bf16.mxu0 0
    %1812 = vmatpush1.bf16.msra.mxu0 0
    %1813 = vmatprep.subr.bf16.mxu0 0
    %1814 = vmatpush1.bf16.msra.mxu0 0
    %1815 = vmatprep.subr.bf16.mxu0 0
    %1816 = vmatpush1.bf16.msra.mxu0 0
    %1817 = vmatprep.subr.bf16.mxu0 0
    %1818 = vmatpush1.bf16.msra.mxu0 0
    %1819 = vmatprep.subr.bf16.mxu0 0
    %1820 = vmatpush1.bf16.msra.mxu0 0
    %1821 = vmatprep.subr.bf16.mxu0 0
    %1822 = vmatpush1.bf16.msra.mxu0 0
    %1823 = vmatprep.mubr.bf16.mxu0 0
    %1824 = vmatmul.mubr.bf16.gmra.mrb[0].mxu0 %v1786
    %v1825 = vpop.f32.mrb[0].mxu0
    %v1826 = vadd.f32 0.0, %v1825
    %v1827 = vpop.f32.mrb[0].mxu0
    %v1828 = vpop.f32.mrb[0].mxu0
    %v1829 = vpop.f32.mrb[0].mxu0
    %1830 = vdwg.mxu0
    %v1832 = vsel %vm1089, %v1552, 0
    %v1835 = vsel %vm1557, %v1087, 0
    %1837 = vmatprep.subr.bf16.mxu0 0
    %1838 = vmatpush1.bf16.msra.mxu0 %v1835
    %1839 = vmatprep.subr.bf16.mxu0 0
    %1840 = vmatpush1.bf16.msra.mxu0 0
    %1841 = vmatprep.subr.bf16.mxu0 0
    %1842 = vmatpush1.bf16.msra.mxu0 0
    %1843 = vmatprep.subr.bf16.mxu0 0
    %1844 = vmatpush1.bf16.msra.mxu0 0
    %1845 = vmatprep.subr.bf16.mxu0 0
    %1846 = vmatpush1.bf16.msra.mxu0 0
    %1847 = vmatprep.subr.bf16.mxu0 0
    %1848 = vmatpush1.bf16.msra.mxu0 0
    %1849 = vmatprep.subr.bf16.mxu0 0
    %1850 = vmatpush1.bf16.msra.mxu0 0
    %1851 = vmatprep.subr.bf16.mxu0 0
    %1852 = vmatpush1.bf16.msra.mxu0 0
    %1853 = vmatprep.subr.bf16.mxu0 0
    %1854 = vmatpush1.bf16.msra.mxu0 0
    %1855 = vmatprep.subr.bf16.mxu0 0
    %1856 = vmatpush1.bf16.msra.mxu0 0
    %1857 = vmatprep.subr.bf16.mxu0 0
    %1858 = vmatpush1.bf16.msra.mxu0 0
    %1859 = vmatprep.subr.bf16.mxu0 0
    %1860 = vmatpush1.bf16.msra.mxu0 0
    %1861 = vmatprep.subr.bf16.mxu0 0
    %1862 = vmatpush1.bf16.msra.mxu0 0
    %1863 = vmatprep.subr.bf16.mxu0 0
    %1864 = vmatpush1.bf16.msra.mxu0 0
    %1865 = vmatprep.subr.bf16.mxu0 0
    %1866 = vmatpush1.bf16.msra.mxu0 0
    %1867 = vmatprep.subr.bf16.mxu0 0
    %1868 = vmatpush1.bf16.msra.mxu0 0
    %1869 = vmatprep.mubr.bf16.mxu0 0
    %1870 = vmatmul.mubr.bf16.gmra.mrb[0].mxu0 %v1832
    %v1871 = vpop.f32.mrb[0].mxu0
    %v1872 = vadd.f32 0.0, %v1871
    %v1873 = vpop.f32.mrb[0].mxu0
    %v1874 = vpop.f32.mrb[0].mxu0
    %v1875 = vpop.f32.mrb[0].mxu0
    %1876 = vdwg.mxu0
    %v1878 = vsel %vm1089, %v1553, 0
    %v1881 = vsel %vm1557, %v1088, 0
    %1883 = vmatprep.subr.bf16.mxu0 0
    %1884 = vmatpush1.bf16.msra.mxu0 %v1881
    %1885 = vmatprep.subr.bf16.mxu0 0
    %1886 = vmatpush1.bf16.msra.mxu0 0
    %1887 = vmatprep.subr.bf16.mxu0 0
    %1888 = vmatpush1.bf16.msra.mxu0 0
    %1889 = vmatprep.subr.bf16.mxu0 0
    %1890 = vmatpush1.bf16.msra.mxu0 0
    %1891 = vmatprep.subr.bf16.mxu0 0
    %1892 = vmatpush1.bf16.msra.mxu0 0
    %1893 = vmatprep.subr.bf16.mxu0 0
    %1894 = vmatpush1.bf16.msra.mxu0 0
    %1895 = vmatprep.subr.bf16.mxu0 0
    %1896 = vmatpush1.bf16.msra.mxu0 0
    %1897 = vmatprep.subr.bf16.mxu0 0
    %1898 = vmatpush1.bf16.msra.mxu0 0
    %1899 = vmatprep.subr.bf16.mxu0 0
    %1900 = vmatpush1.bf16.msra.mxu0 0
    %1901 = vmatprep.subr.bf16.mxu0 0
    %1902 = vmatpush1.bf16.msra.mxu0 0
    %1903 = vmatprep.subr.bf16.mxu0 0
    %1904 = vmatpush1.bf16.msra.mxu0 0
    %1905 = vmatprep.subr.bf16.mxu0 0
    %1906 = vmatpush1.bf16.msra.mxu0 0
    %1907 = vmatprep.subr.bf16.mxu0 0
    %1908 = vmatpush1.bf16.msra.mxu0 0
    %1909 = vmatprep.subr.bf16.mxu0 0
    %1910 = vmatpush1.bf16.msra.mxu0 0
    %1911 = vmatprep.subr.bf16.mxu0 0
    %1912 = vmatpush1.bf16.msra.mxu0 0
    %1913 = vmatprep.subr.bf16.mxu0 0
    %1914 = vmatpush1.bf16.msra.mxu0 0
    %1915 = vmatprep.mubr.bf16.mxu0 0
    %1916 = vmatmul.mubr.bf16.gmra.mrb[0].mxu0 %v1878
    %v1917 = vpop.f32.mrb[0].mxu0
    %v1918 = vadd.f32 0.0, %v1917
    %v1919 = vpop.f32.mrb[0].mxu0
    %v1920 = vpop.f32.mrb[0].mxu0
    %v1921 = vpop.f32.mrb[0].mxu0
    %1922 = vdwg.mxu0
    %v1923 = vcombine.low %v1596, %v1688
    %v1924 = vcombine.high %v1596, %v1688
    %v1926 = vunpack.c.l.s4 1983009808
    %v1927 = vunpack.c.0.s8 %v1926
    %v1928 = vlaneseq
    %v1929 = vshrl.u32 %v1928, 7
    %v1930 = vsub.s32 %v1927, %v1929
    %v1931 = vrot.slane %v1923, %v1930
    %v1933 = vunpack.c.l.s4 1983009808
    %v1934 = vunpack.c.0.s8 %v1933
    %v1935 = vlaneseq
    %v1936 = vshrl.u32 %v1935, 7
    %v1937 = vsub.s32 %v1934, %v1936
    %v1938 = vrot.slane %v1924, %v1937
    %v1939 = vcombine.low %v1642, %v1734
    %v1940 = vcombine.high %v1642, %v1734
    %v1942 = vunpack.c.l.s4 1983009808
    %v1943 = vunpack.c.0.s8 %v1942
    %v1944 = vlaneseq
    %v1945 = vshrl.u32 %v1944, 7
    %v1946 = vsub.s32 %v1943, %v1945
    %v1947 = vrot.slane %v1939, %v1946
    %v1949 = vunpack.c.l.s4 1983009808
    %v1950 = vunpack.c.0.s8 %v1949
    %v1951 = vlaneseq
    %v1952 = vshrl.u32 %v1951, 7
    %v1953 = vsub.s32 %v1950, %v1952
    %v1954 = vrot.slane %v1940, %v1953
    %v1955 = vcombine.low %v1931, %v1947
    %v1956 = vcombine.high %v1931, %v1947
    %v1958 = vunpack.c.l.s4 1934713408
    %v1959 = vunpack.c.0.s8 %v1958
    %v1960 = vlaneseq
    %v1961 = vshrl.u32 %v1960, 7
    %v1962 = vsub.s32 %v1959, %v1961
    %v1963 = vrot.slane %v1955, %v1962
    %v1965 = vunpack.c.l.s4 1934713408
    %v1966 = vunpack.c.0.s8 %v1965
    %v1967 = vlaneseq
    %v1968 = vshrl.u32 %v1967, 7
    %v1969 = vsub.s32 %v1966, %v1968
    %v1970 = vrot.slane %v1956, %v1969
    %v1971 = vcombine.low %v1938, %v1954
    %v1972 = vcombine.high %v1938, %v1954
    %v1974 = vunpack.c.l.s4 1934713408
    %v1975 = vunpack.c.0.s8 %v1974
    %v1976 = vlaneseq
    %v1977 = vshrl.u32 %v1976, 7
    %v1978 = vsub.s32 %v1975, %v1977
    %v1979 = vrot.slane %v1971, %v1978
    %v1981 = vunpack.c.l.s4 1934713408
    %v1982 = vunpack.c.0.s8 %v1981
    %v1983 = vlaneseq
    %v1984 = vshrl.u32 %v1983, 7
    %v1985 = vsub.s32 %v1982, %v1984
    %v1986 = vrot.slane %v1972, %v1985
    %v1987 = vcombine.high %v1963, 0.0
    %v1988 = vcombine.high %v1970, 0.0
    %v1989 = vcombine.high %v1979, 0.0
    %v1990 = vcombine.high %v1986, 0.0
    %v1991 = vcombine.low %v1780, %v1872
    %v1992 = vcombine.high %v1780, %v1872
    %v1994 = vunpack.c.l.s4 1983009808
    %v1995 = vunpack.c.0.s8 %v1994
    %v1996 = vlaneseq
    %v1997 = vshrl.u32 %v1996, 7
    %v1998 = vsub.s32 %v1995, %v1997
    %v1999 = vrot.slane %v1991, %v1998
    %v2001 = vunpack.c.l.s4 1983009808
    %v2002 = vunpack.c.0.s8 %v2001
    %v2003 = vlaneseq
    %v2004 = vshrl.u32 %v2003, 7
    %v2005 = vsub.s32 %v2002, %v2004
    %v2006 = vrot.slane %v1992, %v2005
    %v2007 = vcombine.low %v1826, %v1918
    %v2008 = vcombine.high %v1826, %v1918
    %v2010 = vunpack.c.l.s4 1983009808
    %v2011 = vunpack.c.0.s8 %v2010
    %v2012 = vlaneseq
    %v2013 = vshrl.u32 %v2012, 7
    %v2014 = vsub.s32 %v2011, %v2013
    %v2015 = vrot.slane %v2007, %v2014
    %v2017 = vunpack.c.l.s4 1983009808
    %v2018 = vunpack.c.0.s8 %v2017
    %v2019 = vlaneseq
    %v2020 = vshrl.u32 %v2019, 7
    %v2021 = vsub.s32 %v2018, %v2020
    %v2022 = vrot.slane %v2008, %v2021
    %v2023 = vcombine.low %v1999, %v2015
    %v2024 = vcombine.high %v1999, %v2015
    %v2026 = vunpack.c.l.s4 1934713408
    %v2027 = vunpack.c.0.s8 %v2026
    %v2028 = vlaneseq
    %v2029 = vshrl.u32 %v2028, 7
    %v2030 = vsub.s32 %v2027, %v2029
    %v2031 = vrot.slane %v2023, %v2030
    %v2033 = vunpack.c.l.s4 1934713408
    %v2034 = vunpack.c.0.s8 %v2033
    %v2035 = vlaneseq
    %v2036 = vshrl.u32 %v2035, 7
    %v2037 = vsub.s32 %v2034, %v2036
    %v2038 = vrot.slane %v2024, %v2037
    %v2039 = vcombine.low %v2006, %v2022
    %v2040 = vcombine.high %v2006, %v2022
    %v2042 = vunpack.c.l.s4 1934713408
    %v2043 = vunpack.c.0.s8 %v2042
    %v2044 = vlaneseq
    %v2045 = vshrl.u32 %v2044, 7
    %v2046 = vsub.s32 %v2043, %v2045
    %v2047 = vrot.slane %v2039, %v2046
    %v2049 = vunpack.c.l.s4 1934713408
    %v2050 = vunpack.c.0.s8 %v2049
    %v2051 = vlaneseq
    %v2052 = vshrl.u32 %v2051, 7
    %v2053 = vsub.s32 %v2050, %v2052
    %v2054 = vrot.slane %v2040, %v2053
    %v2055 = vcombine.high %v2031, 0.0
    %v2056 = vcombine.high %v2038, 0.0
    %v2057 = vcombine.high %v2047, 0.0
    %v2058 = vcombine.high %v2054, 0.0
    %v2059 = vcombine.low %v1963, %v1987
    %v2061 = vunpack.c.l.s4 1983009808
    %v2062 = vunpack.c.0.s8 %v2061
    %v2063 = vlaneseq
    %v2064 = vshrl.u32 %v2063, 7
    %v2065 = vsub.s32 %v2062, %v2064
    %v2066 = vrot.slane %v2059, %v2065
    %v2067 = vcombine.low %v2031, %v2055
    %v2069 = vunpack.c.l.s4 1983009808
    %v2070 = vunpack.c.0.s8 %v2069
    %v2071 = vlaneseq
    %v2072 = vshrl.u32 %v2071, 7
    %v2073 = vsub.s32 %v2070, %v2072
    %v2074 = vrot.slane %v2067, %v2073
    %v2075 = vcombine.low %v1970, %v1988
    %v2077 = vunpack.c.l.s4 1983009808
    %v2078 = vunpack.c.0.s8 %v2077
    %v2079 = vlaneseq
    %v2080 = vshrl.u32 %v2079, 7
    %v2081 = vsub.s32 %v2078, %v2080
    %v2082 = vrot.slane %v2075, %v2081
    %v2083 = vcombine.low %v2038, %v2056
    %v2085 = vunpack.c.l.s4 1983009808
    %v2086 = vunpack.c.0.s8 %v2085
    %v2087 = vlaneseq
    %v2088 = vshrl.u32 %v2087, 7
    %v2089 = vsub.s32 %v2086, %v2088
    %v2090 = vrot.slane %v2083, %v2089
    %v2091 = vcombine.low %v2066, %v2074
    %v2092 = vcombine.high %v2066, %v2074
    %v2094 = vunpack.c.l.s4 1934713408
    %v2095 = vunpack.c.0.s8 %v2094
    %v2096 = vlaneseq
    %v2097 = vshrl.u32 %v2096, 7
    %v2098 = vsub.s32 %v2095, %v2097
    %v2099 = vrot.slane %v2091, %v2098
    %v2101 = vunpack.c.l.s4 1934713408
    %v2102 = vunpack.c.0.s8 %v2101
    %v2103 = vlaneseq
    %v2104 = vshrl.u32 %v2103, 7
    %v2105 = vsub.s32 %v2102, %v2104
    %v2106 = vrot.slane %v2092, %v2105
    %v2107 = vcombine.low %v2082, %v2090
    %v2108 = vcombine.high %v2082, %v2090
    %v2110 = vunpack.c.l.s4 1934713408
    %v2111 = vunpack.c.0.s8 %v2110
    %v2112 = vlaneseq
    %v2113 = vshrl.u32 %v2112, 7
    %v2114 = vsub.s32 %v2111, %v2113
    %v2115 = vrot.slane %v2107, %v2114
    %v2117 = vunpack.c.l.s4 1934713408
    %v2118 = vunpack.c.0.s8 %v2117
    %v2119 = vlaneseq
    %v2120 = vshrl.u32 %v2119, 7
    %v2121 = vsub.s32 %v2118, %v2120
    %v2122 = vrot.slane %v2108, %v2121
    %v2123 = vcombine.low %v2099, %v2115
    %v2124 = vcombine.high %v2099, %v2115
    %v2125 = vcombine.low %v2106, %v2122
    %v2126 = vcombine.high %v2106, %v2122
    %v2127 = vcombine.low %v1979, %v1989
    %v2129 = vunpack.c.l.s4 1983009808
    %v2130 = vunpack.c.0.s8 %v2129
    %v2131 = vlaneseq
    %v2132 = vshrl.u32 %v2131, 7
    %v2133 = vsub.s32 %v2130, %v2132
    %v2134 = vrot.slane %v2127, %v2133
    %v2135 = vcombine.low %v2047, %v2057
    %v2137 = vunpack.c.l.s4 1983009808
    %v2138 = vunpack.c.0.s8 %v2137
    %v2139 = vlaneseq
    %v2140 = vshrl.u32 %v2139, 7
    %v2141 = vsub.s32 %v2138, %v2140
    %v2142 = vrot.slane %v2135, %v2141
    %v2143 = vcombine.low %v1986, %v1990
    %v2145 = vunpack.c.l.s4 1983009808
    %v2146 = vunpack.c.0.s8 %v2145
    %v2147 = vlaneseq
    %v2148 = vshrl.u32 %v2147, 7
    %v2149 = vsub.s32 %v2146, %v2148
    %v2150 = vrot.slane %v2143, %v2149
    %v2151 = vcombine.low %v2054, %v2058
    %v2153 = vunpack.c.l.s4 1983009808
    %v2154 = vunpack.c.0.s8 %v2153
    %v2155 = vlaneseq
    %v2156 = vshrl.u32 %v2155, 7
    %v2157 = vsub.s32 %v2154, %v2156
    %v2158 = vrot.slane %v2151, %v2157
    %v2159 = vcombine.low %v2134, %v2142
    %v2160 = vcombine.high %v2134, %v2142
    %v2162 = vunpack.c.l.s4 1934713408
    %v2163 = vunpack.c.0.s8 %v2162
    %v2164 = vlaneseq
    %v2165 = vshrl.u32 %v2164, 7
    %v2166 = vsub.s32 %v2163, %v2165
    %v2167 = vrot.slane %v2159, %v2166
    %v2169 = vunpack.c.l.s4 1934713408
    %v2170 = vunpack.c.0.s8 %v2169
    %v2171 = vlaneseq
    %v2172 = vshrl.u32 %v2171, 7
    %v2173 = vsub.s32 %v2170, %v2172
    %v2174 = vrot.slane %v2160, %v2173
    %v2175 = vcombine.low %v2150, %v2158
    %v2176 = vcombine.high %v2150, %v2158
    %v2178 = vunpack.c.l.s4 1934713408
    %v2179 = vunpack.c.0.s8 %v2178
    %v2180 = vlaneseq
    %v2181 = vshrl.u32 %v2180, 7
    %v2182 = vsub.s32 %v2179, %v2181
    %v2183 = vrot.slane %v2175, %v2182
    %v2185 = vunpack.c.l.s4 1934713408
    %v2186 = vunpack.c.0.s8 %v2185
    %v2187 = vlaneseq
    %v2188 = vshrl.u32 %v2187, 7
    %v2189 = vsub.s32 %v2186, %v2188
    %v2190 = vrot.slane %v2176, %v2189
    %v2191 = vcombine.low %v2167, %v2183
    %v2192 = vcombine.high %v2167, %v2183
    %v2193 = vcombine.low %v2174, %v2190
    %v2194 = vcombine.high %v2174, %v2190
    %2197 = vrot.lane.b32.xlu0 %v2124, 8
    %v2198 = vpop.permute.xlu0 %2197
    %2199 = vrot.lane.b32.xlu0 %v2192, 8
    %v2200 = vpop.permute.xlu0 %2199
    %2205 = vrot.lane.b32.xlu0 %v2125, 16
    %v2206 = vpop.permute.xlu0 %2205
    %2207 = vrot.lane.b32.xlu0 %v2193, 16
    %v2208 = vpop.permute.xlu0 %2207
    %2213 = vrot.lane.b32.xlu0 %v2126, 24
    %v2214 = vpop.permute.xlu0 %2213
    %2215 = vrot.lane.b32.xlu0 %v2194, 24
    %v2216 = vpop.permute.xlu0 %2215
    %v2219 = vsel %vm1089, %v2123, %v2198
    %v2220 = vsel %vm1089, %v2191, %v2200
    %vm2221 = vcmask 130048
    %v2222 = vsel %vm2221, %v2219, %v2206
    %v2223 = vsel %vm2221, %v2220, %v2208
    %vm2224 = vcmask 195584
    %v2225 = vsel %vm2224, %v2222, %v2214
    %v2226 = vsel %vm2224, %v2223, %v2216
    %v2227 = vpack.c.bf16 %v2226, %v2225
    %v2228 = vld [vmem:[%s3] sm:$0xf]
    %v2229 = vld [vmem:[%s3 + $0x4] sm:$0xf]
    %v2230 = vld [vmem:[%s3 + $0x8] sm:$0xf]
    %v2231 = vld [vmem:[%s3 + $0xc] sm:$0xf]
    %v2232 = vld [vmem:[%s4] sm:$0x1]
    %v2234 = vlaneseq
    %v2235 = vshrl.u32 %v2234, 7
    %v2236 = vsub.s32 0, %v2235
    %v2237 = vrot.slane %v2232, %v2236
    %v2243 = vunpack.c.l.b16 %v2228
    %v2244 = vunpack.c.l.b16 %v2229
    %v2245 = vunpack.c.l.b16 %v2230
    %v2246 = vunpack.c.l.b16 %v2231
    %v2247 = vpack.c.b16 %v2244, %v2243
    %v2248 = vpack.c.b16 %v2246, %v2245
    %v2252 = vsel %vm136, %v2227, 0
    %2254 = vmatprep.subr.bf16.mxu0 0
    %2255 = vmatpush1.bf16.msra.mxu0 %v2247
    %2256 = vmatprep.subr.bf16.mxu0 0
    %2257 = vmatpush1.bf16.msra.mxu0 %v2248
    %2258 = vmatprep.subr.bf16.mxu0 0
    %2259 = vmatpush1.bf16.msra.mxu0 0
    %2260 = vmatprep.subr.bf16.mxu0 0
    %2261 = vmatpush1.bf16.msra.mxu0 0
    %2262 = vmatprep.subr.bf16.mxu0 0
    %2263 = vmatpush1.bf16.msra.mxu0 0
    %2264 = vmatprep.subr.bf16.mxu0 0
    %2265 = vmatpush1.bf16.msra.mxu0 0
    %2266 = vmatprep.subr.bf16.mxu0 0
    %2267 = vmatpush1.bf16.msra.mxu0 0
    %2268 = vmatprep.subr.bf16.mxu0 0
    %2269 = vmatpush1.bf16.msra.mxu0 0
    %2270 = vmatprep.subr.bf16.mxu0 0
    %2271 = vmatpush1.bf16.msra.mxu0 0
    %2272 = vmatprep.subr.bf16.mxu0 0
    %2273 = vmatpush1.bf16.msra.mxu0 0
    %2274 = vmatprep.subr.bf16.mxu0 0
    %2275 = vmatpush1.bf16.msra.mxu0 0
    %2276 = vmatprep.subr.bf16.mxu0 0
    %2277 = vmatpush1.bf16.msra.mxu0 0
    %2278 = vmatprep.subr.bf16.mxu0 0
    %2279 = vmatpush1.bf16.msra.mxu0 0
    %2280 = vmatprep.subr.bf16.mxu0 0
    %2281 = vmatpush1.bf16.msra.mxu0 0
    %2282 = vmatprep.subr.bf16.mxu0 0
    %2283 = vmatpush1.bf16.msra.mxu0 0
    %2284 = vmatprep.subr.bf16.mxu0 0
    %2285 = vmatpush1.bf16.msra.mxu0 0
    %2286 = vmatprep.mubr.bf16.mxu0 0
    %2287 = vmatmul.mubr.bf16.gmra.mrb[0].mxu0 %v2252
    %v2288 = vpop.f32.mrb[0].mxu0
    %v2289 = vadd.f32 %v2237, %v2288
    %v2290 = vpop.f32.mrb[0].mxu0
    %v2291 = vpop.f32.mrb[0].mxu0
    %v2292 = vadd.f32 %v2237, %v2291
    %v2293 = vpop.f32.mrb[0].mxu0
    %2294 = vdwg.mxu0
    %v2297 = vcombine.high %v2289, %v2289
    %v2299 = vunpack.c.l.s4 1983009808
    %v2300 = vunpack.c.0.s8 %v2299
    %v2301 = vlaneseq
    %v2302 = vshrl.u32 %v2301, 7
    %v2303 = vsub.s32 %v2300, %v2302
    %v2304 = vrot.slane %v2289, %v2303
    %v2306 = vunpack.c.l.s4 1983009808
    %v2307 = vunpack.c.0.s8 %v2306
    %v2308 = vlaneseq
    %v2309 = vshrl.u32 %v2308, 7
    %v2310 = vsub.s32 %v2307, %v2309
    %v2311 = vrot.slane %v2297, %v2310
    %v2312 = vcombine.high %v2304, %v2304
    %v2313 = vcombine.high %v2311, %v2311
    %v2314 = vcombine.high %v2292, %v2292
    %v2316 = vunpack.c.l.s4 1983009808
    %v2317 = vunpack.c.0.s8 %v2316
    %v2318 = vlaneseq
    %v2319 = vshrl.u32 %v2318, 7
    %v2320 = vsub.s32 %v2317, %v2319
    %v2321 = vrot.slane %v2292, %v2320
    %v2323 = vunpack.c.l.s4 1983009808
    %v2324 = vunpack.c.0.s8 %v2323
    %v2325 = vlaneseq
    %v2326 = vshrl.u32 %v2325, 7
    %v2327 = vsub.s32 %v2324, %v2326
    %v2328 = vrot.slane %v2314, %v2327
    %v2329 = vcombine.high %v2321, %v2321
    %v2330 = vcombine.high %v2328, %v2328
    %v2339 = vadd.f32 %v60, %v2304
    %v2340 = vadd.f32 %v61, %v2312
    %v2341 = vadd.f32 %v62, %v2311
    %v2342 = vadd.f32 %v63, %v2313
    %v2343 = vadd.f32 %v64, %v2321
    %v2344 = vadd.f32 %v65, %v2329
    %v2345 = vadd.f32 %v66, %v2328
    %v2346 = vadd.f32 %v67, %v2330
    %v2347 = vld [vmem:[%s9] sm:$0x1]
    %v2348 = vld [vmem:[%s10] sm:$0x1]
    %v2357 = vcombine.low %v2339, %v2340
    %v2358 = vcombine.low %v2341, %v2342
    %v2360 = vunpack.c.l.s4 1983009808
    %v2361 = vunpack.c.0.s8 %v2360
    %v2362 = vlaneseq
    %v2363 = vshrl.u32 %v2362, 7
    %v2364 = vsub.s32 %v2361, %v2363
    %v2365 = vrot.slane %v2357, %v2364
    %v2367 = vunpack.c.l.s4 1983009808
    %v2368 = vunpack.c.0.s8 %v2367
    %v2369 = vlaneseq
    %v2370 = vshrl.u32 %v2369, 7
    %v2371 = vsub.s32 %v2368, %v2370
    %v2372 = vrot.slane %v2358, %v2371
    %v2373 = vcombine.low %v2365, %v2372
    %v2374 = vcombine.low %v2343, %v2344
    %v2375 = vcombine.low %v2345, %v2346
    %v2377 = vunpack.c.l.s4 1983009808
    %v2378 = vunpack.c.0.s8 %v2377
    %v2379 = vlaneseq
    %v2380 = vshrl.u32 %v2379, 7
    %v2381 = vsub.s32 %v2378, %v2380
    %v2382 = vrot.slane %v2374, %v2381
    %v2384 = vunpack.c.l.s4 1983009808
    %v2385 = vunpack.c.0.s8 %v2384
    %v2386 = vlaneseq
    %v2387 = vshrl.u32 %v2386, 7
    %v2388 = vsub.s32 %v2385, %v2387
    %v2389 = vrot.slane %v2375, %v2388
    %v2390 = vcombine.low %v2382, %v2389
    %v2393 = vsel %vm136, %v2373, 0.0
    %2394 = vadd.xlane.f32.xlu0 %v2393
    %v2395 = vpop.xlane.xlu0 %2394
    %v2396 = vsel %vm136, %v2390, 0.0
    %2397 = vadd.xlane.f32.xlu0 %v2396
    %v2398 = vpop.xlane.xlu0 %2397
    %v2399 = vrcp.pop 32.0
    %v2400 = vmul.f32 %v2395, %v2399
    %v2401 = vmul.f32 %v2398, %v2399
    %v2405 = vunpack.c.l.s4 269488144
    %v2406 = vunpack.c.0.s8 %v2405
    %v2407 = vlaneseq
    %v2408 = vshrl.u32 %v2407, 7
    %v2409 = vsub.s32 %v2406, %v2408
    %v2410 = vrot.slane %v2400, %v2409
    %v2412 = vunpack.c.l.s4 842150450
    %v2413 = vunpack.c.0.s8 %v2412
    %v2414 = vlaneseq
    %v2415 = vshrl.u32 %v2414, 7
    %v2416 = vsub.s32 %v2413, %v2415
    %v2417 = vrot.slane %v2400, %v2416
    %v2419 = vunpack.c.l.s4 1414812756
    %v2420 = vunpack.c.0.s8 %v2419
    %v2421 = vlaneseq
    %v2422 = vshrl.u32 %v2421, 7
    %v2423 = vsub.s32 %v2420, %v2422
    %v2424 = vrot.slane %v2400, %v2423
    %v2426 = vunpack.c.l.s4 1987475062
    %v2427 = vunpack.c.0.s8 %v2426
    %v2428 = vlaneseq
    %v2429 = vshrl.u32 %v2428, 7
    %v2430 = vsub.s32 %v2427, %v2429
    %v2431 = vrot.slane %v2400, %v2430
    %v2433 = vunpack.c.l.s4 269488144
    %v2434 = vunpack.c.0.s8 %v2433
    %v2435 = vlaneseq
    %v2436 = vshrl.u32 %v2435, 7
    %v2437 = vsub.s32 %v2434, %v2436
    %v2438 = vrot.slane %v2401, %v2437
    %v2440 = vunpack.c.l.s4 842150450
    %v2441 = vunpack.c.0.s8 %v2440
    %v2442 = vlaneseq
    %v2443 = vshrl.u32 %v2442, 7
    %v2444 = vsub.s32 %v2441, %v2443
    %v2445 = vrot.slane %v2401, %v2444
    %v2447 = vunpack.c.l.s4 1414812756
    %v2448 = vunpack.c.0.s8 %v2447
    %v2449 = vlaneseq
    %v2450 = vshrl.u32 %v2449, 7
    %v2451 = vsub.s32 %v2448, %v2450
    %v2452 = vrot.slane %v2401, %v2451
    %v2454 = vunpack.c.l.s4 1987475062
    %v2455 = vunpack.c.0.s8 %v2454
    %v2456 = vlaneseq
    %v2457 = vshrl.u32 %v2456, 7
    %v2458 = vsub.s32 %v2455, %v2457
    %v2459 = vrot.slane %v2401, %v2458
    %v2468 = vsub.f32 %v2339, %v2410
    %v2469 = vsub.f32 %v2340, %v2417
    %v2470 = vsub.f32 %v2341, %v2424
    %v2471 = vsub.f32 %v2342, %v2431
    %v2472 = vsub.f32 %v2343, %v2438
    %v2473 = vsub.f32 %v2344, %v2445
    %v2474 = vsub.f32 %v2345, %v2452
    %v2475 = vsub.f32 %v2346, %v2459
    %v2476 = vmul.f32 %v2468, %v2468
    %v2477 = vmul.f32 %v2469, %v2469
    %v2478 = vmul.f32 %v2470, %v2470
    %v2479 = vmul.f32 %v2471, %v2471
    %v2480 = vmul.f32 %v2472, %v2472
    %v2481 = vmul.f32 %v2473, %v2473
    %v2482 = vmul.f32 %v2474, %v2474
    %v2483 = vmul.f32 %v2475, %v2475
    %v2492 = vcombine.low %v2476, %v2477
    %v2493 = vcombine.low %v2478, %v2479
    %v2495 = vunpack.c.l.s4 1983009808
    %v2496 = vunpack.c.0.s8 %v2495
    %v2497 = vlaneseq
    %v2498 = vshrl.u32 %v2497, 7
    %v2499 = vsub.s32 %v2496, %v2498
    %v2500 = vrot.slane %v2492, %v2499
    %v2502 = vunpack.c.l.s4 1983009808
    %v2503 = vunpack.c.0.s8 %v2502
    %v2504 = vlaneseq
    %v2505 = vshrl.u32 %v2504, 7
    %v2506 = vsub.s32 %v2503, %v2505
    %v2507 = vrot.slane %v2493, %v2506
    %v2508 = vcombine.low %v2500, %v2507
    %v2509 = vcombine.low %v2480, %v2481
    %v2510 = vcombine.low %v2482, %v2483
    %v2512 = vunpack.c.l.s4 1983009808
    %v2513 = vunpack.c.0.s8 %v2512
    %v2514 = vlaneseq
    %v2515 = vshrl.u32 %v2514, 7
    %v2516 = vsub.s32 %v2513, %v2515
    %v2517 = vrot.slane %v2509, %v2516
    %v2519 = vunpack.c.l.s4 1983009808
    %v2520 = vunpack.c.0.s8 %v2519
    %v2521 = vlaneseq
    %v2522 = vshrl.u32 %v2521, 7
    %v2523 = vsub.s32 %v2520, %v2522
    %v2524 = vrot.slane %v2510, %v2523
    %v2525 = vcombine.low %v2517, %v2524
    %v2528 = vsel %vm136, %v2508, 0.0
    %2529 = vadd.xlane.f32.xlu0 %v2528
    %v2530 = vpop.xlane.xlu0 %2529
    %v2531 = vsel %vm136, %v2525, 0.0
    %2532 = vadd.xlane.f32.xlu0 %v2531
    %v2533 = vpop.xlane.xlu0 %2532
    %v2534 = vmul.f32 %v2530, %v2399
    %v2535 = vmul.f32 %v2533, %v2399
    %v2536 = vadd.f32 %v2534, 1e-05
    %v2537 = vadd.f32 %v2535, 1e-05
    %v2538 = vrsqrt.pop %v2536
    %v2539 = vrsqrt.pop %v2537
    %v2543 = vunpack.c.l.s4 269488144
    %v2544 = vunpack.c.0.s8 %v2543
    %v2545 = vlaneseq
    %v2546 = vshrl.u32 %v2545, 7
    %v2547 = vsub.s32 %v2544, %v2546
    %v2548 = vrot.slane %v2538, %v2547
    %v2550 = vunpack.c.l.s4 842150450
    %v2551 = vunpack.c.0.s8 %v2550
    %v2552 = vlaneseq
    %v2553 = vshrl.u32 %v2552, 7
    %v2554 = vsub.s32 %v2551, %v2553
    %v2555 = vrot.slane %v2538, %v2554
    %v2557 = vunpack.c.l.s4 1414812756
    %v2558 = vunpack.c.0.s8 %v2557
    %v2559 = vlaneseq
    %v2560 = vshrl.u32 %v2559, 7
    %v2561 = vsub.s32 %v2558, %v2560
    %v2562 = vrot.slane %v2538, %v2561
    %v2564 = vunpack.c.l.s4 1987475062
    %v2565 = vunpack.c.0.s8 %v2564
    %v2566 = vlaneseq
    %v2567 = vshrl.u32 %v2566, 7
    %v2568 = vsub.s32 %v2565, %v2567
    %v2569 = vrot.slane %v2538, %v2568
    %v2571 = vunpack.c.l.s4 269488144
    %v2572 = vunpack.c.0.s8 %v2571
    %v2573 = vlaneseq
    %v2574 = vshrl.u32 %v2573, 7
    %v2575 = vsub.s32 %v2572, %v2574
    %v2576 = vrot.slane %v2539, %v2575
    %v2578 = vunpack.c.l.s4 842150450
    %v2579 = vunpack.c.0.s8 %v2578
    %v2580 = vlaneseq
    %v2581 = vshrl.u32 %v2580, 7
    %v2582 = vsub.s32 %v2579, %v2581
    %v2583 = vrot.slane %v2539, %v2582
    %v2585 = vunpack.c.l.s4 1414812756
    %v2586 = vunpack.c.0.s8 %v2585
    %v2587 = vlaneseq
    %v2588 = vshrl.u32 %v2587, 7
    %v2589 = vsub.s32 %v2586, %v2588
    %v2590 = vrot.slane %v2539, %v2589
    %v2592 = vunpack.c.l.s4 1987475062
    %v2593 = vunpack.c.0.s8 %v2592
    %v2594 = vlaneseq
    %v2595 = vshrl.u32 %v2594, 7
    %v2596 = vsub.s32 %v2593, %v2595
    %v2597 = vrot.slane %v2539, %v2596
    %v2606 = vmul.f32 %v2468, %v2548
    %v2607 = vmul.f32 %v2469, %v2555
    %v2608 = vmul.f32 %v2470, %v2562
    %v2609 = vmul.f32 %v2471, %v2569
    %v2610 = vmul.f32 %v2472, %v2576
    %v2611 = vmul.f32 %v2473, %v2583
    %v2612 = vmul.f32 %v2474, %v2590
    %v2613 = vmul.f32 %v2475, %v2597
    %v2615 = vlaneseq
    %v2616 = vshrl.u32 %v2615, 7
    %v2617 = vsub.s32 0, %v2616
    %v2618 = vrot.slane %v2347, %v2617
    %v2619 = vcombine.high %v2618, %v2618
    %v2621 = vunpack.c.l.s4 1983009808
    %v2622 = vunpack.c.0.s8 %v2621
    %v2623 = vlaneseq
    %v2624 = vshrl.u32 %v2623, 7
    %v2625 = vsub.s32 %v2622, %v2624
    %v2626 = vrot.slane %v2618, %v2625
    %v2628 = vunpack.c.l.s4 1983009808
    %v2629 = vunpack.c.0.s8 %v2628
    %v2630 = vlaneseq
    %v2631 = vshrl.u32 %v2630, 7
    %v2632 = vsub.s32 %v2629, %v2631
    %v2633 = vrot.slane %v2619, %v2632
    %v2634 = vcombine.high %v2626, %v2626
    %v2635 = vcombine.high %v2633, %v2633
    %v2640 = vmul.f32 %v2606, %v2626
    %v2641 = vmul.f32 %v2607, %v2634
    %v2642 = vmul.f32 %v2608, %v2633
    %v2643 = vmul.f32 %v2609, %v2635
    %v2644 = vmul.f32 %v2610, %v2626
    %v2645 = vmul.f32 %v2611, %v2634
    %v2646 = vmul.f32 %v2612, %v2633
    %v2647 = vmul.f32 %v2613, %v2635
    %v2649 = vlaneseq
    %v2650 = vshrl.u32 %v2649, 7
    %v2651 = vsub.s32 0, %v2650
    %v2652 = vrot.slane %v2348, %v2651
    %v2653 = vcombine.high %v2652, %v2652
    %v2655 = vunpack.c.l.s4 1983009808
    %v2656 = vunpack.c.0.s8 %v2655
    %v2657 = vlaneseq
    %v2658 = vshrl.u32 %v2657, 7
    %v2659 = vsub.s32 %v2656, %v2658
    %v2660 = vrot.slane %v2652, %v2659
    %v2662 = vunpack.c.l.s4 1983009808
    %v2663 = vunpack.c.0.s8 %v2662
    %v2664 = vlaneseq
    %v2665 = vshrl.u32 %v2664, 7
    %v2666 = vsub.s32 %v2663, %v2665
    %v2667 = vrot.slane %v2653, %v2666
    %v2668 = vcombine.high %v2660, %v2660
    %v2669 = vcombine.high %v2667, %v2667
    %v2674 = vadd.f32 %v2640, %v2660
    %v2675 = vadd.f32 %v2641, %v2668
    %v2676 = vadd.f32 %v2642, %v2667
    %v2677 = vadd.f32 %v2643, %v2669
    %v2678 = vadd.f32 %v2644, %v2660
    %v2679 = vadd.f32 %v2645, %v2668
    %v2680 = vadd.f32 %v2646, %v2667
    %v2681 = vadd.f32 %v2647, %v2669
    %v2690 = vcombine.low %v2674, %v2675
    %v2691 = vcombine.low %v2676, %v2677
    %v2693 = vunpack.c.l.s4 1983009808
    %v2694 = vunpack.c.0.s8 %v2693
    %v2695 = vlaneseq
    %v2696 = vshrl.u32 %v2695, 7
    %v2697 = vsub.s32 %v2694, %v2696
    %v2698 = vrot.slane %v2690, %v2697
    %v2700 = vunpack.c.l.s4 1983009808
    %v2701 = vunpack.c.0.s8 %v2700
    %v2702 = vlaneseq
    %v2703 = vshrl.u32 %v2702, 7
    %v2704 = vsub.s32 %v2701, %v2703
    %v2705 = vrot.slane %v2691, %v2704
    %v2706 = vcombine.low %v2698, %v2705
    %v2707 = vcombine.low %v2678, %v2679
    %v2708 = vcombine.low %v2680, %v2681
    %v2710 = vunpack.c.l.s4 1983009808
    %v2711 = vunpack.c.0.s8 %v2710
    %v2712 = vlaneseq
    %v2713 = vshrl.u32 %v2712, 7
    %v2714 = vsub.s32 %v2711, %v2713
    %v2715 = vrot.slane %v2707, %v2714
    %v2717 = vunpack.c.l.s4 1983009808
    %v2718 = vunpack.c.0.s8 %v2717
    %v2719 = vlaneseq
    %v2720 = vshrl.u32 %v2719, 7
    %v2721 = vsub.s32 %v2718, %v2720
    %v2722 = vrot.slane %v2708, %v2721
    %v2723 = vcombine.low %v2715, %v2722
    %v2726 = vpack.c.bf16 %v2723, %v2706
    %v2727 = vld [vmem:[#allocation2] sm:$0xf]
    %v2728 = vld [vmem:[#allocation2 + $0x4] sm:$0xf]
    %v2729 = vld [vmem:[#allocation2 + $0x8] sm:$0xf]
    %v2730 = vld [vmem:[#allocation2 + $0xc] sm:$0xf]
    %v2731 = vld [vmem:[%s6] sm:$0x1]
    %v2733 = vlaneseq
    %v2734 = vshrl.u32 %v2733, 7
    %v2735 = vsub.s32 0, %v2734
    %v2736 = vrot.slane %v2731, %v2735
    %v2742 = vunpack.c.l.b16 %v2727
    %v2743 = vunpack.c.l.b16 %v2728
    %v2744 = vunpack.c.l.b16 %v2729
    %v2745 = vunpack.c.l.b16 %v2730
    %v2746 = vpack.c.b16 %v2743, %v2742
    %v2747 = vpack.c.b16 %v2745, %v2744
    %v2751 = vsel %vm136, %v2726, 0
    %2753 = vmatprep.subr.bf16.mxu0 0
    %2754 = vmatpush1.bf16.msra.mxu0 %v2746
    %2755 = vmatprep.subr.bf16.mxu0 0
    %2756 = vmatpush1.bf16.msra.mxu0 %v2747
    %2757 = vmatprep.subr.bf16.mxu0 0
    %2758 = vmatpush1.bf16.msra.mxu0 0
    %2759 = vmatprep.subr.bf16.mxu0 0
    %2760 = vmatpush1.bf16.msra.mxu0 0
    %2761 = vmatprep.subr.bf16.mxu0 0
    %2762 = vmatpush1.bf16.msra.mxu0 0
    %2763 = vmatprep.subr.bf16.mxu0 0
    %2764 = vmatpush1.bf16.msra.mxu0 0
    %2765 = vmatprep.subr.bf16.mxu0 0
    %2766 = vmatpush1.bf16.msra.mxu0 0
    %2767 = vmatprep.subr.bf16.mxu0 0
    %2768 = vmatpush1.bf16.msra.mxu0 0
    %2769 = vmatprep.subr.bf16.mxu0 0
    %2770 = vmatpush1.bf16.msra.mxu0 0
    %2771 = vmatprep.subr.bf16.mxu0 0
    %2772 = vmatpush1.bf16.msra.mxu0 0
    %2773 = vmatprep.subr.bf16.mxu0 0
    %2774 = vmatpush1.bf16.msra.mxu0 0
    %2775 = vmatprep.subr.bf16.mxu0 0
    %2776 = vmatpush1.bf16.msra.mxu0 0
    %2777 = vmatprep.subr.bf16.mxu0 0
    %2778 = vmatpush1.bf16.msra.mxu0 0
    %2779 = vmatprep.subr.bf16.mxu0 0
    %2780 = vmatpush1.bf16.msra.mxu0 0
    %2781 = vmatprep.subr.bf16.mxu0 0
    %2782 = vmatpush1.bf16.msra.mxu0 0
    %2783 = vmatprep.subr.bf16.mxu0 0
    %2784 = vmatpush1.bf16.msra.mxu0 0
    %2785 = vmatprep.mubr.bf16.mxu0 0
    %2786 = vmatmul.mubr.bf16.gmra.mrb[0].mxu0 %v2751
    %v2787 = vpop.f32.mrb[0].mxu0
    %v2788 = vadd.f32 %v2736, %v2787
    %v2789 = vpop.f32.mrb[0].mxu0
    %v2790 = vpop.f32.mrb[0].mxu0
    %v2791 = vadd.f32 %v2736, %v2790
    %v2792 = vpop.f32.mrb[0].mxu0
    %2793 = vdwg.mxu0
    %v2794 = vmax.f32 %v2788, 0.0
    %v2795 = vmax.f32 %v2791, 0.0
    %v2796 = vpack.c.bf16 %v2795, %v2794
    %v2797 = vld [vmem:[%s7] sm:$0xf]
    %v2798 = vld [vmem:[%s7 + $0x4] sm:$0xf]
    %v2799 = vld [vmem:[%s7 + $0x8] sm:$0xf]
    %v2800 = vld [vmem:[%s7 + $0xc] sm:$0xf]
    %v2801 = vld [vmem:[%s7 + $0x10] sm:$0xf]
    %v2802 = vld [vmem:[%s7 + $0x14] sm:$0xf]
    %v2803 = vld [vmem:[%s7 + $0x18] sm:$0xf]
    %v2804 = vld [vmem:[%s7 + $0x1c] sm:$0xf]
    %v2805 = vld [vmem:[%s8] sm:$0x1]
    %v2807 = vlaneseq
    %v2808 = vshrl.u32 %v2807, 7
    %v2809 = vsub.s32 0, %v2808
    %v2810 = vrot.slane %v2805, %v2809
    %v2820 = vunpack.c.l.b16 %v2797
    %v2821 = vunpack.c.l.b16 %v2798
    %v2822 = vunpack.c.l.b16 %v2799
    %v2823 = vunpack.c.l.b16 %v2800
    %v2824 = vunpack.c.l.b16 %v2801
    %v2825 = vunpack.c.l.b16 %v2802
    %v2826 = vunpack.c.l.b16 %v2803
    %v2827 = vunpack.c.l.b16 %v2804
    %v2828 = vpack.c.b16 %v2821, %v2820
    %v2829 = vpack.c.b16 %v2823, %v2822
    %v2830 = vpack.c.b16 %v2825, %v2824
    %v2831 = vpack.c.b16 %v2827, %v2826
    %vm2836 = vcmask 523264
    %v2838 = vsel %vm2836, %v2796, 0
    %2840 = vmatprep.subr.bf16.mxu0 0
    %2841 = vmatpush1.bf16.msra.mxu0 %v2828
    %2842 = vmatprep.subr.bf16.mxu0 0
    %2843 = vmatpush1.bf16.msra.mxu0 %v2829
    %2844 = vmatprep.subr.bf16.mxu0 0
    %2845 = vmatpush1.bf16.msra.mxu0 %v2830
    %2846 = vmatprep.subr.bf16.mxu0 0
    %2847 = vmatpush1.bf16.msra.mxu0 %v2831
    %2848 = vmatprep.subr.bf16.mxu0 0
    %2849 = vmatpush1.bf16.msra.mxu0 0
    %2850 = vmatprep.subr.bf16.mxu0 0
    %2851 = vmatpush1.bf16.msra.mxu0 0
    %2852 = vmatprep.subr.bf16.mxu0 0
    %2853 = vmatpush1.bf16.msra.mxu0 0
    %2854 = vmatprep.subr.bf16.mxu0 0
    %2855 = vmatpush1.bf16.msra.mxu0 0
    %2856 = vmatprep.subr.bf16.mxu0 0
    %2857 = vmatpush1.bf16.msra.mxu0 0
    %2858 = vmatprep.subr.bf16.mxu0 0
    %2859 = vmatpush1.bf16.msra.mxu0 0
    %2860 = vmatprep.subr.bf16.mxu0 0
    %2861 = vmatpush1.bf16.msra.mxu0 0
    %2862 = vmatprep.subr.bf16.mxu0 0
    %2863 = vmatpush1.bf16.msra.mxu0 0
    %2864 = vmatprep.subr.bf16.mxu0 0
    %2865 = vmatpush1.bf16.msra.mxu0 0
    %2866 = vmatprep.subr.bf16.mxu0 0
    %2867 = vmatpush1.bf16.msra.mxu0 0
    %2868 = vmatprep.subr.bf16.mxu0 0
    %2869 = vmatpush1.bf16.msra.mxu0 0
    %2870 = vmatprep.subr.bf16.mxu0 0
    %2871 = vmatpush1.bf16.msra.mxu0 0
    %2872 = vmatprep.mubr.bf16.mxu0 0
    %2873 = vmatmul.mubr.bf16.gmra.mrb[0].mxu0 %v2838
    %v2874 = vpop.f32.mrb[0].mxu0
    %v2875 = vadd.f32 %v2810, %v2874
    %v2876 = vpop.f32.mrb[0].mxu0
    %v2877 = vpop.f32.mrb[0].mxu0
    %v2878 = vadd.f32 %v2810, %v2877
    %v2879 = vpop.f32.mrb[0].mxu0
    %2880 = vdwg.mxu0
    %v2883 = vcombine.high %v2875, %v2875
    %v2885 = vunpack.c.l.s4 1983009808
    %v2886 = vunpack.c.0.s8 %v2885
    %v2887 = vlaneseq
    %v2888 = vshrl.u32 %v2887, 7
    %v2889 = vsub.s32 %v2886, %v2888
    %v2890 = vrot.slane %v2875, %v2889
    %v2892 = vunpack.c.l.s4 1983009808
    %v2893 = vunpack.c.0.s8 %v2892
    %v2894 = vlaneseq
    %v2895 = vshrl.u32 %v2894, 7
    %v2896 = vsub.s32 %v2893, %v2895
    %v2897 = vrot.slane %v2883, %v2896
    %v2898 = vcombine.high %v2890, %v2890
    %v2899 = vcombine.high %v2897, %v2897
    %v2900 = vcombine.high %v2878, %v2878
    %v2902 = vunpack.c.l.s4 1983009808
    %v2903 = vunpack.c.0.s8 %v2902
    %v2904 = vlaneseq
    %v2905 = vshrl.u32 %v2904, 7
    %v2906 = vsub.s32 %v2903, %v2905
    %v2907 = vrot.slane %v2878, %v2906
    %v2909 = vunpack.c.l.s4 1983009808
    %v2910 = vunpack.c.0.s8 %v2909
    %v2911 = vlaneseq
    %v2912 = vshrl.u32 %v2911, 7
    %v2913 = vsub.s32 %v2910, %v2912
    %v2914 = vrot.slane %v2900, %v2913
    %v2915 = vcombine.high %v2907, %v2907
    %v2916 = vcombine.high %v2914, %v2914
    %v2925 = vadd.f32 %v2674, %v2890
    %v2926 = vadd.f32 %v2675, %v2898
    %v2927 = vadd.f32 %v2676, %v2897
    %v2928 = vadd.f32 %v2677, %v2899
    %v2929 = vadd.f32 %v2678, %v2907
    %v2930 = vadd.f32 %v2679, %v2915
    %v2931 = vadd.f32 %v2680, %v2914
    %v2932 = vadd.f32 %v2681, %v2916
    %v2933 = vld [vmem:[%s11] sm:$0x1]
    %v2934 = vld [vmem:[%s12] sm:$0x1]
    %v2943 = vcombine.low %v2925, %v2926
    %v2944 = vcombine.low %v2927, %v2928
    %v2946 = vunpack.c.l.s4 1983009808
    %v2947 = vunpack.c.0.s8 %v2946
    %v2948 = vlaneseq
    %v2949 = vshrl.u32 %v2948, 7
    %v2950 = vsub.s32 %v2947, %v2949
    %v2951 = vrot.slane %v2943, %v2950
    %v2953 = vunpack.c.l.s4 1983009808
    %v2954 = vunpack.c.0.s8 %v2953
    %v2955 = vlaneseq
    %v2956 = vshrl.u32 %v2955, 7
    %v2957 = vsub.s32 %v2954, %v2956
    %v2958 = vrot.slane %v2944, %v2957
    %v2959 = vcombine.low %v2951, %v2958
    %v2960 = vcombine.low %v2929, %v2930
    %v2961 = vcombine.low %v2931, %v2932
    %v2963 = vunpack.c.l.s4 1983009808
    %v2964 = vunpack.c.0.s8 %v2963
    %v2965 = vlaneseq
    %v2966 = vshrl.u32 %v2965, 7
    %v2967 = vsub.s32 %v2964, %v2966
    %v2968 = vrot.slane %v2960, %v2967
    %v2970 = vunpack.c.l.s4 1983009808
    %v2971 = vunpack.c.0.s8 %v2970
    %v2972 = vlaneseq
    %v2973 = vshrl.u32 %v2972, 7
    %v2974 = vsub.s32 %v2971, %v2973
    %v2975 = vrot.slane %v2961, %v2974
    %v2976 = vcombine.low %v2968, %v2975
    %v2979 = vsel %vm136, %v2959, 0.0
    %2980 = vadd.xlane.f32.xlu0 %v2979
    %v2981 = vpop.xlane.xlu0 %2980
    %v2982 = vsel %vm136, %v2976, 0.0
    %2983 = vadd.xlane.f32.xlu0 %v2982
    %v2984 = vpop.xlane.xlu0 %2983
    %v2985 = vmul.f32 %v2981, %v2399
    %v2986 = vmul.f32 %v2984, %v2399
    %v2990 = vunpack.c.l.s4 269488144
    %v2991 = vunpack.c.0.s8 %v2990
    %v2992 = vlaneseq
    %v2993 = vshrl.u32 %v2992, 7
    %v2994 = vsub.s32 %v2991, %v2993
    %v2995 = vrot.slane %v2985, %v2994
    %v2997 = vunpack.c.l.s4 842150450
    %v2998 = vunpack.c.0.s8 %v2997
    %v2999 = vlaneseq
    %v3000 = vshrl.u32 %v2999, 7
    %v3001 = vsub.s32 %v2998, %v3000
    %v3002 = vrot.slane %v2985, %v3001
    %v3004 = vunpack.c.l.s4 1414812756
    %v3005 = vunpack.c.0.s8 %v3004
    %v3006 = vlaneseq
    %v3007 = vshrl.u32 %v3006, 7
    %v3008 = vsub.s32 %v3005, %v3007
    %v3009 = vrot.slane %v2985, %v3008
    %v3011 = vunpack.c.l.s4 1987475062
    %v3012 = vunpack.c.0.s8 %v3011
    %v3013 = vlaneseq
    %v3014 = vshrl.u32 %v3013, 7
    %v3015 = vsub.s32 %v3012, %v3014
    %v3016 = vrot.slane %v2985, %v3015
    %v3018 = vunpack.c.l.s4 269488144
    %v3019 = vunpack.c.0.s8 %v3018
    %v3020 = vlaneseq
    %v3021 = vshrl.u32 %v3020, 7
    %v3022 = vsub.s32 %v3019, %v3021
    %v3023 = vrot.slane %v2986, %v3022
    %v3025 = vunpack.c.l.s4 842150450
    %v3026 = vunpack.c.0.s8 %v3025
    %v3027 = vlaneseq
    %v3028 = vshrl.u32 %v3027, 7
    %v3029 = vsub.s32 %v3026, %v3028
    %v3030 = vrot.slane %v2986, %v3029
    %v3032 = vunpack.c.l.s4 1414812756
    %v3033 = vunpack.c.0.s8 %v3032
    %v3034 = vlaneseq
    %v3035 = vshrl.u32 %v3034, 7
    %v3036 = vsub.s32 %v3033, %v3035
    %v3037 = vrot.slane %v2986, %v3036
    %v3039 = vunpack.c.l.s4 1987475062
    %v3040 = vunpack.c.0.s8 %v3039
    %v3041 = vlaneseq
    %v3042 = vshrl.u32 %v3041, 7
    %v3043 = vsub.s32 %v3040, %v3042
    %v3044 = vrot.slane %v2986, %v3043
    %v3053 = vsub.f32 %v2925, %v2995
    %v3054 = vsub.f32 %v2926, %v3002
    %v3055 = vsub.f32 %v2927, %v3009
    %v3056 = vsub.f32 %v2928, %v3016
    %v3057 = vsub.f32 %v2929, %v3023
    %v3058 = vsub.f32 %v2930, %v3030
    %v3059 = vsub.f32 %v2931, %v3037
    %v3060 = vsub.f32 %v2932, %v3044
    %v3061 = vmul.f32 %v3053, %v3053
    %v3062 = vmul.f32 %v3054, %v3054
    %v3063 = vmul.f32 %v3055, %v3055
    %v3064 = vmul.f32 %v3056, %v3056
    %v3065 = vmul.f32 %v3057, %v3057
    %v3066 = vmul.f32 %v3058, %v3058
    %v3067 = vmul.f32 %v3059, %v3059
    %v3068 = vmul.f32 %v3060, %v3060
    %v3077 = vcombine.low %v3061, %v3062
    %v3078 = vcombine.low %v3063, %v3064
    %v3080 = vunpack.c.l.s4 1983009808
    %v3081 = vunpack.c.0.s8 %v3080
    %v3082 = vlaneseq
    %v3083 = vshrl.u32 %v3082, 7
    %v3084 = vsub.s32 %v3081, %v3083
    %v3085 = vrot.slane %v3077, %v3084
    %v3087 = vunpack.c.l.s4 1983009808
    %v3088 = vunpack.c.0.s8 %v3087
    %v3089 = vlaneseq
    %v3090 = vshrl.u32 %v3089, 7
    %v3091 = vsub.s32 %v3088, %v3090
    %v3092 = vrot.slane %v3078, %v3091
    %v3093 = vcombine.low %v3085, %v3092
    %v3094 = vcombine.low %v3065, %v3066
    %v3095 = vcombine.low %v3067, %v3068
    %v3097 = vunpack.c.l.s4 1983009808
    %v3098 = vunpack.c.0.s8 %v3097
    %v3099 = vlaneseq
    %v3100 = vshrl.u32 %v3099, 7
    %v3101 = vsub.s32 %v3098, %v3100
    %v3102 = vrot.slane %v3094, %v3101
    %v3104 = vunpack.c.l.s4 1983009808
    %v3105 = vunpack.c.0.s8 %v3104
    %v3106 = vlaneseq
    %v3107 = vshrl.u32 %v3106, 7
    %v3108 = vsub.s32 %v3105, %v3107
    %v3109 = vrot.slane %v3095, %v3108
    %v3110 = vcombine.low %v3102, %v3109
    %v3113 = vsel %vm136, %v3093, 0.0
    %3114 = vadd.xlane.f32.xlu0 %v3113
    %v3115 = vpop.xlane.xlu0 %3114
    %v3116 = vsel %vm136, %v3110, 0.0
    %3117 = vadd.xlane.f32.xlu0 %v3116
    %v3118 = vpop.xlane.xlu0 %3117
    %v3119 = vmul.f32 %v3115, %v2399
    %v3120 = vmul.f32 %v3118, %v2399
    %v3121 = vadd.f32 %v3119, 1e-05
    %v3122 = vadd.f32 %v3120, 1e-05
    %v3123 = vrsqrt.pop %v3121
    %v3124 = vrsqrt.pop %v3122
    %v3128 = vunpack.c.l.s4 269488144
    %v3129 = vunpack.c.0.s8 %v3128
    %v3130 = vlaneseq
    %v3131 = vshrl.u32 %v3130, 7
    %v3132 = vsub.s32 %v3129, %v3131
    %v3133 = vrot.slane %v3123, %v3132
    %v3135 = vunpack.c.l.s4 842150450
    %v3136 = vunpack.c.0.s8 %v3135
    %v3137 = vlaneseq
    %v3138 = vshrl.u32 %v3137, 7
    %v3139 = vsub.s32 %v3136, %v3138
    %v3140 = vrot.slane %v3123, %v3139
    %v3142 = vunpack.c.l.s4 1414812756
    %v3143 = vunpack.c.0.s8 %v3142
    %v3144 = vlaneseq
    %v3145 = vshrl.u32 %v3144, 7
    %v3146 = vsub.s32 %v3143, %v3145
    %v3147 = vrot.slane %v3123, %v3146
    %v3149 = vunpack.c.l.s4 1987475062
    %v3150 = vunpack.c.0.s8 %v3149
    %v3151 = vlaneseq
    %v3152 = vshrl.u32 %v3151, 7
    %v3153 = vsub.s32 %v3150, %v3152
    %v3154 = vrot.slane %v3123, %v3153
    %v3156 = vunpack.c.l.s4 269488144
    %v3157 = vunpack.c.0.s8 %v3156
    %v3158 = vlaneseq
    %v3159 = vshrl.u32 %v3158, 7
    %v3160 = vsub.s32 %v3157, %v3159
    %v3161 = vrot.slane %v3124, %v3160
    %v3163 = vunpack.c.l.s4 842150450
    %v3164 = vunpack.c.0.s8 %v3163
    %v3165 = vlaneseq
    %v3166 = vshrl.u32 %v3165, 7
    %v3167 = vsub.s32 %v3164, %v3166
    %v3168 = vrot.slane %v3124, %v3167
    %v3170 = vunpack.c.l.s4 1414812756
    %v3171 = vunpack.c.0.s8 %v3170
    %v3172 = vlaneseq
    %v3173 = vshrl.u32 %v3172, 7
    %v3174 = vsub.s32 %v3171, %v3173
    %v3175 = vrot.slane %v3124, %v3174
    %v3177 = vunpack.c.l.s4 1987475062
    %v3178 = vunpack.c.0.s8 %v3177
    %v3179 = vlaneseq
    %v3180 = vshrl.u32 %v3179, 7
    %v3181 = vsub.s32 %v3178, %v3180
    %v3182 = vrot.slane %v3124, %v3181
    %v3191 = vmul.f32 %v3053, %v3133
    %v3192 = vmul.f32 %v3054, %v3140
    %v3193 = vmul.f32 %v3055, %v3147
    %v3194 = vmul.f32 %v3056, %v3154
    %v3195 = vmul.f32 %v3057, %v3161
    %v3196 = vmul.f32 %v3058, %v3168
    %v3197 = vmul.f32 %v3059, %v3175
    %v3198 = vmul.f32 %v3060, %v3182
    %v3200 = vlaneseq
    %v3201 = vshrl.u32 %v3200, 7
    %v3202 = vsub.s32 0, %v3201
    %v3203 = vrot.slane %v2933, %v3202
    %v3204 = vcombine.high %v3203, %v3203
    %v3206 = vunpack.c.l.s4 1983009808
    %v3207 = vunpack.c.0.s8 %v3206
    %v3208 = vlaneseq
    %v3209 = vshrl.u32 %v3208, 7
    %v3210 = vsub.s32 %v3207, %v3209
    %v3211 = vrot.slane %v3203, %v3210
    %v3213 = vunpack.c.l.s4 1983009808
    %v3214 = vunpack.c.0.s8 %v3213
    %v3215 = vlaneseq
    %v3216 = vshrl.u32 %v3215, 7
    %v3217 = vsub.s32 %v3214, %v3216
    %v3218 = vrot.slane %v3204, %v3217
    %v3219 = vcombine.high %v3211, %v3211
    %v3220 = vcombine.high %v3218, %v3218
    %v3225 = vmul.f32 %v3191, %v3211
    %v3226 = vmul.f32 %v3192, %v3219
    %v3227 = vmul.f32 %v3193, %v3218
    %v3228 = vmul.f32 %v3194, %v3220
    %v3229 = vmul.f32 %v3195, %v3211
    %v3230 = vmul.f32 %v3196, %v3219
    %v3231 = vmul.f32 %v3197, %v3218
    %v3232 = vmul.f32 %v3198, %v3220
    %v3234 = vlaneseq
    %v3235 = vshrl.u32 %v3234, 7
    %v3236 = vsub.s32 0, %v3235
    %v3237 = vrot.slane %v2934, %v3236
    %v3238 = vcombine.high %v3237, %v3237
    %v3240 = vunpack.c.l.s4 1983009808
    %v3241 = vunpack.c.0.s8 %v3240
    %v3242 = vlaneseq
    %v3243 = vshrl.u32 %v3242, 7
    %v3244 = vsub.s32 %v3241, %v3243
    %v3245 = vrot.slane %v3237, %v3244
    %v3247 = vunpack.c.l.s4 1983009808
    %v3248 = vunpack.c.0.s8 %v3247
    %v3249 = vlaneseq
    %v3250 = vshrl.u32 %v3249, 7
    %v3251 = vsub.s32 %v3248, %v3250
    %v3252 = vrot.slane %v3238, %v3251
    %v3253 = vcombine.high %v3245, %v3245
    %v3254 = vcombine.high %v3252, %v3252
    %v3259 = vadd.f32 %v3225, %v3245
    %v3260 = vadd.f32 %v3226, %v3253
    %v3261 = vadd.f32 %v3227, %v3252
    %v3262 = vadd.f32 %v3228, %v3254
    %v3263 = vadd.f32 %v3229, %v3245
    %v3264 = vadd.f32 %v3230, %v3253
    %v3265 = vadd.f32 %v3231, %v3252
    %v3266 = vadd.f32 %v3232, %v3254
    %vm3267 = vcmask 254976
    %3268 = vst.msk [vmem:[#allocation5] sm:$0x3] %vm3267, %v3259
    %3269 = vst.msk [vmem:[#allocation5 + $0x2] sm:$0x3] %vm3267, %v3260
    %3270 = vst.msk [vmem:[#allocation5 + $0x4] sm:$0x3] %vm3267, %v3261
    %3271 = vst.msk [vmem:[#allocation5 + $0x6] sm:$0x3] %vm3267, %v3262
    %3272 = vst.msk [vmem:[#allocation5 + $0x8] sm:$0x3] %vm3267, %v3263
    %3273 = vst.msk [vmem:[#allocation5 + $0xa] sm:$0x3] %vm3267, %v3264
    %3274 = vst.msk [vmem:[#allocation5 + $0xc] sm:$0x3] %vm3267, %v3265
    %3275 = vst.msk [vmem:[#allocation5 + $0xe] sm:$0x3] %vm3267, %v3266
    // Predicated region
    $region58: #{tpu_custom_call.1} parent=1 // pred_check
      _
    $region59: #{tpu_custom_call.1} parent=1 // pred_check_branch
      %3277 = sbr.rel (0) target = $region61
    $region60: #{tpu_custom_call.1} parent=1 // pred_region
      %s3279 = ssub.s32 256, 256
      %3280 = vsyncadd [#allocation4], %s3279
      %s3281 = sshll.u32 [#allocation5], 4
      %s3282 = int_to_ptr.vmem [resolvable:$true] %s3281
      %3287 = dma.vmem_to_hbm [thread:$0]  %s3282, 256, %s13, [#allocation4], 32, 32, 2
    $region61: #{tpu_custom_call.1} parent=1 // pred_fallthru
      _
    // Predicated region
    $region62: #{tpu_custom_call.1} parent=1 // pred_check
      _
    $region63: #{tpu_custom_call.1} parent=1 // pred_check_branch
      %3289 = sbr.rel (0) target = $region65
    $region64: #{tpu_custom_call.1} parent=1 // pred_region
      %3290 = dma.done [#allocation4], 256
    $region65: #{tpu_custom_call.1} parent=1 // pred_fallthru
      _
    %3291 = vsyncpa [#allocation3], 1
    %3292 = vsyncpa [#allocation4], 1

// kernel: tpu_custom_call.1
$region0: #{tpu_custom_call.1}
  #allocation0 [shape = 'u32[]', space=smem, size = 0x4, offset = 0x4, fixed_abs, tag = 'smem constant byte address 0x4 - core index']
  #allocation1 [shape = 'u32[144,128]{1,0:T(1,128)}', space=vmem, size = 0x12000, scoped, tag = 'internal scratch']
  %s0 = inlined_call_operand.vmem [shape: f32[8,2,32], index: 0, kind: input, shape index: {}]
  %s1 = inlined_call_operand.vmem [shape: bf16[32,96], index: 1, kind: input, shape index: {}]
  %s2 = inlined_call_operand.vmem [shape: f32[1,96], index: 2, kind: input, shape index: {}]
  %s3 = inlined_call_operand.vmem [shape: bf16[32,32], index: 3, kind: input, shape index: {}]
  %s4 = inlined_call_operand.vmem [shape: f32[1,32], index: 4, kind: input, shape index: {}]
  %s5 = inlined_call_operand.hbm [shape: bf16[32,64], index: 5, kind: input, shape index: {}]
  %s6 = inlined_call_operand.vmem [shape: f32[1,64], index: 6, kind: input, shape index: {}]
  %s7 = inlined_call_operand.vmem [shape: bf16[64,32], index: 7, kind: input, shape index: {}]
  %s8 = inlined_call_operand.vmem [shape: f32[1,32], index: 8, kind: input, shape index: {}]
  %s9 = inlined_call_operand.vmem [shape: f32[1,32], index: 9, kind: input, shape index: {}]
  %s10 = inlined_call_operand.vmem [shape: f32[1,32], index: 10, kind: input, shape index: {}]
  %s11 = inlined_call_operand.vmem [shape: f32[1,32], index: 11, kind: input, shape index: {}]
  %s12 = inlined_call_operand.vmem [shape: f32[1,32], index: 12, kind: input, shape index: {}]
  %s13 = inlined_call_operand.hbm [shape: f32[8,2,32], index: 13, kind: output, shape index: {}]
  %s14 = sld [smem:[#allocation0]]
  $region66: #{tpu_custom_call.1} parent=0
    _
  %s16 = ssub.s32 1, %s14
  %s17 = scalar_select 0, %s16, %s14
  $region1: #{tpu_custom_call.1} parent=0
    #allocation2 [shape = 'u8[8192]{0}', space=vmem, size = 0x2000, scoped, tag = 'input window, operand 5, single buffered']
    #allocation3 [shape = 's32[1]{0}', space=sflag, size = 0x4, scoped, tag = 'scoped memory for tpu_custom_call.1']
    #allocation4 [shape = 's32[1]{0}', space=sflag, size = 0x4, scoped, tag = 'scoped memory for tpu_custom_call.1']
    #allocation5 [shape = 'u8[8192]{0}', space=vmem, size = 0x2000, scoped, tag = 'output window, operand 0, single buffered']
    %18 = vsyncpa [#allocation3], 0
    %19 = vsyncpa [#allocation4], 0
    // Predicated region
    $region2: #{tpu_custom_call.1} parent=1 // pred_check
      _
    $region3: #{tpu_custom_call.1} parent=1 // pred_check_branch
      %21 = sbr.rel (0) target = $region5
    $region4: #{tpu_custom_call.1} parent=1 // pred_region
      _
    $region5: #{tpu_custom_call.1} parent=1 // pred_fallthru
      _
    // Predicated region
    $region6: #{tpu_custom_call.1} parent=1 // pred_check
      _
    $region7: #{tpu_custom_call.1} parent=1 // pred_check_branch
      %23 = sbr.rel (0) target = $region9
    $region8: #{tpu_custom_call.1} parent=1 // pred_region
      _
    $region9: #{tpu_custom_call.1} parent=1 // pred_fallthru
      _
    // Predicated region
    $region10: #{tpu_custom_call.1} parent=1 // pred_check
      _
    $region11: #{tpu_custom_call.1} parent=1 // pred_check_branch
      %25 = sbr.rel (0) target = $region13
    $region12: #{tpu_custom_call.1} parent=1 // pred_region
      _
    $region13: #{tpu_custom_call.1} parent=1 // pred_fallthru
      _
    // Predicated region
    $region14: #{tpu_custom_call.1} parent=1 // pred_check
      _
    $region15: #{tpu_custom_call.1} parent=1 // pred_check_branch
      %27 = sbr.rel (0) target = $region17
    $region16: #{tpu_custom_call.1} parent=1 // pred_region
      _
    $region17: #{tpu_custom_call.1} parent=1 // pred_fallthru
      _
    // Predicated region
    $region18: #{tpu_custom_call.1} parent=1 // pred_check
      _
    $region19: #{tpu_custom_call.1} parent=1 // pred_check_branch
      %29 = sbr.rel (0) target = $region21
    $region20: #{tpu_custom_call.1} parent=1 // pred_region
      _
    $region21: #{tpu_custom_call.1} parent=1 // pred_fallthru
      _
    // Predicated region
    $region22: #{tpu_custom_call.1} parent=1 // pred_check
      _
    $region23: #{tpu_custom_call.1} parent=1 // pred_check_branch
      %31 = sbr.rel (0) target = $region25
    $region24: #{tpu_custom_call.1} parent=1 // pred_region
      %s33 = ssub.s32 256, 256
      %34 = vsyncadd [#allocation3], %s33
      %s35 = sshll.u32 [#allocation2], 4
      %s36 = int_to_ptr.vmem [resolvable:$true] %s35
      %41 = dma.hbm_to_vmem [thread:$0]  %s5, 256, %s36, [#allocation3], 64, 64, 4
    $region25: #{tpu_custom_call.1} parent=1 // pred_fallthru
      _
    // Predicated region
    $region26: #{tpu_custom_call.1} parent=1 // pred_check
      _
    $region27: #{tpu_custom_call.1} parent=1 // pred_check_branch
      %43 = sbr.rel (0) target = $region29
    $region28: #{tpu_custom_call.1} parent=1 // pred_region
      _
    $region29: #{tpu_custom_call.1} parent=1 // pred_fallthru
      _
    // Predicated region
    $region30: #{tpu_custom_call.1} parent=1 // pred_check
      _
    $region31: #{tpu_custom_call.1} parent=1 // pred_check_branch
      %45 = sbr.rel (0) target = $region33
    $region32: #{tpu_custom_call.1} parent=1 // pred_region
      _
    $region33: #{tpu_custom_call.1} parent=1 // pred_fallthru
      _
    // Predicated region
    $region34: #{tpu_custom_call.1} parent=1 // pred_check
      _
    $region35: #{tpu_custom_call.1} parent=1 // pred_check_branch
      %47 = sbr.rel (0) target = $region37
    $region36: #{tpu_custom_call.1} parent=1 // pred_region
      _
    $region37: #{tpu_custom_call.1} parent=1 // pred_fallthru
      _
    // Predicated region
    $region38: #{tpu_custom_call.1} parent=1 // pred_check
      _
    $region39: #{tpu_custom_call.1} parent=1 // pred_check_branch
      %49 = sbr.rel (0) target = $region41
    $region40: #{tpu_custom_call.1} parent=1 // pred_region
      _
    $region41: #{tpu_custom_call.1} parent=1 // pred_fallthru
      _
    // Predicated region
    $region42: #{tpu_custom_call.1} parent=1 // pred_check
      _
    $region43: #{tpu_custom_call.1} parent=1 // pred_check_branch
      %51 = sbr.rel (0) target = $region45
    $region44: #{tpu_custom_call.1} parent=1 // pred_region
      _
    $region45: #{tpu_custom_call.1} parent=1 // pred_fallthru
      _
    // Predicated region
    $region46: #{tpu_custom_call.1} parent=1 // pred_check
      _
    $region47: #{tpu_custom_call.1} parent=1 // pred_check_branch
      %53 = sbr.rel (0) target = $region49
    $region48: #{tpu_custom_call.1} parent=1 // pred_region
      _
    $region49: #{tpu_custom_call.1} parent=1 // pred_fallthru
      _
    // Predicated region
    $region50: #{tpu_custom_call.1} parent=1 // pred_check
      _
    $region51: #{tpu_custom_call.1} parent=1 // pred_check_branch
      %55 = sbr.rel (0) target = $region53
    $region52: #{tpu_custom_call.1} parent=1 // pred_region
      _
    $region53: #{tpu_custom_call.1} parent=1 // pred_fallthru
      _
    // Predicated region
    $region54: #{tpu_custom_call.1} parent=1 // pred_check
      _
    $region55: #{tpu_custom_call.1} parent=1 // pred_check_branch
      %57 = sbr.rel (0) target = $region57
    $region56: #{tpu_custom_call.1} parent=1 // pred_region
      %58 = dma.done [#allocation3], 256
    $region57: #{tpu_custom_call.1} parent=1 // pred_fallthru
      _
    %v60 = vld [vmem:[%s0] sm:$0x3]
    %v61 = vld [vmem:[%s0 + $0x2] sm:$0x3]
    %v62 = vld [vmem:[%s0 + $0x4] sm:$0x3]
    %v63 = vld [vmem:[%s0 + $0x6] sm:$0x3]
    %v64 = vld [vmem:[%s0 + $0x8] sm:$0x3]
    %v65 = vld [vmem:[%s0 + $0xa] sm:$0x3]
    %v66 = vld [vmem:[%s0 + $0xc] sm:$0x3]
    %v67 = vld [vmem:[%s0 + $0xe] sm:$0x3]
    %v76 = vcombine.low %v60, %v61
    %v77 = vcombine.low %v62, %v63
    %v79 = vunpack.c.l.s4 1983009808
    %v80 = vunpack.c.0.s8 %v79
    %v81 = vlaneseq
    %v82 = vshrl.u32 %v81, 7
    %v83 = vsub.s32 %v80, %v82
    %v84 = vrot.slane %v76, %v83
    %v86 = vunpack.c.l.s4 1983009808
    %v87 = vunpack.c.0.s8 %v86
    %v88 = vlaneseq
    %v89 = vshrl.u32 %v88, 7
    %v90 = vsub.s32 %v87, %v89
    %v91 = vrot.slane %v77, %v90
    %v92 = vcombine.low %v84, %v91
    %v93 = vcombine.low %v64, %v65
    %v94 = vcombine.low %v66, %v67
    %v96 = vunpack.c.l.s4 1983009808
    %v97 = vunpack.c.0.s8 %v96
    %v98 = vlaneseq
    %v99 = vshrl.u32 %v98, 7
    %v100 = vsub.s32 %v97, %v99
    %v101 = vrot.slane %v93, %v100
    %v103 = vunpack.c.l.s4 1983009808
    %v104 = vunpack.c.0.s8 %v103
    %v105 = vlaneseq
    %v106 = vshrl.u32 %v105, 7
    %v107 = vsub.s32 %v104, %v106
    %v108 = vrot.slane %v94, %v107
    %v109 = vcombine.low %v101, %v108
    %v112 = vpack.c.bf16 %v109, %v92
    %v113 = vld [vmem:[%s1] sm:$0xf]
    %v114 = vld [vmem:[%s1 + $0x4] sm:$0xf]
    %v115 = vld [vmem:[%s1 + $0x8] sm:$0xf]
    %v116 = vld [vmem:[%s1 + $0xc] sm:$0xf]
    %v117 = vld [vmem:[%s2] sm:$0x1]
    %v119 = vlaneseq
    %v120 = vshrl.u32 %v119, 7
    %v121 = vsub.s32 0, %v120
    %v122 = vrot.slane %v117, %v121
    %v128 = vunpack.c.l.b16 %v113
    %v129 = vunpack.c.l.b16 %v114
    %v130 = vunpack.c.l.b16 %v115
    %v131 = vunpack.c.l.b16 %v116
    %v132 = vpack.c.b16 %v129, %v128
    %v133 = vpack.c.b16 %v131, %v130
    %vm136 = vcmask 261120
    %v138 = vsel %vm136, %v112, 0
    %140 = vmatprep.subr.bf16.mxu0 0
    %141 = vmatpush1.bf16.msra.mxu0 %v132
    %142 = vmatprep.subr.bf16.mxu0 0
    %143 = vmatpush1.bf16.msra.mxu0 %v133
    %144 = vmatprep.subr.bf16.mxu0 0
    %145 = vmatpush1.bf16.msra.mxu0 0
    %146 = vmatprep.subr.bf16.mxu0 0
    %147 = vmatpush1.bf16.msra.mxu0 0
    %148 = vmatprep.subr.bf16.mxu0 0
    %149 = vmatpush1.bf16.msra.mxu0 0
    %150 = vmatprep.subr.bf16.mxu0 0
    %151 = vmatpush1.bf16.msra.mxu0 0
    %152 = vmatprep.subr.bf16.mxu0 0
    %153 = vmatpush1.bf16.msra.mxu0 0
    %154 = vmatprep.subr.bf16.mxu0 0
    %155 = vmatpush1.bf16.msra.mxu0 0
    %156 = vmatprep.subr.bf16.mxu0 0
    %157 = vmatpush1.bf16.msra.mxu0 0
    %158 = vmatprep.subr.bf16.mxu0 0
    %159 = vmatpush1.bf16.msra.mxu0 0
    %160 = vmatprep.subr.bf16.mxu0 0
    %161 = vmatpush1.bf16.msra.mxu0 0
    %162 = vmatprep.subr.bf16.mxu0 0
    %163 = vmatpush1.bf16.msra.mxu0 0
    %164 = vmatprep.subr.bf16.mxu0 0
    %165 = vmatpush1.bf16.msra.mxu0 0
    %166 = vmatprep.subr.bf16.mxu0 0
    %167 = vmatpush1.bf16.msra.mxu0 0
    %168 = vmatprep.subr.bf16.mxu0 0
    %169 = vmatpush1.bf16.msra.mxu0 0
    %170 = vmatprep.subr.bf16.mxu0 0
    %171 = vmatpush1.bf16.msra.mxu0 0
    %172 = vmatprep.mubr.bf16.mxu0 0
    %173 = vmatmul.mubr.bf16.gmra.mrb[0].mxu0 %v138
    %v174 = vpop.f32.mrb[0].mxu0
    %v175 = vadd.f32 %v122, %v174
    %v176 = vpop.f32.mrb[0].mxu0
    %v177 = vpop.f32.mrb[0].mxu0
    %v178 = vadd.f32 %v122, %v177
    %v179 = vpop.f32.mrb[0].mxu0
    %180 = vdwg.mxu0
    %183 = vrot.lane.b32.xlu0 %v175, 120
    %v184 = vpop.permute.xlu0 %183
    %185 = vrot.lane.b32.xlu0 %v178, 120
    %v186 = vpop.permute.xlu0 %185
    %189 = vrot.lane.b32.xlu0 %v175, 112
    %v190 = vpop.permute.xlu0 %189
    %191 = vrot.lane.b32.xlu0 %v178, 112
    %v192 = vpop.permute.xlu0 %191
    %195 = vrot.lane.b32.xlu0 %v175, 104
    %v196 = vpop.permute.xlu0 %195
    %197 = vrot.lane.b32.xlu0 %v178, 104
    %v198 = vpop.permute.xlu0 %197
    %v201 = vcombine.low %v175, %v190
    %v202 = vcombine.high %v175, %v190
    %v204 = vunpack.c.l.s4 1983009808
    %v205 = vunpack.c.0.s8 %v204
    %v206 = vlaneseq
    %v207 = vshrl.u32 %v206, 7
    %v208 = vsub.s32 %v205, %v207
    %v209 = vrot.slane %v201, %v208
    %v211 = vunpack.c.l.s4 1983009808
    %v212 = vunpack.c.0.s8 %v211
    %v213 = vlaneseq
    %v214 = vshrl.u32 %v213, 7
    %v215 = vsub.s32 %v212, %v214
    %v216 = vrot.slane %v202, %v215
    %v217 = vcombine.low %v184, %v196
    %v218 = vcombine.high %v184, %v196
    %v220 = vunpack.c.l.s4 1983009808
    %v221 = vunpack.c.0.s8 %v220
    %v222 = vlaneseq
    %v223 = vshrl.u32 %v222, 7
    %v224 = vsub.s32 %v221, %v223
    %v225 = vrot.slane %v217, %v224
    %v227 = vunpack.c.l.s4 1983009808
    %v228 = vunpack.c.0.s8 %v227
    %v229 = vlaneseq
    %v230 = vshrl.u32 %v229, 7
    %v231 = vsub.s32 %v228, %v230
    %v232 = vrot.slane %v218, %v231
    %v233 = vcombine.low %v209, %v225
    %v234 = vcombine.high %v209, %v225
    %v236 = vunpack.c.l.s4 1934713408
    %v237 = vunpack.c.0.s8 %v236
    %v238 = vlaneseq
    %v239 = vshrl.u32 %v238, 7
    %v240 = vsub.s32 %v237, %v239
    %v241 = vrot.slane %v233, %v240
    %v243 = vunpack.c.l.s4 1934713408
    %v244 = vunpack.c.0.s8 %v243
    %v245 = vlaneseq
    %v246 = vshrl.u32 %v245, 7
    %v247 = vsub.s32 %v244, %v246
    %v248 = vrot.slane %v234, %v247
    %v249 = vcombine.low %v216, %v232
    %v250 = vcombine.high %v216, %v232
    %v252 = vunpack.c.l.s4 1934713408
    %v253 = vunpack.c.0.s8 %v252
    %v254 = vlaneseq
    %v255 = vshrl.u32 %v254, 7
    %v256 = vsub.s32 %v253, %v255
    %v257 = vrot.slane %v249, %v256
    %v259 = vunpack.c.l.s4 1934713408
    %v260 = vunpack.c.0.s8 %v259
    %v261 = vlaneseq
    %v262 = vshrl.u32 %v261, 7
    %v263 = vsub.s32 %v260, %v262
    %v264 = vrot.slane %v250, %v263
    %v265 = vcombine.high %v241, 0.0
    %v266 = vcombine.high %v248, 0.0
    %v267 = vcombine.high %v257, 0.0
    %v268 = vcombine.high %v264, 0.0
    %v269 = vcombine.low %v178, %v192
    %v270 = vcombine.high %v178, %v192
    %v272 = vunpack.c.l.s4 1983009808
    %v273 = vunpack.c.0.s8 %v272
    %v274 = vlaneseq
    %v275 = vshrl.u32 %v274, 7
    %v276 = vsub.s32 %v273, %v275
    %v277 = vrot.slane %v269, %v276
    %v279 = vunpack.c.l.s4 1983009808
    %v280 = vunpack.c.0.s8 %v279
    %v281 = vlaneseq
    %v282 = vshrl.u32 %v281, 7
    %v283 = vsub.s32 %v280, %v282
    %v284 = vrot.slane %v270, %v283
    %v285 = vcombine.low %v186, %v198
    %v286 = vcombine.high %v186, %v198
    %v288 = vunpack.c.l.s4 1983009808
    %v289 = vunpack.c.0.s8 %v288
    %v290 = vlaneseq
    %v291 = vshrl.u32 %v290, 7
    %v292 = vsub.s32 %v289, %v291
    %v293 = vrot.slane %v285, %v292
    %v295 = vunpack.c.l.s4 1983009808
    %v296 = vunpack.c.0.s8 %v295
    %v297 = vlaneseq
    %v298 = vshrl.u32 %v297, 7
    %v299 = vsub.s32 %v296, %v298
    %v300 = vrot.slane %v286, %v299
    %v301 = vcombine.low %v277, %v293
    %v302 = vcombine.high %v277, %v293
    %v304 = vunpack.c.l.s4 1934713408
    %v305 = vunpack.c.0.s8 %v304
    %v306 = vlaneseq
    %v307 = vshrl.u32 %v306, 7
    %v308 = vsub.s32 %v305, %v307
    %v309 = vrot.slane %v301, %v308
    %v311 = vunpack.c.l.s4 1934713408
    %v312 = vunpack.c.0.s8 %v311
    %v313 = vlaneseq
    %v314 = vshrl.u32 %v313, 7
    %v315 = vsub.s32 %v312, %v314
    %v316 = vrot.slane %v302, %v315
    %v317 = vcombine.low %v284, %v300
    %v318 = vcombine.high %v284, %v300
    %v320 = vunpack.c.l.s4 1934713408
    %v321 = vunpack.c.0.s8 %v320
    %v322 = vlaneseq
    %v323 = vshrl.u32 %v322, 7
    %v324 = vsub.s32 %v321, %v323
    %v325 = vrot.slane %v317, %v324
    %v327 = vunpack.c.l.s4 1934713408
    %v328 = vunpack.c.0.s8 %v327
    %v329 = vlaneseq
    %v330 = vshrl.u32 %v329, 7
    %v331 = vsub.s32 %v328, %v330
    %v332 = vrot.slane %v318, %v331
    %v333 = vcombine.high %v309, 0.0
    %v334 = vcombine.high %v316, 0.0
    %v335 = vcombine.high %v325, 0.0
    %v336 = vcombine.high %v332, 0.0
    %v337 = vcombine.low %v241, %v257
    %v339 = vunpack.c.l.s4 1983009808
    %v340 = vunpack.c.0.s8 %v339
    %v341 = vlaneseq
    %v342 = vshrl.u32 %v341, 7
    %v343 = vsub.s32 %v340, %v342
    %v344 = vrot.slane %v337, %v343
    %v345 = vcombine.low %v248, %v264
    %v347 = vunpack.c.l.s4 1983009808
    %v348 = vunpack.c.0.s8 %v347
    %v349 = vlaneseq
    %v350 = vshrl.u32 %v349, 7
    %v351 = vsub.s32 %v348, %v350
    %v352 = vrot.slane %v345, %v351
    %v353 = vcombine.low %v309, %v325
    %v355 = vunpack.c.l.s4 1983009808
    %v356 = vunpack.c.0.s8 %v355
    %v357 = vlaneseq
    %v358 = vshrl.u32 %v357, 7
    %v359 = vsub.s32 %v356, %v358
    %v360 = vrot.slane %v353, %v359
    %v361 = vcombine.low %v316, %v332
    %v363 = vunpack.c.l.s4 1983009808
    %v364 = vunpack.c.0.s8 %v363
    %v365 = vlaneseq
    %v366 = vshrl.u32 %v365, 7
    %v367 = vsub.s32 %v364, %v366
    %v368 = vrot.slane %v361, %v367
    %v369 = vcombine.low %v344, %v352
    %v370 = vcombine.high %v344, %v352
    %v372 = vunpack.c.l.s4 1934713408
    %v373 = vunpack.c.0.s8 %v372
    %v374 = vlaneseq
    %v375 = vshrl.u32 %v374, 7
    %v376 = vsub.s32 %v373, %v375
    %v377 = vrot.slane %v369, %v376
    %v379 = vunpack.c.l.s4 1934713408
    %v380 = vunpack.c.0.s8 %v379
    %v381 = vlaneseq
    %v382 = vshrl.u32 %v381, 7
    %v383 = vsub.s32 %v380, %v382
    %v384 = vrot.slane %v370, %v383
    %v385 = vcombine.low %v360, %v368
    %v386 = vcombine.high %v360, %v368
    %v388 = vunpack.c.l.s4 1934713408
    %v389 = vunpack.c.0.s8 %v388
    %v390 = vlaneseq
    %v391 = vshrl.u32 %v390, 7
    %v392 = vsub.s32 %v389, %v391
    %v393 = vrot.slane %v385, %v392
    %v395 = vunpack.c.l.s4 1934713408
    %v396 = vunpack.c.0.s8 %v395
    %v397 = vlaneseq
    %v398 = vshrl.u32 %v397, 7
    %v399 = vsub.s32 %v396, %v398
    %v400 = vrot.slane %v386, %v399
    %v401 = vcombine.low %v377, %v393
    %v402 = vcombine.high %v377, %v393
    %v403 = vcombine.low %v384, %v400
    %v404 = vcombine.high %v384, %v400
    %v405 = vcombine.low %v265, %v267
    %v407 = vunpack.c.l.s4 1983009808
    %v408 = vunpack.c.0.s8 %v407
    %v409 = vlaneseq
    %v410 = vshrl.u32 %v409, 7
    %v411 = vsub.s32 %v408, %v410
    %v412 = vrot.slane %v405, %v411
    %v413 = vcombine.low %v266, %v268
    %v415 = vunpack.c.l.s4 1983009808
    %v416 = vunpack.c.0.s8 %v415
    %v417 = vlaneseq
    %v418 = vshrl.u32 %v417, 7
    %v419 = vsub.s32 %v416, %v418
    %v420 = vrot.slane %v413, %v419
    %v421 = vcombine.low %v333, %v335
    %v423 = vunpack.c.l.s4 1983009808
    %v424 = vunpack.c.0.s8 %v423
    %v425 = vlaneseq
    %v426 = vshrl.u32 %v425, 7
    %v427 = vsub.s32 %v424, %v426
    %v428 = vrot.slane %v421, %v427
    %v429 = vcombine.low %v334, %v336
    %v431 = vunpack.c.l.s4 1983009808
    %v432 = vunpack.c.0.s8 %v431
    %v433 = vlaneseq
    %v434 = vshrl.u32 %v433, 7
    %v435 = vsub.s32 %v432, %v434
    %v436 = vrot.slane %v429, %v435
    %v437 = vcombine.low %v412, %v420
    %v438 = vcombine.high %v412, %v420
    %v440 = vunpack.c.l.s4 1934713408
    %v441 = vunpack.c.0.s8 %v440
    %v442 = vlaneseq
    %v443 = vshrl.u32 %v442, 7
    %v444 = vsub.s32 %v441, %v443
    %v445 = vrot.slane %v437, %v444
    %v447 = vunpack.c.l.s4 1934713408
    %v448 = vunpack.c.0.s8 %v447
    %v449 = vlaneseq
    %v450 = vshrl.u32 %v449, 7
    %v451 = vsub.s32 %v448, %v450
    %v452 = vrot.slane %v438, %v451
    %v453 = vcombine.low %v428, %v436
    %v454 = vcombine.high %v428, %v436
    %v456 = vunpack.c.l.s4 1934713408
    %v457 = vunpack.c.0.s8 %v456
    %v458 = vlaneseq
    %v459 = vshrl.u32 %v458, 7
    %v460 = vsub.s32 %v457, %v459
    %v461 = vrot.slane %v453, %v460
    %v463 = vunpack.c.l.s4 1934713408
    %v464 = vunpack.c.0.s8 %v463
    %v465 = vlaneseq
    %v466 = vshrl.u32 %v465, 7
    %v467 = vsub.s32 %v464, %v466
    %v468 = vrot.slane %v454, %v467
    %v469 = vcombine.low %v445, %v461
    %v470 = vcombine.high %v445, %v461
    %v471 = vcombine.low %v452, %v468
    %v472 = vcombine.high %v452, %v468
    %v473 = vpack.c.bf16 %v401, %v401
    %v474 = vpack.c.bf16 %v402, %v402
    %v475 = vpack.c.bf16 %v403, %v403
    %v476 = vpack.c.bf16 %v404, %v404
    %v477 = vpack.c.bf16 %v469, %v469
    %v478 = vpack.c.bf16 %v470, %v470
    %v479 = vpack.c.bf16 %v471, %v471
    %v480 = vpack.c.bf16 %v472, %v472
    %481 = vrot.lane.b32.xlu0 %v175, 96
    %v482 = vpop.permute.xlu0 %481
    %483 = vrot.lane.b32.xlu0 %v178, 96
    %v484 = vpop.permute.xlu0 %483
    %485 = vrot.lane.b32.xlu0 %v184, 96
    %v486 = vpop.permute.xlu0 %485
    %487 = vrot.lane.b32.xlu0 %v186, 96
    %v488 = vpop.permute.xlu0 %487
    %489 = vrot.lane.b32.xlu0 %v190, 96
    %v490 = vpop.permute.xlu0 %489
    %491 = vrot.lane.b32.xlu0 %v192, 96
    %v492 = vpop.permute.xlu0 %491
    %493 = vrot.lane.b32.xlu0 %v196, 96
    %v494 = vpop.permute.xlu0 %493
    %495 = vrot.lane.b32.xlu0 %v198, 96
    %v496 = vpop.permute.xlu0 %495
    %v505 = vcombine.low %v482, %v490
    %v506 = vcombine.high %v482, %v490
    %v508 = vunpack.c.l.s4 1983009808
    %v509 = vunpack.c.0.s8 %v508
    %v510 = vlaneseq
    %v511 = vshrl.u32 %v510, 7
    %v512 = vsub.s32 %v509, %v511
    %v513 = vrot.slane %v505, %v512
    %v515 = vunpack.c.l.s4 1983009808
    %v516 = vunpack.c.0.s8 %v515
    %v517 = vlaneseq
    %v518 = vshrl.u32 %v517, 7
    %v519 = vsub.s32 %v516, %v518
    %v520 = vrot.slane %v506, %v519
    %v521 = vcombine.low %v486, %v494
    %v522 = vcombine.high %v486, %v494
    %v524 = vunpack.c.l.s4 1983009808
    %v525 = vunpack.c.0.s8 %v524
    %v526 = vlaneseq
    %v527 = vshrl.u32 %v526, 7
    %v528 = vsub.s32 %v525, %v527
    %v529 = vrot.slane %v521, %v528
    %v531 = vunpack.c.l.s4 1983009808
    %v532 = vunpack.c.0.s8 %v531
    %v533 = vlaneseq
    %v534 = vshrl.u32 %v533, 7
    %v535 = vsub.s32 %v532, %v534
    %v536 = vrot.slane %v522, %v535
    %v537 = vcombine.low %v513, %v529
    %v538 = vcombine.high %v513, %v529
    %v540 = vunpack.c.l.s4 1934713408
    %v541 = vunpack.c.0.s8 %v540
    %v542 = vlaneseq
    %v543 = vshrl.u32 %v542, 7
    %v544 = vsub.s32 %v541, %v543
    %v545 = vrot.slane %v537, %v544
    %v547 = vunpack.c.l.s4 1934713408
    %v548 = vunpack.c.0.s8 %v547
    %v549 = vlaneseq
    %v550 = vshrl.u32 %v549, 7
    %v551 = vsub.s32 %v548, %v550
    %v552 = vrot.slane %v538, %v551
    %v553 = vcombine.low %v520, %v536
    %v554 = vcombine.high %v520, %v536
    %v556 = vunpack.c.l.s4 1934713408
    %v557 = vunpack.c.0.s8 %v556
    %v558 = vlaneseq
    %v559 = vshrl.u32 %v558, 7
    %v560 = vsub.s32 %v557, %v559
    %v561 = vrot.slane %v553, %v560
    %v563 = vunpack.c.l.s4 1934713408
    %v564 = vunpack.c.0.s8 %v563
    %v565 = vlaneseq
    %v566 = vshrl.u32 %v565, 7
    %v567 = vsub.s32 %v564, %v566
    %v568 = vrot.slane %v554, %v567
    %v569 = vcombine.high %v545, 0.0
    %v570 = vcombine.high %v552, 0.0
    %v571 = vcombine.high %v561, 0.0
    %v572 = vcombine.high %v568, 0.0
    %v573 = vcombine.low %v484, %v492
    %v574 = vcombine.high %v484, %v492
    %v576 = vunpack.c.l.s4 1983009808
    %v577 = vunpack.c.0.s8 %v576
    %v578 = vlaneseq
    %v579 = vshrl.u32 %v578, 7
    %v580 = vsub.s32 %v577, %v579
    %v581 = vrot.slane %v573, %v580
    %v583 = vunpack.c.l.s4 1983009808
    %v584 = vunpack.c.0.s8 %v583
    %v585 = vlaneseq
    %v586 = vshrl.u32 %v585, 7
    %v587 = vsub.s32 %v584, %v586
    %v588 = vrot.slane %v574, %v587
    %v589 = vcombine.low %v488, %v496
    %v590 = vcombine.high %v488, %v496
    %v592 = vunpack.c.l.s4 1983009808
    %v593 = vunpack.c.0.s8 %v592
    %v594 = vlaneseq
    %v595 = vshrl.u32 %v594, 7
    %v596 = vsub.s32 %v593, %v595
    %v597 = vrot.slane %v589, %v596
    %v599 = vunpack.c.l.s4 1983009808
    %v600 = vunpack.c.0.s8 %v599
    %v601 = vlaneseq
    %v602 = vshrl.u32 %v601, 7
    %v603 = vsub.s32 %v600, %v602
    %v604 = vrot.slane %v590, %v603
    %v605 = vcombine.low %v581, %v597
    %v606 = vcombine.high %v581, %v597
    %v608 = vunpack.c.l.s4 1934713408
    %v609 = vunpack.c.0.s8 %v608
    %v610 = vlaneseq
    %v611 = vshrl.u32 %v610, 7
    %v612 = vsub.s32 %v609, %v611
    %v613 = vrot.slane %v605, %v612
    %v615 = vunpack.c.l.s4 1934713408
    %v616 = vunpack.c.0.s8 %v615
    %v617 = vlaneseq
    %v618 = vshrl.u32 %v617, 7
    %v619 = vsub.s32 %v616, %v618
    %v620 = vrot.slane %v606, %v619
    %v621 = vcombine.low %v588, %v604
    %v622 = vcombine.high %v588, %v604
    %v624 = vunpack.c.l.s4 1934713408
    %v625 = vunpack.c.0.s8 %v624
    %v626 = vlaneseq
    %v627 = vshrl.u32 %v626, 7
    %v628 = vsub.s32 %v625, %v627
    %v629 = vrot.slane %v621, %v628
    %v631 = vunpack.c.l.s4 1934713408
    %v632 = vunpack.c.0.s8 %v631
    %v633 = vlaneseq
    %v634 = vshrl.u32 %v633, 7
    %v635 = vsub.s32 %v632, %v634
    %v636 = vrot.slane %v622, %v635
    %v637 = vcombine.high %v613, 0.0
    %v638 = vcombine.high %v620, 0.0
    %v639 = vcombine.high %v629, 0.0
    %v640 = vcombine.high %v636, 0.0
    %v641 = vcombine.low %v545, %v561
    %v643 = vunpack.c.l.s4 1983009808
    %v644 = vunpack.c.0.s8 %v643
    %v645 = vlaneseq
    %v646 = vshrl.u32 %v645, 7
    %v647 = vsub.s32 %v644, %v646
    %v648 = vrot.slane %v641, %v647
    %v649 = vcombine.low %v552, %v568
    %v651 = vunpack.c.l.s4 1983009808
    %v652 = vunpack.c.0.s8 %v651
    %v653 = vlaneseq
    %v654 = vshrl.u32 %v653, 7
    %v655 = vsub.s32 %v652, %v654
    %v656 = vrot.slane %v649, %v655
    %v657 = vcombine.low %v613, %v629
    %v659 = vunpack.c.l.s4 1983009808
    %v660 = vunpack.c.0.s8 %v659
    %v661 = vlaneseq
    %v662 = vshrl.u32 %v661, 7
    %v663 = vsub.s32 %v660, %v662
    %v664 = vrot.slane %v657, %v663
    %v665 = vcombine.low %v620, %v636
    %v667 = vunpack.c.l.s4 1983009808
    %v668 = vunpack.c.0.s8 %v667
    %v669 = vlaneseq
    %v670 = vshrl.u32 %v669, 7
    %v671 = vsub.s32 %v668, %v670
    %v672 = vrot.slane %v665, %v671
    %v673 = vcombine.low %v648, %v656
    %v674 = vcombine.high %v648, %v656
    %v676 = vunpack.c.l.s4 1934713408
    %v677 = vunpack.c.0.s8 %v676
    %v678 = vlaneseq
    %v679 = vshrl.u32 %v678, 7
    %v680 = vsub.s32 %v677, %v679
    %v681 = vrot.slane %v673, %v680
    %v683 = vunpack.c.l.s4 1934713408
    %v684 = vunpack.c.0.s8 %v683
    %v685 = vlaneseq
    %v686 = vshrl.u32 %v685, 7
    %v687 = vsub.s32 %v684, %v686
    %v688 = vrot.slane %v674, %v687
    %v689 = vcombine.low %v664, %v672
    %v690 = vcombine.high %v664, %v672
    %v692 = vunpack.c.l.s4 1934713408
    %v693 = vunpack.c.0.s8 %v692
    %v694 = vlaneseq
    %v695 = vshrl.u32 %v694, 7
    %v696 = vsub.s32 %v693, %v695
    %v697 = vrot.slane %v689, %v696
    %v699 = vunpack.c.l.s4 1934713408
    %v700 = vunpack.c.0.s8 %v699
    %v701 = vlaneseq
    %v702 = vshrl.u32 %v701, 7
    %v703 = vsub.s32 %v700, %v702
    %v704 = vrot.slane %v690, %v703
    %v705 = vcombine.low %v681, %v697
    %v706 = vcombine.high %v681, %v697
    %v707 = vcombine.low %v688, %v704
    %v708 = vcombine.high %v688, %v704
    %v709 = vcombine.low %v569, %v571
    %v711 = vunpack.c.l.s4 1983009808
    %v712 = vunpack.c.0.s8 %v711
    %v713 = vlaneseq
    %v714 = vshrl.u32 %v713, 7
    %v715 = vsub.s32 %v712, %v714
    %v716 = vrot.slane %v709, %v715
    %v717 = vcombine.low %v570, %v572
    %v719 = vunpack.c.l.s4 1983009808
    %v720 = vunpack.c.0.s8 %v719
    %v721 = vlaneseq
    %v722 = vshrl.u32 %v721, 7
    %v723 = vsub.s32 %v720, %v722
    %v724 = vrot.slane %v717, %v723
    %v725 = vcombine.low %v637, %v639
    %v727 = vunpack.c.l.s4 1983009808
    %v728 = vunpack.c.0.s8 %v727
    %v729 = vlaneseq
    %v730 = vshrl.u32 %v729, 7
    %v731 = vsub.s32 %v728, %v730
    %v732 = vrot.slane %v725, %v731
    %v733 = vcombine.low %v638, %v640
    %v735 = vunpack.c.l.s4 1983009808
    %v736 = vunpack.c.0.s8 %v735
    %v737 = vlaneseq
    %v738 = vshrl.u32 %v737, 7
    %v739 = vsub.s32 %v736, %v738
    %v740 = vrot.slane %v733, %v739
    %v741 = vcombine.low %v716, %v724
    %v742 = vcombine.high %v716, %v724
    %v744 = vunpack.c.l.s4 1934713408
    %v745 = vunpack.c.0.s8 %v744
    %v746 = vlaneseq
    %v747 = vshrl.u32 %v746, 7
    %v748 = vsub.s32 %v745, %v747
    %v749 = vrot.slane %v741, %v748
    %v751 = vunpack.c.l.s4 1934713408
    %v752 = vunpack.c.0.s8 %v751
    %v753 = vlaneseq
    %v754 = vshrl.u32 %v753, 7
    %v755 = vsub.s32 %v752, %v754
    %v756 = vrot.slane %v742, %v755
    %v757 = vcombine.low %v732, %v740
    %v758 = vcombine.high %v732, %v740
    %v760 = vunpack.c.l.s4 1934713408
    %v761 = vunpack.c.0.s8 %v760
    %v762 = vlaneseq
    %v763 = vshrl.u32 %v762, 7
    %v764 = vsub.s32 %v761, %v763
    %v765 = vrot.slane %v757, %v764
    %v767 = vunpack.c.l.s4 1934713408
    %v768 = vunpack.c.0.s8 %v767
    %v769 = vlaneseq
    %v770 = vshrl.u32 %v769, 7
    %v771 = vsub.s32 %v768, %v770
    %v772 = vrot.slane %v758, %v771
    %v773 = vcombine.low %v749, %v765
    %v774 = vcombine.high %v749, %v765
    %v775 = vcombine.low %v756, %v772
    %v776 = vcombine.high %v756, %v772
    %v777 = vpack.c.bf16 %v705, %v705
    %v778 = vpack.c.bf16 %v706, %v706
    %v779 = vpack.c.bf16 %v707, %v707
    %v780 = vpack.c.bf16 %v708, %v708
    %v781 = vpack.c.bf16 %v773, %v773
    %v782 = vpack.c.bf16 %v774, %v774
    %v783 = vpack.c.bf16 %v775, %v775
    %v784 = vpack.c.bf16 %v776, %v776
    %785 = vrot.lane.b32.xlu0 %v175, 64
    %v786 = vpop.permute.xlu0 %785
    %787 = vrot.lane.b32.xlu0 %v178, 64
    %v788 = vpop.permute.xlu0 %787
    %789 = vrot.lane.b32.xlu0 %v184, 64
    %v790 = vpop.permute.xlu0 %789
    %791 = vrot.lane.b32.xlu0 %v186, 64
    %v792 = vpop.permute.xlu0 %791
    %793 = vrot.lane.b32.xlu0 %v190, 64
    %v794 = vpop.permute.xlu0 %793
    %795 = vrot.lane.b32.xlu0 %v192, 64
    %v796 = vpop.permute.xlu0 %795
    %797 = vrot.lane.b32.xlu0 %v196, 64
    %v798 = vpop.permute.xlu0 %797
    %799 = vrot.lane.b32.xlu0 %v198, 64
    %v800 = vpop.permute.xlu0 %799
    %v809 = vcombine.low %v786, %v794
    %v810 = vcombine.high %v786, %v794
    %v812 = vunpack.c.l.s4 1983009808
    %v813 = vunpack.c.0.s8 %v812
    %v814 = vlaneseq
    %v815 = vshrl.u32 %v814, 7
    %v816 = vsub.s32 %v813, %v815
    %v817 = vrot.slane %v809, %v816
    %v819 = vunpack.c.l.s4 1983009808
    %v820 = vunpack.c.0.s8 %v819
    %v821 = vlaneseq
    %v822 = vshrl.u32 %v821, 7
    %v823 = vsub.s32 %v820, %v822
    %v824 = vrot.slane %v810, %v823
    %v825 = vcombine.low %v790, %v798
    %v826 = vcombine.high %v790, %v798
    %v828 = vunpack.c.l.s4 1983009808
    %v829 = vunpack.c.0.s8 %v828
    %v830 = vlaneseq
    %v831 = vshrl.u32 %v830, 7
    %v832 = vsub.s32 %v829, %v831
    %v833 = vrot.slane %v825, %v832
    %v835 = vunpack.c.l.s4 1983009808
    %v836 = vunpack.c.0.s8 %v835
    %v837 = vlaneseq
    %v838 = vshrl.u32 %v837, 7
    %v839 = vsub.s32 %v836, %v838
    %v840 = vrot.slane %v826, %v839
    %v841 = vcombine.low %v817, %v833
    %v842 = vcombine.high %v817, %v833
    %v844 = vunpack.c.l.s4 1934713408
    %v845 = vunpack.c.0.s8 %v844
    %v846 = vlaneseq
    %v847 = vshrl.u32 %v846, 7
    %v848 = vsub.s32 %v845, %v847
    %v849 = vrot.slane %v841, %v848
    %v851 = vunpack.c.l.s4 1934713408
    %v852 = vunpack.c.0.s8 %v851
    %v853 = vlaneseq
    %v854 = vshrl.u32 %v853, 7
    %v855 = vsub.s32 %v852, %v854
    %v856 = vrot.slane %v842, %v855
    %v857 = vcombine.low %v824, %v840
    %v858 = vcombine.high %v824, %v840
    %v860 = vunpack.c.l.s4 1934713408
    %v861 = vunpack.c.0.s8 %v860
    %v862 = vlaneseq
    %v863 = vshrl.u32 %v862, 7
    %v864 = vsub.s32 %v861, %v863
    %v865 = vrot.slane %v857, %v864
    %v867 = vunpack.c.l.s4 1934713408
    %v868 = vunpack.c.0.s8 %v867
    %v869 = vlaneseq
    %v870 = vshrl.u32 %v869, 7
    %v871 = vsub.s32 %v868, %v870
    %v872 = vrot.slane %v858, %v871
    %v873 = vcombine.high %v849, 0.0
    %v874 = vcombine.high %v856, 0.0
    %v875 = vcombine.high %v865, 0.0
    %v876 = vcombine.high %v872, 0.0
    %v877 = vcombine.low %v788, %v796
    %v878 = vcombine.high %v788, %v796
    %v880 = vunpack.c.l.s4 1983009808
    %v881 = vunpack.c.0.s8 %v880
    %v882 = vlaneseq
    %v883 = vshrl.u32 %v882, 7
    %v884 = vsub.s32 %v881, %v883
    %v885 = vrot.slane %v877, %v884
    %v887 = vunpack.c.l.s4 1983009808
    %v888 = vunpack.c.0.s8 %v887
    %v889 = vlaneseq
    %v890 = vshrl.u32 %v889, 7
    %v891 = vsub.s32 %v888, %v890
    %v892 = vrot.slane %v878, %v891
    %v893 = vcombine.low %v792, %v800
    %v894 = vcombine.high %v792, %v800
    %v896 = vunpack.c.l.s4 1983009808
    %v897 = vunpack.c.0.s8 %v896
    %v898 = vlaneseq
    %v899 = vshrl.u32 %v898, 7
    %v900 = vsub.s32 %v897, %v899
    %v901 = vrot.slane %v893, %v900
    %v903 = vunpack.c.l.s4 1983009808
    %v904 = vunpack.c.0.s8 %v903
    %v905 = vlaneseq
    %v906 = vshrl.u32 %v905, 7
    %v907 = vsub.s32 %v904, %v906
    %v908 = vrot.slane %v894, %v907
    %v909 = vcombine.low %v885, %v901
    %v910 = vcombine.high %v885, %v901
    %v912 = vunpack.c.l.s4 1934713408
    %v913 = vunpack.c.0.s8 %v912
    %v914 = vlaneseq
    %v915 = vshrl.u32 %v914, 7
    %v916 = vsub.s32 %v913, %v915
    %v917 = vrot.slane %v909, %v916
    %v919 = vunpack.c.l.s4 1934713408
    %v920 = vunpack.c.0.s8 %v919
    %v921 = vlaneseq
    %v922 = vshrl.u32 %v921, 7
    %v923 = vsub.s32 %v920, %v922
    %v924 = vrot.slane %v910, %v923
    %v925 = vcombine.low %v892, %v908
    %v926 = vcombine.high %v892, %v908
    %v928 = vunpack.c.l.s4 1934713408
    %v929 = vunpack.c.0.s8 %v928
    %v930 = vlaneseq
    %v931 = vshrl.u32 %v930, 7
    %v932 = vsub.s32 %v929, %v931
    %v933 = vrot.slane %v925, %v932
    %v935 = vunpack.c.l.s4 1934713408
    %v936 = vunpack.c.0.s8 %v935
    %v937 = vlaneseq
    %v938 = vshrl.u32 %v937, 7
    %v939 = vsub.s32 %v936, %v938
    %v940 = vrot.slane %v926, %v939
    %v941 = vcombine.high %v917, 0.0
    %v942 = vcombine.high %v924, 0.0
    %v943 = vcombine.high %v933, 0.0
    %v944 = vcombine.high %v940, 0.0
    %v945 = vcombine.low %v849, %v865
    %v947 = vunpack.c.l.s4 1983009808
    %v948 = vunpack.c.0.s8 %v947
    %v949 = vlaneseq
    %v950 = vshrl.u32 %v949, 7
    %v951 = vsub.s32 %v948, %v950
    %v952 = vrot.slane %v945, %v951
    %v953 = vcombine.low %v856, %v872
    %v955 = vunpack.c.l.s4 1983009808
    %v956 = vunpack.c.0.s8 %v955
    %v957 = vlaneseq
    %v958 = vshrl.u32 %v957, 7
    %v959 = vsub.s32 %v956, %v958
    %v960 = vrot.slane %v953, %v959
    %v961 = vcombine.low %v917, %v933
    %v963 = vunpack.c.l.s4 1983009808
    %v964 = vunpack.c.0.s8 %v963
    %v965 = vlaneseq
    %v966 = vshrl.u32 %v965, 7
    %v967 = vsub.s32 %v964, %v966
    %v968 = vrot.slane %v961, %v967
    %v969 = vcombine.low %v924, %v940
    %v971 = vunpack.c.l.s4 1983009808
    %v972 = vunpack.c.0.s8 %v971
    %v973 = vlaneseq
    %v974 = vshrl.u32 %v973, 7
    %v975 = vsub.s32 %v972, %v974
    %v976 = vrot.slane %v969, %v975
    %v977 = vcombine.low %v952, %v960
    %v978 = vcombine.high %v952, %v960
    %v980 = vunpack.c.l.s4 1934713408
    %v981 = vunpack.c.0.s8 %v980
    %v982 = vlaneseq
    %v983 = vshrl.u32 %v982, 7
    %v984 = vsub.s32 %v981, %v983
    %v985 = vrot.slane %v977, %v984
    %v987 = vunpack.c.l.s4 1934713408
    %v988 = vunpack.c.0.s8 %v987
    %v989 = vlaneseq
    %v990 = vshrl.u32 %v989, 7
    %v991 = vsub.s32 %v988, %v990
    %v992 = vrot.slane %v978, %v991
    %v993 = vcombine.low %v968, %v976
    %v994 = vcombine.high %v968, %v976
    %v996 = vunpack.c.l.s4 1934713408
    %v997 = vunpack.c.0.s8 %v996
    %v998 = vlaneseq
    %v999 = vshrl.u32 %v998, 7
    %v1000 = vsub.s32 %v997, %v999
    %v1001 = vrot.slane %v993, %v1000
    %v1003 = vunpack.c.l.s4 1934713408
    %v1004 = vunpack.c.0.s8 %v1003
    %v1005 = vlaneseq
    %v1006 = vshrl.u32 %v1005, 7
    %v1007 = vsub.s32 %v1004, %v1006
    %v1008 = vrot.slane %v994, %v1007
    %v1009 = vcombine.low %v985, %v1001
    %v1010 = vcombine.high %v985, %v1001
    %v1011 = vcombine.low %v992, %v1008
    %v1012 = vcombine.high %v992, %v1008
    %v1013 = vcombine.low %v873, %v875
    %v1015 = vunpack.c.l.s4 1983009808
    %v1016 = vunpack.c.0.s8 %v1015
    %v1017 = vlaneseq
    %v1018 = vshrl.u32 %v1017, 7
    %v1019 = vsub.s32 %v1016, %v1018
    %v1020 = vrot.slane %v1013, %v1019
    %v1021 = vcombine.low %v874, %v876
    %v1023 = vunpack.c.l.s4 1983009808
    %v1024 = vunpack.c.0.s8 %v1023
    %v1025 = vlaneseq
    %v1026 = vshrl.u32 %v1025, 7
    %v1027 = vsub.s32 %v1024, %v1026
    %v1028 = vrot.slane %v1021, %v1027
    %v1029 = vcombine.low %v941, %v943
    %v1031 = vunpack.c.l.s4 1983009808
    %v1032 = vunpack.c.0.s8 %v1031
    %v1033 = vlaneseq
    %v1034 = vshrl.u32 %v1033, 7
    %v1035 = vsub.s32 %v1032, %v1034
    %v1036 = vrot.slane %v1029, %v1035
    %v1037 = vcombine.low %v942, %v944
    %v1039 = vunpack.c.l.s4 1983009808
    %v1040 = vunpack.c.0.s8 %v1039
    %v1041 = vlaneseq
    %v1042 = vshrl.u32 %v1041, 7
    %v1043 = vsub.s32 %v1040, %v1042
    %v1044 = vrot.slane %v1037, %v1043
    %v1045 = vcombine.low %v1020, %v1028
    %v1046 = vcombine.high %v1020, %v1028
    %v1048 = vunpack.c.l.s4 1934713408
    %v1049 = vunpack.c.0.s8 %v1048
    %v1050 = vlaneseq
    %v1051 = vshrl.u32 %v1050, 7
    %v1052 = vsub.s32 %v1049, %v1051
    %v1053 = vrot.slane %v1045, %v1052
    %v1055 = vunpack.c.l.s4 1934713408
    %v1056 = vunpack.c.0.s8 %v1055
    %v1057 = vlaneseq
    %v1058 = vshrl.u32 %v1057, 7
    %v1059 = vsub.s32 %v1056, %v1058
    %v1060 = vrot.slane %v1046, %v1059
    %v1061 = vcombine.low %v1036, %v1044
    %v1062 = vcombine.high %v1036, %v1044
    %v1064 = vunpack.c.l.s4 1934713408
    %v1065 = vunpack.c.0.s8 %v1064
    %v1066 = vlaneseq
    %v1067 = vshrl.u32 %v1066, 7
    %v1068 = vsub.s32 %v1065, %v1067
    %v1069 = vrot.slane %v1061, %v1068
    %v1071 = vunpack.c.l.s4 1934713408
    %v1072 = vunpack.c.0.s8 %v1071
    %v1073 = vlaneseq
    %v1074 = vshrl.u32 %v1073, 7
    %v1075 = vsub.s32 %v1072, %v1074
    %v1076 = vrot.slane %v1062, %v1075
    %v1077 = vcombine.low %v1053, %v1069
    %v1078 = vcombine.high %v1053, %v1069
    %v1079 = vcombine.low %v1060, %v1076
    %v1080 = vcombine.high %v1060, %v1076
    %v1081 = vpack.c.bf16 %v1009, %v1009
    %v1082 = vpack.c.bf16 %v1010, %v1010
    %v1083 = vpack.c.bf16 %v1011, %v1011
    %v1084 = vpack.c.bf16 %v1012, %v1012
    %v1085 = vpack.c.bf16 %v1077, %v1077
    %v1086 = vpack.c.bf16 %v1078, %v1078
    %v1087 = vpack.c.bf16 %v1079, %v1079
    %v1088 = vpack.c.bf16 %v1080, %v1080
    %vm1089 = vcmask 64512
    %v1091 = vsel %vm1089, %v473, 0
    %v1094 = vsel %vm1089, %v777, 0
    %1096 = vmatprep.subr.bf16.mxu0 0
    %1097 = vmatpush1.bf16.xpose.msra.mxu0 %v1094
    %1098 = vmatprep.subr.bf16.mxu0 0
    %1099 = vmatpush1.bf16.xpose.msra.mxu0 0
    %1100 = vmatprep.subr.bf16.mxu0 0
    %1101 = vmatpush1.bf16.xpose.msra.mxu0 0
    %1102 = vmatprep.subr.bf16.mxu0 0
    %1103 = vmatpush1.bf16.xpose.msra.mxu0 0
    %1104 = vmatprep.subr.bf16.mxu0 0
    %1105 = vmatpush1.bf16.xpose.msra.mxu0 0
    %1106 = vmatprep.subr.bf16.mxu0 0
    %1107 = vmatpush1.bf16.xpose.msra.mxu0 0
    %1108 = vmatprep.subr.bf16.mxu0 0
    %1109 = vmatpush1.bf16.xpose.msra.mxu0 0
    %1110 = vmatprep.subr.bf16.mxu0 0
    %1111 = vmatpush1.bf16.xpose.msra.mxu0 0
    %1112 = vmatprep.subr.bf16.mxu0 0
    %1113 = vmatpush1.bf16.xpose.msra.mxu0 0
    %1114 = vmatprep.subr.bf16.mxu0 0
    %1115 = vmatpush1.bf16.xpose.msra.mxu0 0
    %1116 = vmatprep.subr.bf16.mxu0 0
    %1117 = vmatpush1.bf16.xpose.msra.mxu0 0
    %1118 = vmatprep.subr.bf16.mxu0 0
    %1119 = vmatpush1.bf16.xpose.msra.mxu0 0
    %1120 = vmatprep.subr.bf16.mxu0 0
    %1121 = vmatpush1.bf16.xpose.msra.mxu0 0
    %1122 = vmatprep.subr.bf16.mxu0 0
    %1123 = vmatpush1.bf16.xpose.msra.mxu0 0
    %1124 = vmatprep.subr.bf16.mxu0 0
    %1125 = vmatpush1.bf16.xpose.msra.mxu0 0
    %1126 = vmatprep.subr.bf16.mxu0 0
    %1127 = vmatpush1.bf16.xpose.msra.mxu0 0
    %1128 = vmatprep.mubr.bf16.mxu0 0
    %1129 = vmatmul.mubr.bf16.gmra.mrb[0].mxu0 %v1091
    %v1130 = vpop.f32.mrb[0].mxu0
    %v1131 = vadd.f32 0.0, %v1130
    %v1132 = vpop.f32.mrb[0].mxu0
    %v1133 = vpop.f32.mrb[0].mxu0
    %v1134 = vpop.f32.mrb[0].mxu0
    %1135 = vdwg.mxu0
    %v1137 = vsel %vm1089, %v474, 0
    %v1140 = vsel %vm1089, %v778, 0
    %1142 = vmatprep.subr.bf16.mxu0 0
    %1143 = vmatpush1.bf16.xpose.msra.mxu0 %v1140
    %1144 = vmatprep.subr.bf16.mxu0 0
    %1145 = vmatpush1.bf16.xpose.msra.mxu0 0
    %1146 = vmatprep.subr.bf16.mxu0 0
    %1147 = vmatpush1.bf16.xpose.msra.mxu0 0
    %1148 = vmatprep.subr.bf16.mxu0 0
    %1149 = vmatpush1.bf16.xpose.msra.mxu0 0
    %1150 = vmatprep.subr.bf16.mxu0 0
    %1151 = vmatpush1.bf16.xpose.msra.mxu0 0
    %1152 = vmatprep.subr.bf16.mxu0 0
    %1153 = vmatpush1.bf16.xpose.msra.mxu0 0
    %1154 = vmatprep.subr.bf16.mxu0 0
    %1155 = vmatpush1.bf16.xpose.msra.mxu0 0
    %1156 = vmatprep.subr.bf16.mxu0 0
    %1157 = vmatpush1.bf16.xpose.msra.mxu0 0
    %1158 = vmatprep.subr.bf16.mxu0 0
    %1159 = vmatpush1.bf16.xpose.msra.mxu0 0
    %1160 = vmatprep.subr.bf16.mxu0 0
    %1161 = vmatpush1.bf16.xpose.msra.mxu0 0
    %1162 = vmatprep.subr.bf16.mxu0 0
    %1163 = vmatpush1.bf16.xpose.msra.mxu0 0
    %1164 = vmatprep.subr.bf16.mxu0 0
    %1165 = vmatpush1.bf16.xpose.msra.mxu0 0
    %1166 = vmatprep.subr.bf16.mxu0 0
    %1167 = vmatpush1.bf16.xpose.msra.mxu0 0
    %1168 = vmatprep.subr.bf16.mxu0 0
    %1169 = vmatpush1.bf16.xpose.msra.mxu0 0
    %1170 = vmatprep.subr.bf16.mxu0 0
    %1171 = vmatpush1.bf16.xpose.msra.mxu0 0
    %1172 = vmatprep.subr.bf16.mxu0 0
    %1173 = vmatpush1.bf16.xpose.msra.mxu0 0
    %1174 = vmatprep.mubr.bf16.mxu0 0
    %1175 = vmatmul.mubr.bf16.gmra.mrb[0].mxu0 %v1137
    %v1176 = vpop.f32.mrb[0].mxu0
    %v1177 = vadd.f32 0.0, %v1176
    %v1178 = vpop.f32.mrb[0].mxu0
    %v1179 = vpop.f32.mrb[0].mxu0
    %v1180 = vpop.f32.mrb[0].mxu0
    %1181 = vdwg.mxu0
    %v1183 = vsel %vm1089, %v475, 0
    %v1186 = vsel %vm1089, %v779, 0
    %1188 = vmatprep.subr.bf16.mxu0 0
    %1189 = vmatpush1.bf16.xpose.msra.mxu0 %v1186
    %1190 = vmatprep.subr.bf16.mxu0 0
    %1191 = vmatpush1.bf16.xpose.msra.mxu0 0
    %1192 = vmatprep.subr.bf16.mxu0 0
    %1193 = vmatpush1.bf16.xpose.msra.mxu0 0
    %1194 = vmatprep.subr.bf16.mxu0 0
    %1195 = vmatpush1.bf16.xpose.msra.mxu0 0
    %1196 = vmatprep.subr.bf16.mxu0 0
    %1197 = vmatpush1.bf16.xpose.msra.mxu0 0
    %1198 = vmatprep.subr.bf16.mxu0 0
    %1199 = vmatpush1.bf16.xpose.msra.mxu0 0
    %1200 = vmatprep.subr.bf16.mxu0 0
    %1201 = vmatpush1.bf16.xpose.msra.mxu0 0
    %1202 = vmatprep.subr.bf16.mxu0 0
    %1203 = vmatpush1.bf16.xpose.msra.mxu0 0
    %1204 = vmatprep.subr.bf16.mxu0 0
    %1205 = vmatpush1.bf16.xpose.msra.mxu0 0
    %1206 = vmatprep.subr.bf16.mxu0 0
    %1207 = vmatpush1.bf16.xpose.msra.mxu0 0
    %1208 = vmatprep.subr.bf16.mxu0 0
    %1209 = vmatpush1.bf16.xpose.msra.mxu0 0
    %1210 = vmatprep.subr.bf16.mxu0 0
    %1211 = vmatpush1.bf16.xpose.msra.mxu0 0
    %1212 = vmatprep.subr.bf16.mxu0 0
    %1213 = vmatpush1.bf16.xpose.msra.mxu0 0
    %1214 = vmatprep.subr.bf16.mxu0 0
    %1215 = vmatpush1.bf16.xpose.msra.mxu0 0
    %1216 = vmatprep.subr.bf16.mxu0 0
    %1217 = vmatpush1.bf16.xpose.msra.mxu0 0
    %1218 = vmatprep.subr.bf16.mxu0 0
    %1219 = vmatpush1.bf16.xpose.msra.mxu0 0
    %1220 = vmatprep.mubr.bf16.mxu0 0
    %1221 = vmatmul.mubr.bf16.gmra.mrb[0].mxu0 %v1183
    %v1222 = vpop.f32.mrb[0].mxu0
    %v1223 = vadd.f32 0.0, %v1222
    %v1224 = vpop.f32.mrb[0].mxu0
    %v1225 = vpop.f32.mrb[0].mxu0
    %v1226 = vpop.f32.mrb[0].mxu0
    %1227 = vdwg.mxu0
    %v1229 = vsel %vm1089, %v476, 0
    %v1232 = vsel %vm1089, %v780, 0
    %1234 = vmatprep.subr.bf16.mxu0 0
    %1235 = vmatpush1.bf16.xpose.msra.mxu0 %v1232
    %1236 = vmatprep.subr.bf16.mxu0 0
    %1237 = vmatpush1.bf16.xpose.msra.mxu0 0
    %1238 = vmatprep.subr.bf16.mxu0 0
    %1239 = vmatpush1.bf16.xpose.msra.mxu0 0
    %1240 = vmatprep.subr.bf16.mxu0 0
    %1241 = vmatpush1.bf16.xpose.msra.mxu0 0
    %1242 = vmatprep.subr.bf16.mxu0 0
    %1243 = vmatpush1.bf16.xpose.msra.mxu0 0
    %1244 = vmatprep.subr.bf16.mxu0 0
    %1245 = vmatpush1.bf16.xpose.msra.mxu0 0
    %1246 = vmatprep.subr.bf16.mxu0 0
    %1247 = vmatpush1.bf16.xpose.msra.mxu0 0
    %1248 = vmatprep.subr.bf16.mxu0 0
    %1249 = vmatpush1.bf16.xpose.msra.mxu0 0
    %1250 = vmatprep.subr.bf16.mxu0 0
    %1251 = vmatpush1.bf16.xpose.msra.mxu0 0
    %1252 = vmatprep.subr.bf16.mxu0 0
    %1253 = vmatpush1.bf16.xpose.msra.mxu0 0
    %1254 = vmatprep.subr.bf16.mxu0 0
    %1255 = vmatpush1.bf16.xpose.msra.mxu0 0
    %1256 = vmatprep.subr.bf16.mxu0 0
    %1257 = vmatpush1.bf16.xpose.msra.mxu0 0
    %1258 = vmatprep.subr.bf16.mxu0 0
    %1259 = vmatpush1.bf16.xpose.msra.mxu0 0
    %1260 = vmatprep.subr.bf16.mxu0 0
    %1261 = vmatpush1.bf16.xpose.msra.mxu0 0
    %1262 = vmatprep.subr.bf16.mxu0 0
    %1263 = vmatpush1.bf16.xpose.msra.mxu0 0
    %1264 = vmatprep.subr.bf16.mxu0 0
    %1265 = vmatpush1.bf16.xpose.msra.mxu0 0
    %1266 = vmatprep.mubr.bf16.mxu0 0
    %1267 = vmatmul.mubr.bf16.gmra.mrb[0].mxu0 %v1229
    %v1268 = vpop.f32.mrb[0].mxu0
    %v1269 = vadd.f32 0.0, %v1268
    %v1270 = vpop.f32.mrb[0].mxu0
    %v1271 = vpop.f32.mrb[0].mxu0
    %v1272 = vpop.f32.mrb[0].mxu0
    %1273 = vdwg.mxu0
    %v1275 = vsel %vm1089, %v477, 0
    %v1278 = vsel %vm1089, %v781, 0
    %1280 = vmatprep.subr.bf16.mxu0 0
    %1281 = vmatpush1.bf16.xpose.msra.mxu0 %v1278
    %1282 = vmatprep.subr.bf16.mxu0 0
    %1283 = vmatpush1.bf16.xpose.msra.mxu0 0
    %1284 = vmatprep.subr.bf16.mxu0 0
    %1285 = vmatpush1.bf16.xpose.msra.mxu0 0
    %1286 = vmatprep.subr.bf16.mxu0 0
    %1287 = vmatpush1.bf16.xpose.msra.mxu0 0
    %1288 = vmatprep.subr.bf16.mxu0 0
    %1289 = vmatpush1.bf16.xpose.msra.mxu0 0
    %1290 = vmatprep.subr.bf16.mxu0 0
    %1291 = vmatpush1.bf16.xpose.msra.mxu0 0
    %1292 = vmatprep.subr.bf16.mxu0 0
    %1293 = vmatpush1.bf16.xpose.msra.mxu0 0
    %1294 = vmatprep.subr.bf16.mxu0 0
    %1295 = vmatpush1.bf16.xpose.msra.mxu0 0
    %1296 = vmatprep.subr.bf16.mxu0 0
    %1297 = vmatpush1.bf16.xpose.msra.mxu0 0
    %1298 = vmatprep.subr.bf16.mxu0 0
    %1299 = vmatpush1.bf16.xpose.msra.mxu0 0
    %1300 = vmatprep.subr.bf16.mxu0 0
    %1301 = vmatpush1.bf16.xpose.msra.mxu0 0
    %1302 = vmatprep.subr.bf16.mxu0 0
    %1303 = vmatpush1.bf16.xpose.msra.mxu0 0
    %1304 = vmatprep.subr.bf16.mxu0 0
    %1305 = vmatpush1.bf16.xpose.msra.mxu0 0
    %1306 = vmatprep.subr.bf16.mxu0 0
    %1307 = vmatpush1.bf16.xpose.msra.mxu0 0
    %1308 = vmatprep.subr.bf16.mxu0 0
    %1309 = vmatpush1.bf16.xpose.msra.mxu0 0
    %1310 = vmatprep.subr.bf16.mxu0 0
    %1311 = vmatpush1.bf16.xpose.msra.mxu0 0
    %1312 = vmatprep.mubr.bf16.mxu0 0
    %1313 = vmatmul.mubr.bf16.gmra.mrb[0].mxu0 %v1275
    %v1314 = vpop.f32.mrb[0].mxu0
    %v1315 = vadd.f32 0.0, %v1314
    %v1316 = vpop.f32.mrb[0].mxu0
    %v1317 = vpop.f32.mrb[0].mxu0
    %v1318 = vpop.f32.mrb[0].mxu0
    %1319 = vdwg.mxu0
    %v1321 = vsel %vm1089, %v478, 0
    %v1324 = vsel %vm1089, %v782, 0
    %1326 = vmatprep.subr.bf16.mxu0 0
    %1327 = vmatpush1.bf16.xpose.msra.mxu0 %v1324
    %1328 = vmatprep.subr.bf16.mxu0 0
    %1329 = vmatpush1.bf16.xpose.msra.mxu0 0
    %1330 = vmatprep.subr.bf16.mxu0 0
    %1331 = vmatpush1.bf16.xpose.msra.mxu0 0
    %1332 = vmatprep.subr.bf16.mxu0 0
    %1333 = vmatpush1.bf16.xpose.msra.mxu0 0
    %1334 = vmatprep.subr.bf16.mxu0 0
    %1335 = vmatpush1.bf16.xpose.msra.mxu0 0
    %1336 = vmatprep.subr.bf16.mxu0 0
    %1337 = vmatpush1.bf16.xpose.msra.mxu0 0
    %1338 = vmatprep.subr.bf16.mxu0 0
    %1339 = vmatpush1.bf16.xpose.msra.mxu0 0
    %1340 = vmatprep.subr.bf16.mxu0 0
    %1341 = vmatpush1.bf16.xpose.msra.mxu0 0
    %1342 = vmatprep.subr.bf16.mxu0 0
    %1343 = vmatpush1.bf16.xpose.msra.mxu0 0
    %1344 = vmatprep.subr.bf16.mxu0 0
    %1345 = vmatpush1.bf16.xpose.msra.mxu0 0
    %1346 = vmatprep.subr.bf16.mxu0 0
    %1347 = vmatpush1.bf16.xpose.msra.mxu0 0
    %1348 = vmatprep.subr.bf16.mxu0 0
    %1349 = vmatpush1.bf16.xpose.msra.mxu0 0
    %1350 = vmatprep.subr.bf16.mxu0 0
    %1351 = vmatpush1.bf16.xpose.msra.mxu0 0
    %1352 = vmatprep.subr.bf16.mxu0 0
    %1353 = vmatpush1.bf16.xpose.msra.mxu0 0
    %1354 = vmatprep.subr.bf16.mxu0 0
    %1355 = vmatpush1.bf16.xpose.msra.mxu0 0
    %1356 = vmatprep.subr.bf16.mxu0 0
    %1357 = vmatpush1.bf16.xpose.msra.mxu0 0
    %1358 = vmatprep.mubr.bf16.mxu0 0
    %1359 = vmatmul.mubr.bf16.gmra.mrb[0].mxu0 %v1321
    %v1360 = vpop.f32.mrb[0].mxu0
    %v1361 = vadd.f32 0.0, %v1360
    %v1362 = vpop.f32.mrb[0].mxu0
    %v1363 = vpop.f32.mrb[0].mxu0
    %v1364 = vpop.f32.mrb[0].mxu0
    %1365 = vdwg.mxu0
    %v1367 = vsel %vm1089, %v479, 0
    %v1370 = vsel %vm1089, %v783, 0
    %1372 = vmatprep.subr.bf16.mxu0 0
    %1373 = vmatpush1.bf16.xpose.msra.mxu0 %v1370
    %1374 = vmatprep.subr.bf16.mxu0 0
    %1375 = vmatpush1.bf16.xpose.msra.mxu0 0
    %1376 = vmatprep.subr.bf16.mxu0 0
    %1377 = vmatpush1.bf16.xpose.msra.mxu0 0
    %1378 = vmatprep.subr.bf16.mxu0 0
    %1379 = vmatpush1.bf16.xpose.msra.mxu0 0
    %1380 = vmatprep.subr.bf16.mxu0 0
    %1381 = vmatpush1.bf16.xpose.msra.mxu0 0
    %1382 = vmatprep.subr.bf16.mxu0 0
    %1383 = vmatpush1.bf16.xpose.msra.mxu0 0
    %1384 = vmatprep.subr.bf16.mxu0 0
    %1385 = vmatpush1.bf16.xpose.msra.mxu0 0
    %1386 = vmatprep.subr.bf16.mxu0 0
    %1387 = vmatpush1.bf16.xpose.msra.mxu0 0
    %1388 = vmatprep.subr.bf16.mxu0 0
    %1389 = vmatpush1.bf16.xpose.msra.mxu0 0
    %1390 = vmatprep.subr.bf16.mxu0 0
    %1391 = vmatpush1.bf16.xpose.msra.mxu0 0
    %1392 = vmatprep.subr.bf16.mxu0 0
    %1393 = vmatpush1.bf16.xpose.msra.mxu0 0
    %1394 = vmatprep.subr.bf16.mxu0 0
    %1395 = vmatpush1.bf16.xpose.msra.mxu0 0
    %1396 = vmatprep.subr.bf16.mxu0 0
    %1397 = vmatpush1.bf16.xpose.msra.mxu0 0
    %1398 = vmatprep.subr.bf16.mxu0 0
    %1399 = vmatpush1.bf16.xpose.msra.mxu0 0
    %1400 = vmatprep.subr.bf16.mxu0 0
    %1401 = vmatpush1.bf16.xpose.msra.mxu0 0
    %1402 = vmatprep.subr.bf16.mxu0 0
    %1403 = vmatpush1.bf16.xpose.msra.mxu0 0
    %1404 = vmatprep.mubr.bf16.mxu0 0
    %1405 = vmatmul.mubr.bf16.gmra.mrb[0].mxu0 %v1367
    %v1406 = vpop.f32.mrb[0].mxu0
    %v1407 = vadd.f32 0.0, %v1406
    %v1408 = vpop.f32.mrb[0].mxu0
    %v1409 = vpop.f32.mrb[0].mxu0
    %v1410 = vpop.f32.mrb[0].mxu0
    %1411 = vdwg.mxu0
    %v1413 = vsel %vm1089, %v480, 0
    %v1416 = vsel %vm1089, %v784, 0
    %1418 = vmatprep.subr.bf16.mxu0 0
    %1419 = vmatpush1.bf16.xpose.msra.mxu0 %v1416
    %1420 = vmatprep.subr.bf16.mxu0 0
    %1421 = vmatpush1.bf16.xpose.msra.mxu0 0
    %1422 = vmatprep.subr.bf16.mxu0 0
    %1423 = vmatpush1.bf16.xpose.msra.mxu0 0
    %1424 = vmatprep.subr.bf16.mxu0 0
    %1425 = vmatpush1.bf16.xpose.msra.mxu0 0
    %1426 = vmatprep.subr.bf16.mxu0 0
    %1427 = vmatpush1.bf16.xpose.msra.mxu0 0
    %1428 = vmatprep.subr.bf16.mxu0 0
    %1429 = vmatpush1.bf16.xpose.msra.mxu0 0
    %1430 = vmatprep.subr.bf16.mxu0 0
    %1431 = vmatpush1.bf16.xpose.msra.mxu0 0
    %1432 = vmatprep.subr.bf16.mxu0 0
    %1433 = vmatpush1.bf16.xpose.msra.mxu0 0
    %1434 = vmatprep.subr.bf16.mxu0 0
    %1435 = vmatpush1.bf16.xpose.msra.mxu0 0
    %1436 = vmatprep.subr.bf16.mxu0 0
    %1437 = vmatpush1.bf16.xpose.msra.mxu0 0
    %1438 = vmatprep.subr.bf16.mxu0 0
    %1439 = vmatpush1.bf16.xpose.msra.mxu0 0
    %1440 = vmatprep.subr.bf16.mxu0 0
    %1441 = vmatpush1.bf16.xpose.msra.mxu0 0
    %1442 = vmatprep.subr.bf16.mxu0 0
    %1443 = vmatpush1.bf16.xpose.msra.mxu0 0
    %1444 = vmatprep.subr.bf16.mxu0 0
    %1445 = vmatpush1.bf16.xpose.msra.mxu0 0
    %1446 = vmatprep.subr.bf16.mxu0 0
    %1447 = vmatpush1.bf16.xpose.msra.mxu0 0
    %1448 = vmatprep.subr.bf16.mxu0 0
    %1449 = vmatpush1.bf16.xpose.msra.mxu0 0
    %1450 = vmatprep.mubr.bf16.mxu0 0
    %1451 = vmatmul.mubr.bf16.gmra.mrb[0].mxu0 %v1413
    %v1452 = vpop.f32.mrb[0].mxu0
    %v1453 = vadd.f32 0.0, %v1452
    %v1454 = vpop.f32.mrb[0].mxu0
    %v1455 = vpop.f32.mrb[0].mxu0
    %v1456 = vpop.f32.mrb[0].mxu0
    %1457 = vdwg.mxu0
    %v1458 = vsel %vm1089, %v1131, -inf
    %1459 = vmax.xlane.f32.xlu0 %v1458
    %v1460 = vpop.xlane.xlu0 %1459
    %v1461 = vsel %vm1089, %v1177, -inf
    %1462 = vmax.xlane.f32.xlu0 %v1461
    %v1463 = vpop.xlane.xlu0 %1462
    %v1464 = vsel %vm1089, %v1223, -inf
    %1465 = vmax.xlane.f32.xlu0 %v1464
    %v1466 = vpop.xlane.xlu0 %1465
    %v1467 = vsel %vm1089, %v1269, -inf
    %1468 = vmax.xlane.f32.xlu0 %v1467
    %v1469 = vpop.xlane.xlu0 %1468
    %v1470 = vsel %vm1089, %v1315, -inf
    %1471 = vmax.xlane.f32.xlu0 %v1470
    %v1472 = vpop.xlane.xlu0 %1471
    %v1473 = vsel %vm1089, %v1361, -inf
    %1474 = vmax.xlane.f32.xlu0 %v1473
    %v1475 = vpop.xlane.xlu0 %1474
    %v1476 = vsel %vm1089, %v1407, -inf
    %1477 = vmax.xlane.f32.xlu0 %v1476
    %v1478 = vpop.xlane.xlu0 %1477
    %v1479 = vsel %vm1089, %v1453, -inf
    %1480 = vmax.xlane.f32.xlu0 %v1479
    %v1481 = vpop.xlane.xlu0 %1480
    %v1482 = vsub.f32 %v1131, %v1460
    %v1483 = vsub.f32 %v1177, %v1463
    %v1484 = vsub.f32 %v1223, %v1466
    %v1485 = vsub.f32 %v1269, %v1469
    %v1486 = vsub.f32 %v1315, %v1472
    %v1487 = vsub.f32 %v1361, %v1475
    %v1488 = vsub.f32 %v1407, %v1478
    %v1489 = vsub.f32 %v1453, %v1481
    %v1490 = vmul.f32 %v1482, 1.442695
    %v1491 = vpow.pop %v1490
    %v1492 = vmul.f32 %v1483, 1.442695
    %v1493 = vpow.pop %v1492
    %v1494 = vmul.f32 %v1484, 1.442695
    %v1495 = vpow.pop %v1494
    %v1496 = vmul.f32 %v1485, 1.442695
    %v1497 = vpow.pop %v1496
    %v1498 = vmul.f32 %v1486, 1.442695
    %v1499 = vpow.pop %v1498
    %v1500 = vmul.f32 %v1487, 1.442695
    %v1501 = vpow.pop %v1500
    %v1502 = vmul.f32 %v1488, 1.442695
    %v1503 = vpow.pop %v1502
    %v1504 = vmul.f32 %v1489, 1.442695
    %v1505 = vpow.pop %v1504
    %v1506 = vsel %vm1089, %v1491, 0.0
    %1507 = vadd.xlane.f32.xlu0 %v1506
    %v1508 = vpop.xlane.xlu0 %1507
    %v1509 = vsel %vm1089, %v1493, 0.0
    %1510 = vadd.xlane.f32.xlu0 %v1509
    %v1511 = vpop.xlane.xlu0 %1510
    %v1512 = vsel %vm1089, %v1495, 0.0
    %1513 = vadd.xlane.f32.xlu0 %v1512
    %v1514 = vpop.xlane.xlu0 %1513
    %v1515 = vsel %vm1089, %v1497, 0.0
    %1516 = vadd.xlane.f32.xlu0 %v1515
    %v1517 = vpop.xlane.xlu0 %1516
    %v1518 = vsel %vm1089, %v1499, 0.0
    %1519 = vadd.xlane.f32.xlu0 %v1518
    %v1520 = vpop.xlane.xlu0 %1519
    %v1521 = vsel %vm1089, %v1501, 0.0
    %1522 = vadd.xlane.f32.xlu0 %v1521
    %v1523 = vpop.xlane.xlu0 %1522
    %v1524 = vsel %vm1089, %v1503, 0.0
    %1525 = vadd.xlane.f32.xlu0 %v1524
    %v1526 = vpop.xlane.xlu0 %1525
    %v1527 = vsel %vm1089, %v1505, 0.0
    %1528 = vadd.xlane.f32.xlu0 %v1527
    %v1529 = vpop.xlane.xlu0 %1528
    %v1530 = vrcp.pop %v1508
    %v1531 = vrcp.pop %v1511
    %v1532 = vrcp.pop %v1514
    %v1533 = vrcp.pop %v1517
    %v1534 = vrcp.pop %v1520
    %v1535 = vrcp.pop %v1523
    %v1536 = vrcp.pop %v1526
    %v1537 = vrcp.pop %v1529
    %v1538 = vmul.f32 %v1491, %v1530
    %v1539 = vmul.f32 %v1493, %v1531
    %v1540 = vmul.f32 %v1495, %v1532
    %v1541 = vmul.f32 %v1497, %v1533
    %v1542 = vmul.f32 %v1499, %v1534
    %v1543 = vmul.f32 %v1501, %v1535
    %v1544 = vmul.f32 %v1503, %v1536
    %v1545 = vmul.f32 %v1505, %v1537
    %v1546 = vpack.c.bf16 %v1538, %v1538
    %v1547 = vpack.c.bf16 %v1539, %v1539
    %v1548 = vpack.c.bf16 %v1540, %v1540
    %v1549 = vpack.c.bf16 %v1541, %v1541
    %v1550 = vpack.c.bf16 %v1542, %v1542
    %v1551 = vpack.c.bf16 %v1543, %v1543
    %v1552 = vpack.c.bf16 %v1544, %v1544
    %v1553 = vpack.c.bf16 %v1545, %v1545
    %v1555 = vsel %vm1089, %v1546, 0
    %vm1557 = vcmask 1043456
    %v1559 = vsel %vm1557, %v1081, 0
    %1561 = vmatprep.subr.bf16.mxu0 0
    %1562 = vmatpush1.bf16.msra.mxu0 %v1559
    %1563 = vmatprep.subr.bf16.mxu0 0
    %1564 = vmatpush1.bf16.msra.mxu0 0
    %1565 = vmatprep.subr.bf16.mxu0 0
    %1566 = vmatpush1.bf16.msra.mxu0 0
    %1567 = vmatprep.subr.bf16.mxu0 0
    %1568 = vmatpush1.bf16.msra.mxu0 0
    %1569 = vmatprep.subr.bf16.mxu0 0
    %1570 = vmatpush1.bf16.msra.mxu0 0
    %1571 = vmatprep.subr.bf16.mxu0 0
    %1572 = vmatpush1.bf16.msra.mxu0 0
    %1573 = vmatprep.subr.bf16.mxu0 0
    %1574 = vmatpush1.bf16.msra.mxu0 0
    %1575 = vmatprep.subr.bf16.mxu0 0
    %1576 = vmatpush1.bf16.msra.mxu0 0
    %1577 = vmatprep.subr.bf16.mxu0 0
    %1578 = vmatpush1.bf16.msra.mxu0 0
    %1579 = vmatprep.subr.bf16.mxu0 0
    %1580 = vmatpush1.bf16.msra.mxu0 0
    %1581 = vmatprep.subr.bf16.mxu0 0
    %1582 = vmatpush1.bf16.msra.mxu0 0
    %1583 = vmatprep.subr.bf16.mxu0 0
    %1584 = vmatpush1.bf16.msra.mxu0 0
    %1585 = vmatprep.subr.bf16.mxu0 0
    %1586 = vmatpush1.bf16.msra.mxu0 0
    %1587 = vmatprep.subr.bf16.mxu0 0
    %1588 = vmatpush1.bf16.msra.mxu0 0
    %1589 = vmatprep.subr.bf16.mxu0 0
    %1590 = vmatpush1.bf16.msra.mxu0 0
    %1591 = vmatprep.subr.bf16.mxu0 0
    %1592 = vmatpush1.bf16.msra.mxu0 0
    %1593 = vmatprep.mubr.bf16.mxu0 0
    %1594 = vmatmul.mubr.bf16.gmra.mrb[0].mxu0 %v1555
    %v1595 = vpop.f32.mrb[0].mxu0
    %v1596 = vadd.f32 0.0, %v1595
    %v1597 = vpop.f32.mrb[0].mxu0
    %v1598 = vpop.f32.mrb[0].mxu0
    %v1599 = vpop.f32.mrb[0].mxu0
    %1600 = vdwg.mxu0
    %v1602 = vsel %vm1089, %v1547, 0
    %v1605 = vsel %vm1557, %v1082, 0
    %1607 = vmatprep.subr.bf16.mxu0 0
    %1608 = vmatpush1.bf16.msra.mxu0 %v1605
    %1609 = vmatprep.subr.bf16.mxu0 0
    %1610 = vmatpush1.bf16.msra.mxu0 0
    %1611 = vmatprep.subr.bf16.mxu0 0
    %1612 = vmatpush1.bf16.msra.mxu0 0
    %1613 = vmatprep.subr.bf16.mxu0 0
    %1614 = vmatpush1.bf16.msra.mxu0 0
    %1615 = vmatprep.subr.bf16.mxu0 0
    %1616 = vmatpush1.bf16.msra.mxu0 0
    %1617 = vmatprep.subr.bf16.mxu0 0
    %1618 = vmatpush1.bf16.msra.mxu0 0
    %1619 = vmatprep.subr.bf16.mxu0 0
    %1620 = vmatpush1.bf16.msra.mxu0 0
    %1621 = vmatprep.subr.bf16.mxu0 0
    %1622 = vmatpush1.bf16.msra.mxu0 0
    %1623 = vmatprep.subr.bf16.mxu0 0
    %1624 = vmatpush1.bf16.msra.mxu0 0
    %1625 = vmatprep.subr.bf16.mxu0 0
    %1626 = vmatpush1.bf16.msra.mxu0 0
    %1627 = vmatprep.subr.bf16.mxu0 0
    %1628 = vmatpush1.bf16.msra.mxu0 0
    %1629 = vmatprep.subr.bf16.mxu0 0
    %1630 = vmatpush1.bf16.msra.mxu0 0
    %1631 = vmatprep.subr.bf16.mxu0 0
    %1632 = vmatpush1.bf16.msra.mxu0 0
    %1633 = vmatprep.subr.bf16.mxu0 0
    %1634 = vmatpush1.bf16.msra.mxu0 0
    %1635 = vmatprep.subr.bf16.mxu0 0
    %1636 = vmatpush1.bf16.msra.mxu0 0
    %1637 = vmatprep.subr.bf16.mxu0 0
    %1638 = vmatpush1.bf16.msra.mxu0 0
    %1639 = vmatprep.mubr.bf16.mxu0 0
    %1640 = vmatmul.mubr.bf16.gmra.mrb[0].mxu0 %v1602
    %v1641 = vpop.f32.mrb[0].mxu0
    %v1642 = vadd.f32 0.0, %v1641
    %v1643 = vpop.f32.mrb[0].mxu0
    %v1644 = vpop.f32.mrb[0].mxu0
    %v1645 = vpop.f32.mrb[0].mxu0
    %1646 = vdwg.mxu0
    %v1648 = vsel %vm1089, %v1548, 0
    %v1651 = vsel %vm1557, %v1083, 0
    %1653 = vmatprep.subr.bf16.mxu0 0
    %1654 = vmatpush1.bf16.msra.mxu0 %v1651
    %1655 = vmatprep.subr.bf16.mxu0 0
    %1656 = vmatpush1.bf16.msra.mxu0 0
    %1657 = vmatprep.subr.bf16.mxu0 0
    %1658 = vmatpush1.bf16.msra.mxu0 0
    %1659 = vmatprep.subr.bf16.mxu0 0
    %1660 = vmatpush1.bf16.msra.mxu0 0
    %1661 = vmatprep.subr.bf16.mxu0 0
    %1662 = vmatpush1.bf16.msra.mxu0 0
    %1663 = vmatprep.subr.bf16.mxu0 0
    %1664 = vmatpush1.bf16.msra.mxu0 0
    %1665 = vmatprep.subr.bf16.mxu0 0
    %1666 = vmatpush1.bf16.msra.mxu0 0
    %1667 = vmatprep.subr.bf16.mxu0 0
    %1668 = vmatpush1.bf16.msra.mxu0 0
    %1669 = vmatprep.subr.bf16.mxu0 0
    %1670 = vmatpush1.bf16.msra.mxu0 0
    %1671 = vmatprep.subr.bf16.mxu0 0
    %1672 = vmatpush1.bf16.msra.mxu0 0
    %1673 = vmatprep.subr.bf16.mxu0 0
    %1674 = vmatpush1.bf16.msra.mxu0 0
    %1675 = vmatprep.subr.bf16.mxu0 0
    %1676 = vmatpush1.bf16.msra.mxu0 0
    %1677 = vmatprep.subr.bf16.mxu0 0
    %1678 = vmatpush1.bf16.msra.mxu0 0
    %1679 = vmatprep.subr.bf16.mxu0 0
    %1680 = vmatpush1.bf16.msra.mxu0 0
    %1681 = vmatprep.subr.bf16.mxu0 0
    %1682 = vmatpush1.bf16.msra.mxu0 0
    %1683 = vmatprep.subr.bf16.mxu0 0
    %1684 = vmatpush1.bf16.msra.mxu0 0
    %1685 = vmatprep.mubr.bf16.mxu0 0
    %1686 = vmatmul.mubr.bf16.gmra.mrb[0].mxu0 %v1648
    %v1687 = vpop.f32.mrb[0].mxu0
    %v1688 = vadd.f32 0.0, %v1687
    %v1689 = vpop.f32.mrb[0].mxu0
    %v1690 = vpop.f32.mrb[0].mxu0
    %v1691 = vpop.f32.mrb[0].mxu0
    %1692 = vdwg.mxu0
    %v1694 = vsel %vm1089, %v1549, 0
    %v1697 = vsel %vm1557, %v1084, 0
    %1699 = vmatprep.subr.bf16.mxu0 0
    %1700 = vmatpush1.bf16.msra.mxu0 %v1697
    %1701 = vmatprep.subr.bf16.mxu0 0
    %1702 = vmatpush1.bf16.msra.mxu0 0
    %1703 = vmatprep.subr.bf16.mxu0 0
    %1704 = vmatpush1.bf16.msra.mxu0 0
    %1705 = vmatprep.subr.bf16.mxu0 0
    %1706 = vmatpush1.bf16.msra.mxu0 0
    %1707 = vmatprep.subr.bf16.mxu0 0
    %1708 = vmatpush1.bf16.msra.mxu0 0
    %1709 = vmatprep.subr.bf16.mxu0 0
    %1710 = vmatpush1.bf16.msra.mxu0 0
    %1711 = vmatprep.subr.bf16.mxu0 0
    %1712 = vmatpush1.bf16.msra.mxu0 0
    %1713 = vmatprep.subr.bf16.mxu0 0
    %1714 = vmatpush1.bf16.msra.mxu0 0
    %1715 = vmatprep.subr.bf16.mxu0 0
    %1716 = vmatpush1.bf16.msra.mxu0 0
    %1717 = vmatprep.subr.bf16.mxu0 0
    %1718 = vmatpush1.bf16.msra.mxu0 0
    %1719 = vmatprep.subr.bf16.mxu0 0
    %1720 = vmatpush1.bf16.msra.mxu0 0
    %1721 = vmatprep.subr.bf16.mxu0 0
    %1722 = vmatpush1.bf16.msra.mxu0 0
    %1723 = vmatprep.subr.bf16.mxu0 0
    %1724 = vmatpush1.bf16.msra.mxu0 0
    %1725 = vmatprep.subr.bf16.mxu0 0
    %1726 = vmatpush1.bf16.msra.mxu0 0
    %1727 = vmatprep.subr.bf16.mxu0 0
    %1728 = vmatpush1.bf16.msra.mxu0 0
    %1729 = vmatprep.subr.bf16.mxu0 0
    %1730 = vmatpush1.bf16.msra.mxu0 0
    %1731 = vmatprep.mubr.bf16.mxu0 0
    %1732 = vmatmul.mubr.bf16.gmra.mrb[0].mxu0 %v1694
    %v1733 = vpop.f32.mrb[0].mxu0
    %v1734 = vadd.f32 0.0, %v1733
    %v1735 = vpop.f32.mrb[0].mxu0
    %v1736 = vpop.f32.mrb[0].mxu0
    %v1737 = vpop.f32.mrb[0].mxu0
    %1738 = vdwg.mxu0
    %v1740 = vsel %vm1089, %v1550, 0
    %v1743 = vsel %vm1557, %v1085, 0
    %1745 = vmatprep.subr.bf16.mxu0 0
    %1746 = vmatpush1.bf16.msra.mxu0 %v1743
    %1747 = vmatprep.subr.bf16.mxu0 0
    %1748 = vmatpush1.bf16.msra.mxu0 0
    %1749 = vmatprep.subr.bf16.mxu0 0
    %1750 = vmatpush1.bf16.msra.mxu0 0
    %1751 = vmatprep.subr.bf16.mxu0 0
    %1752 = vmatpush1.bf16.msra.mxu0 0
    %1753 = vmatprep.subr.bf16.mxu0 0
    %1754 = vmatpush1.bf16.msra.mxu0 0
    %1755 = vmatprep.subr.bf16.mxu0 0
    %1756 = vmatpush1.bf16.msra.mxu0 0
    %1757 = vmatprep.subr.bf16.mxu0 0
    %1758 = vmatpush1.bf16.msra.mxu0 0
    %1759 = vmatprep.subr.bf16.mxu0 0
    %1760 = vmatpush1.bf16.msra.mxu0 0
    %1761 = vmatprep.subr.bf16.mxu0 0
    %1762 = vmatpush1.bf16.msra.mxu0 0
    %1763 = vmatprep.subr.bf16.mxu0 0
    %1764 = vmatpush1.bf16.msra.mxu0 0
    %1765 = vmatprep.subr.bf16.mxu0 0
    %1766 = vmatpush1.bf16.msra.mxu0 0
    %1767 = vmatprep.subr.bf16.mxu0 0
    %1768 = vmatpush1.bf16.msra.mxu0 0
    %1769 = vmatprep.subr.bf16.mxu0 0
    %1770 = vmatpush1.bf16.msra.mxu0 0
    %1771 = vmatprep.subr.bf16.mxu0 0
    %1772 = vmatpush1.bf16.msra.mxu0 0
    %1773 = vmatprep.subr.bf16.mxu0 0
    %1774 = vmatpush1.bf16.msra.mxu0 0
    %1775 = vmatprep.subr.bf16.mxu0 0
    %1776 = vmatpush1.bf16.msra.mxu0 0
    %1777 = vmatprep.mubr.bf16.mxu0 0
    %1778 = vmatmul.mubr.bf16.gmra.mrb[0].mxu0 %v1740
    %v1779 = vpop.f32.mrb[0].mxu0
    %v1780 = vadd.f32 0.0, %v1779
    %v1781 = vpop.f32.mrb[0].mxu0
    %v1782 = vpop.f32.mrb[0].mxu0
    %v1783 = vpop.f32.mrb[0].mxu0
    %1784 = vdwg.mxu0
    %v1786 = vsel %vm1089, %v1551, 0
    %v1789 = vsel %vm1557, %v1086, 0
    %1791 = vmatprep.subr.bf16.mxu0 0
    %1792 = vmatpush1.bf16.msra.mxu0 %v1789
    %1793 = vmatprep.subr.bf16.mxu0 0
    %1794 = vmatpush1.bf16.msra.mxu0 0
    %1795 = vmatprep.subr.bf16.mxu0 0
    %1796 = vmatpush1.bf16.msra.mxu0 0
    %1797 = vmatprep.subr.bf16.mxu0 0
    %1798 = vmatpush1.bf16.msra.mxu0 0
    %1799 = vmatprep.subr.bf16.mxu0 0
    %1800 = vmatpush1.bf16.msra.mxu0 0
    %1801 = vmatprep.subr.bf16.mxu0 0
    %1802 = vmatpush1.bf16.msra.mxu0 0
    %1803 = vmatprep.subr.bf16.mxu0 0
    %1804 = vmatpush1.bf16.msra.mxu0 0
    %1805 = vmatprep.subr.bf16.mxu0 0
    %1806 = vmatpush1.bf16.msra.mxu0 0
    %1807 = vmatprep.subr.bf16.mxu0 0
    %1808 = vmatpush1.bf16.msra.mxu0 0
    %1809 = vmatprep.subr.bf16.mxu0 0
    %1810 = vmatpush1.bf16.msra.mxu0 0
    %1811 = vmatprep.subr.bf16.mxu0 0
    %1812 = vmatpush1.bf16.msra.mxu0 0
    %1813 = vmatprep.subr.bf16.mxu0 0
    %1814 = vmatpush1.bf16.msra.mxu0 0
    %1815 = vmatprep.subr.bf16.mxu0 0
    %1816 = vmatpush1.bf16.msra.mxu0 0
    %1817 = vmatprep.subr.bf16.mxu0 0
    %1818 = vmatpush1.bf16.msra.mxu0 0
    %1819 = vmatprep.subr.bf16.mxu0 0
    %1820 = vmatpush1.bf16.msra.mxu0 0
    %1821 = vmatprep.subr.bf16.mxu0 0
    %1822 = vmatpush1.bf16.msra.mxu0 0
    %1823 = vmatprep.mubr.bf16.mxu0 0
    %1824 = vmatmul.mubr.bf16.gmra.mrb[0].mxu0 %v1786
    %v1825 = vpop.f32.mrb[0].mxu0
    %v1826 = vadd.f32 0.0, %v1825
    %v1827 = vpop.f32.mrb[0].mxu0
    %v1828 = vpop.f32.mrb[0].mxu0
    %v1829 = vpop.f32.mrb[0].mxu0
    %1830 = vdwg.mxu0
    %v1832 = vsel %vm1089, %v1552, 0
    %v1835 = vsel %vm1557, %v1087, 0
    %1837 = vmatprep.subr.bf16.mxu0 0
    %1838 = vmatpush1.bf16.msra.mxu0 %v1835
    %1839 = vmatprep.subr.bf16.mxu0 0
    %1840 = vmatpush1.bf16.msra.mxu0 0
    %1841 = vmatprep.subr.bf16.mxu0 0
    %1842 = vmatpush1.bf16.msra.mxu0 0
    %1843 = vmatprep.subr.bf16.mxu0 0
    %1844 = vmatpush1.bf16.msra.mxu0 0
    %1845 = vmatprep.subr.bf16.mxu0 0
    %1846 = vmatpush1.bf16.msra.mxu0 0
    %1847 = vmatprep.subr.bf16.mxu0 0
    %1848 = vmatpush1.bf16.msra.mxu0 0
    %1849 = vmatprep.subr.bf16.mxu0 0
    %1850 = vmatpush1.bf16.msra.mxu0 0
    %1851 = vmatprep.subr.bf16.mxu0 0
    %1852 = vmatpush1.bf16.msra.mxu0 0
    %1853 = vmatprep.subr.bf16.mxu0 0
    %1854 = vmatpush1.bf16.msra.mxu0 0
    %1855 = vmatprep.subr.bf16.mxu0 0
    %1856 = vmatpush1.bf16.msra.mxu0 0
    %1857 = vmatprep.subr.bf16.mxu0 0
    %1858 = vmatpush1.bf16.msra.mxu0 0
    %1859 = vmatprep.subr.bf16.mxu0 0
    %1860 = vmatpush1.bf16.msra.mxu0 0
    %1861 = vmatprep.subr.bf16.mxu0 0
    %1862 = vmatpush1.bf16.msra.mxu0 0
    %1863 = vmatprep.subr.bf16.mxu0 0
    %1864 = vmatpush1.bf16.msra.mxu0 0
    %1865 = vmatprep.subr.bf16.mxu0 0
    %1866 = vmatpush1.bf16.msra.mxu0 0
    %1867 = vmatprep.subr.bf16.mxu0 0
    %1868 = vmatpush1.bf16.msra.mxu0 0
    %1869 = vmatprep.mubr.bf16.mxu0 0
    %1870 = vmatmul.mubr.bf16.gmra.mrb[0].mxu0 %v1832
    %v1871 = vpop.f32.mrb[0].mxu0
    %v1872 = vadd.f32 0.0, %v1871
    %v1873 = vpop.f32.mrb[0].mxu0
    %v1874 = vpop.f32.mrb[0].mxu0
    %v1875 = vpop.f32.mrb[0].mxu0
    %1876 = vdwg.mxu0
    %v1878 = vsel %vm1089, %v1553, 0
    %v1881 = vsel %vm1557, %v1088, 0
    %1883 = vmatprep.subr.bf16.mxu0 0
    %1884 = vmatpush1.bf16.msra.mxu0 %v1881
    %1885 = vmatprep.subr.bf16.mxu0 0
    %1886 = vmatpush1.bf16.msra.mxu0 0
    %1887 = vmatprep.subr.bf16.mxu0 0
    %1888 = vmatpush1.bf16.msra.mxu0 0
    %1889 = vmatprep.subr.bf16.mxu0 0
    %1890 = vmatpush1.bf16.msra.mxu0 0
    %1891 = vmatprep.subr.bf16.mxu0 0
    %1892 = vmatpush1.bf16.msra.mxu0 0
    %1893 = vmatprep.subr.bf16.mxu0 0
    %1894 = vmatpush1.bf16.msra.mxu0 0
    %1895 = vmatprep.subr.bf16.mxu0 0
    %1896 = vmatpush1.bf16.msra.mxu0 0
    %1897 = vmatprep.subr.bf16.mxu0 0
    %1898 = vmatpush1.bf16.msra.mxu0 0
    %1899 = vmatprep.subr.bf16.mxu0 0
    %1900 = vmatpush1.bf16.msra.mxu0 0
    %1901 = vmatprep.subr.bf16.mxu0 0
    %1902 = vmatpush1.bf16.msra.mxu0 0
    %1903 = vmatprep.subr.bf16.mxu0 0
    %1904 = vmatpush1.bf16.msra.mxu0 0
    %1905 = vmatprep.subr.bf16.mxu0 0
    %1906 = vmatpush1.bf16.msra.mxu0 0
    %1907 = vmatprep.subr.bf16.mxu0 0
    %1908 = vmatpush1.bf16.msra.mxu0 0
    %1909 = vmatprep.subr.bf16.mxu0 0
    %1910 = vmatpush1.bf16.msra.mxu0 0
    %1911 = vmatprep.subr.bf16.mxu0 0
    %1912 = vmatpush1.bf16.msra.mxu0 0
    %1913 = vmatprep.subr.bf16.mxu0 0
    %1914 = vmatpush1.bf16.msra.mxu0 0
    %1915 = vmatprep.mubr.bf16.mxu0 0
    %1916 = vmatmul.mubr.bf16.gmra.mrb[0].mxu0 %v1878
    %v1917 = vpop.f32.mrb[0].mxu0
    %v1918 = vadd.f32 0.0, %v1917
    %v1919 = vpop.f32.mrb[0].mxu0
    %v1920 = vpop.f32.mrb[0].mxu0
    %v1921 = vpop.f32.mrb[0].mxu0
    %1922 = vdwg.mxu0
    %v1923 = vcombine.low %v1596, %v1688
    %v1924 = vcombine.high %v1596, %v1688
    %v1926 = vunpack.c.l.s4 1983009808
    %v1927 = vunpack.c.0.s8 %v1926
    %v1928 = vlaneseq
    %v1929 = vshrl.u32 %v1928, 7
    %v1930 = vsub.s32 %v1927, %v1929
    %v1931 = vrot.slane %v1923, %v1930
    %v1933 = vunpack.c.l.s4 1983009808
    %v1934 = vunpack.c.0.s8 %v1933
    %v1935 = vlaneseq
    %v1936 = vshrl.u32 %v1935, 7
    %v1937 = vsub.s32 %v1934, %v1936
    %v1938 = vrot.slane %v1924, %v1937
    %v1939 = vcombine.low %v1642, %v1734
    %v1940 = vcombine.high %v1642, %v1734
    %v1942 = vunpack.c.l.s4 1983009808
    %v1943 = vunpack.c.0.s8 %v1942
    %v1944 = vlaneseq
    %v1945 = vshrl.u32 %v1944, 7
    %v1946 = vsub.s32 %v1943, %v1945
    %v1947 = vrot.slane %v1939, %v1946
    %v1949 = vunpack.c.l.s4 1983009808
    %v1950 = vunpack.c.0.s8 %v1949
    %v1951 = vlaneseq
    %v1952 = vshrl.u32 %v1951, 7
    %v1953 = vsub.s32 %v1950, %v1952
    %v1954 = vrot.slane %v1940, %v1953
    %v1955 = vcombine.low %v1931, %v1947
    %v1956 = vcombine.high %v1931, %v1947
    %v1958 = vunpack.c.l.s4 1934713408
    %v1959 = vunpack.c.0.s8 %v1958
    %v1960 = vlaneseq
    %v1961 = vshrl.u32 %v1960, 7
    %v1962 = vsub.s32 %v1959, %v1961
    %v1963 = vrot.slane %v1955, %v1962
    %v1965 = vunpack.c.l.s4 1934713408
    %v1966 = vunpack.c.0.s8 %v1965
    %v1967 = vlaneseq
    %v1968 = vshrl.u32 %v1967, 7
    %v1969 = vsub.s32 %v1966, %v1968
    %v1970 = vrot.slane %v1956, %v1969
    %v1971 = vcombine.low %v1938, %v1954
    %v1972 = vcombine.high %v1938, %v1954
    %v1974 = vunpack.c.l.s4 1934713408
    %v1975 = vunpack.c.0.s8 %v1974
    %v1976 = vlaneseq
    %v1977 = vshrl.u32 %v1976, 7
    %v1978 = vsub.s32 %v1975, %v1977
    %v1979 = vrot.slane %v1971, %v1978
    %v1981 = vunpack.c.l.s4 1934713408
    %v1982 = vunpack.c.0.s8 %v1981
    %v1983 = vlaneseq
    %v1984 = vshrl.u32 %v1983, 7
    %v1985 = vsub.s32 %v1982, %v1984
    %v1986 = vrot.slane %v1972, %v1985
    %v1987 = vcombine.high %v1963, 0.0
    %v1988 = vcombine.high %v1970, 0.0
    %v1989 = vcombine.high %v1979, 0.0
    %v1990 = vcombine.high %v1986, 0.0
    %v1991 = vcombine.low %v1780, %v1872
    %v1992 = vcombine.high %v1780, %v1872
    %v1994 = vunpack.c.l.s4 1983009808
    %v1995 = vunpack.c.0.s8 %v1994
    %v1996 = vlaneseq
    %v1997 = vshrl.u32 %v1996, 7
    %v1998 = vsub.s32 %v1995, %v1997
    %v1999 = vrot.slane %v1991, %v1998
    %v2001 = vunpack.c.l.s4 1983009808
    %v2002 = vunpack.c.0.s8 %v2001
    %v2003 = vlaneseq
    %v2004 = vshrl.u32 %v2003, 7
    %v2005 = vsub.s32 %v2002, %v2004
    %v2006 = vrot.slane %v1992, %v2005
    %v2007 = vcombine.low %v1826, %v1918
    %v2008 = vcombine.high %v1826, %v1918
    %v2010 = vunpack.c.l.s4 1983009808
    %v2011 = vunpack.c.0.s8 %v2010
    %v2012 = vlaneseq
    %v2013 = vshrl.u32 %v2012, 7
    %v2014 = vsub.s32 %v2011, %v2013
    %v2015 = vrot.slane %v2007, %v2014
    %v2017 = vunpack.c.l.s4 1983009808
    %v2018 = vunpack.c.0.s8 %v2017
    %v2019 = vlaneseq
    %v2020 = vshrl.u32 %v2019, 7
    %v2021 = vsub.s32 %v2018, %v2020
    %v2022 = vrot.slane %v2008, %v2021
    %v2023 = vcombine.low %v1999, %v2015
    %v2024 = vcombine.high %v1999, %v2015
    %v2026 = vunpack.c.l.s4 1934713408
    %v2027 = vunpack.c.0.s8 %v2026
    %v2028 = vlaneseq
    %v2029 = vshrl.u32 %v2028, 7
    %v2030 = vsub.s32 %v2027, %v2029
    %v2031 = vrot.slane %v2023, %v2030
    %v2033 = vunpack.c.l.s4 1934713408
    %v2034 = vunpack.c.0.s8 %v2033
    %v2035 = vlaneseq
    %v2036 = vshrl.u32 %v2035, 7
    %v2037 = vsub.s32 %v2034, %v2036
    %v2038 = vrot.slane %v2024, %v2037
    %v2039 = vcombine.low %v2006, %v2022
    %v2040 = vcombine.high %v2006, %v2022
    %v2042 = vunpack.c.l.s4 1934713408
    %v2043 = vunpack.c.0.s8 %v2042
    %v2044 = vlaneseq
    %v2045 = vshrl.u32 %v2044, 7
    %v2046 = vsub.s32 %v2043, %v2045
    %v2047 = vrot.slane %v2039, %v2046
    %v2049 = vunpack.c.l.s4 1934713408
    %v2050 = vunpack.c.0.s8 %v2049
    %v2051 = vlaneseq
    %v2052 = vshrl.u32 %v2051, 7
    %v2053 = vsub.s32 %v2050, %v2052
    %v2054 = vrot.slane %v2040, %v2053
    %v2055 = vcombine.high %v2031, 0.0
    %v2056 = vcombine.high %v2038, 0.0
    %v2057 = vcombine.high %v2047, 0.0
    %v2058 = vcombine.high %v2054, 0.0
    %v2059 = vcombine.low %v1963, %v1987
    %v2061 = vunpack.c.l.s4 1983009808
    %v2062 = vunpack.c.0.s8 %v2061
    %v2063 = vlaneseq
    %v2064 = vshrl.u32 %v2063, 7
    %v2065 = vsub.s32 %v2062, %v2064
    %v2066 = vrot.slane %v2059, %v2065
    %v2067 = vcombine.low %v2031, %v2055
    %v2069 = vunpack.c.l.s4 1983009808
    %v2070 = vunpack.c.0.s8 %v2069
    %v2071 = vlaneseq
    %v2072 = vshrl.u32 %v2071, 7
    %v2073 = vsub.s32 %v2070, %v2072
    %v2074 = vrot.slane %v2067, %v2073
    %v2075 = vcombine.low %v1970, %v1988
    %v2077 = vunpack.c.l.s4 1983009808
    %v2078 = vunpack.c.0.s8 %v2077
    %v2079 = vlaneseq
    %v2080 = vshrl.u32 %v2079, 7
    %v2081 = vsub.s32 %v2078, %v2080
    %v2082 = vrot.slane %v2075, %v2081
    %v2083 = vcombine.low %v2038, %v2056
    %v2085 = vunpack.c.l.s4 1983009808
    %v2086 = vunpack.c.0.s8 %v2085
    %v2087 = vlaneseq
    %v2088 = vshrl.u32 %v2087, 7
    %v2089 = vsub.s32 %v2086, %v2088
    %v2090 = vrot.slane %v2083, %v2089
    %v2091 = vcombine.low %v2066, %v2074
    %v2092 = vcombine.high %v2066, %v2074
    %v2094 = vunpack.c.l.s4 1934713408
    %v2095 = vunpack.c.0.s8 %v2094
    %v2096 = vlaneseq
    %v2097 = vshrl.u32 %v2096, 7
    %v2098 = vsub.s32 %v2095, %v2097
    %v2099 = vrot.slane %v2091, %v2098
    %v2101 = vunpack.c.l.s4 1934713408
    %v2102 = vunpack.c.0.s8 %v2101
    %v2103 = vlaneseq
    %v2104 = vshrl.u32 %v2103, 7
    %v2105 = vsub.s32 %v2102, %v2104
    %v2106 = vrot.slane %v2092, %v2105
    %v2107 = vcombine.low %v2082, %v2090
    %v2108 = vcombine.high %v2082, %v2090
    %v2110 = vunpack.c.l.s4 1934713408
    %v2111 = vunpack.c.0.s8 %v2110
    %v2112 = vlaneseq
    %v2113 = vshrl.u32 %v2112, 7
    %v2114 = vsub.s32 %v2111, %v2113
    %v2115 = vrot.slane %v2107, %v2114
    %v2117 = vunpack.c.l.s4 1934713408
    %v2118 = vunpack.c.0.s8 %v2117
    %v2119 = vlaneseq
    %v2120 = vshrl.u32 %v2119, 7
    %v2121 = vsub.s32 %v2118, %v2120
    %v2122 = vrot.slane %v2108, %v2121
    %v2123 = vcombine.low %v2099, %v2115
    %v2124 = vcombine.high %v2099, %v2115
    %v2125 = vcombine.low %v2106, %v2122
    %v2126 = vcombine.high %v2106, %v2122
    %v2127 = vcombine.low %v1979, %v1989
    %v2129 = vunpack.c.l.s4 1983009808
    %v2130 = vunpack.c.0.s8 %v2129
    %v2131 = vlaneseq
    %v2132 = vshrl.u32 %v2131, 7
    %v2133 = vsub.s32 %v2130, %v2132
    %v2134 = vrot.slane %v2127, %v2133
    %v2135 = vcombine.low %v2047, %v2057
    %v2137 = vunpack.c.l.s4 1983009808
    %v2138 = vunpack.c.0.s8 %v2137
    %v2139 = vlaneseq
    %v2140 = vshrl.u32 %v2139, 7
    %v2141 = vsub.s32 %v2138, %v2140
    %v2142 = vrot.slane %v2135, %v2141
    %v2143 = vcombine.low %v1986, %v1990
    %v2145 = vunpack.c.l.s4 1983009808
    %v2146 = vunpack.c.0.s8 %v2145
    %v2147 = vlaneseq
    %v2148 = vshrl.u32 %v2147, 7
    %v2149 = vsub.s32 %v2146, %v2148
    %v2150 = vrot.slane %v2143, %v2149
    %v2151 = vcombine.low %v2054, %v2058
    %v2153 = vunpack.c.l.s4 1983009808
    %v2154 = vunpack.c.0.s8 %v2153
    %v2155 = vlaneseq
    %v2156 = vshrl.u32 %v2155, 7
    %v2157 = vsub.s32 %v2154, %v2156
    %v2158 = vrot.slane %v2151, %v2157
    %v2159 = vcombine.low %v2134, %v2142
    %v2160 = vcombine.high %v2134, %v2142
    %v2162 = vunpack.c.l.s4 1934713408
    %v2163 = vunpack.c.0.s8 %v2162
    %v2164 = vlaneseq
    %v2165 = vshrl.u32 %v2164, 7
    %v2166 = vsub.s32 %v2163, %v2165
    %v2167 = vrot.slane %v2159, %v2166
    %v2169 = vunpack.c.l.s4 1934713408
    %v2170 = vunpack.c.0.s8 %v2169
    %v2171 = vlaneseq
    %v2172 = vshrl.u32 %v2171, 7
    %v2173 = vsub.s32 %v2170, %v2172
    %v2174 = vrot.slane %v2160, %v2173
    %v2175 = vcombine.low %v2150, %v2158
    %v2176 = vcombine.high %v2150, %v2158
    %v2178 = vunpack.c.l.s4 1934713408
    %v2179 = vunpack.c.0.s8 %v2178
    %v2180 = vlaneseq
    %v2181 = vshrl.u32 %v2180, 7
    %v2182 = vsub.s32 %v2179, %v2181
    %v2183 = vrot.slane %v2175, %v2182
    %v2185 = vunpack.c.l.s4 1934713408
    %v2186 = vunpack.c.0.s8 %v2185
    %v2187 = vlaneseq
    %v2188 = vshrl.u32 %v2187, 7
    %v2189 = vsub.s32 %v2186, %v2188
    %v2190 = vrot.slane %v2176, %v2189
    %v2191 = vcombine.low %v2167, %v2183
    %v2192 = vcombine.high %v2167, %v2183
    %v2193 = vcombine.low %v2174, %v2190
    %v2194 = vcombine.high %v2174, %v2190
    %2197 = vrot.lane.b32.xlu0 %v2124, 8
    %v2198 = vpop.permute.xlu0 %2197
    %2199 = vrot.lane.b32.xlu0 %v2192, 8
    %v2200 = vpop.permute.xlu0 %2199
    %2205 = vrot.lane.b32.xlu0 %v2125, 16
    %v2206 = vpop.permute.xlu0 %2205
    %2207 = vrot.lane.b32.xlu0 %v2193, 16
    %v2208 = vpop.permute.xlu0 %2207
    %2213 = vrot.lane.b32.xlu0 %v2126, 24
    %v2214 = vpop.permute.xlu0 %2213
    %2215 = vrot.lane.b32.xlu0 %v2194, 24
    %v2216 = vpop.permute.xlu0 %2215
    %v2219 = vsel %vm1089, %v2123, %v2198
    %v2220 = vsel %vm1089, %v2191, %v2200
    %vm2221 = vcmask 130048
    %v2222 = vsel %vm2221, %v2219, %v2206
    %v2223 = vsel %vm2221, %v2220, %v2208
    %vm2224 = vcmask 195584
    %v2225 = vsel %vm2224, %v2222, %v2214
    %v2226 = vsel %vm2224, %v2223, %v2216
    %v2227 = vpack.c.bf16 %v2226, %v2225
    %v2228 = vld [vmem:[%s3] sm:$0xf]
    %v2229 = vld [vmem:[%s3 + $0x4] sm:$0xf]
    %v2230 = vld [vmem:[%s3 + $0x8] sm:$0xf]
    %v2231 = vld [vmem:[%s3 + $0xc] sm:$0xf]
    %v2232 = vld [vmem:[%s4] sm:$0x1]
    %v2234 = vlaneseq
    %v2235 = vshrl.u32 %v2234, 7
    %v2236 = vsub.s32 0, %v2235
    %v2237 = vrot.slane %v2232, %v2236
    %v2243 = vunpack.c.l.b16 %v2228
    %v2244 = vunpack.c.l.b16 %v2229
    %v2245 = vunpack.c.l.b16 %v2230
    %v2246 = vunpack.c.l.b16 %v2231
    %v2247 = vpack.c.b16 %v2244, %v2243
    %v2248 = vpack.c.b16 %v2246, %v2245
    %v2252 = vsel %vm136, %v2227, 0
    %2254 = vmatprep.subr.bf16.mxu0 0
    %2255 = vmatpush1.bf16.msra.mxu0 %v2247
    %2256 = vmatprep.subr.bf16.mxu0 0
    %2257 = vmatpush1.bf16.msra.mxu0 %v2248
    %2258 = vmatprep.subr.bf16.mxu0 0
    %2259 = vmatpush1.bf16.msra.mxu0 0
    %2260 = vmatprep.subr.bf16.mxu0 0
    %2261 = vmatpush1.bf16.msra.mxu0 0
    %2262 = vmatprep.subr.bf16.mxu0 0
    %2263 = vmatpush1.bf16.msra.mxu0 0
    %2264 = vmatprep.subr.bf16.mxu0 0
    %2265 = vmatpush1.bf16.msra.mxu0 0
    %2266 = vmatprep.subr.bf16.mxu0 0
    %2267 = vmatpush1.bf16.msra.mxu0 0
    %2268 = vmatprep.subr.bf16.mxu0 0
    %2269 = vmatpush1.bf16.msra.mxu0 0
    %2270 = vmatprep.subr.bf16.mxu0 0
    %2271 = vmatpush1.bf16.msra.mxu0 0
    %2272 = vmatprep.subr.bf16.mxu0 0
    %2273 = vmatpush1.bf16.msra.mxu0 0
    %2274 = vmatprep.subr.bf16.mxu0 0
    %2275 = vmatpush1.bf16.msra.mxu0 0
    %2276 = vmatprep.subr.bf16.mxu0 0
    %2277 = vmatpush1.bf16.msra.mxu0 0
    %2278 = vmatprep.subr.bf16.mxu0 0
    %2279 = vmatpush1.bf16.msra.mxu0 0
    %2280 = vmatprep.subr.bf16.mxu0 0
    %2281 = vmatpush1.bf16.msra.mxu0 0
    %2282 = vmatprep.subr.bf16.mxu0 0
    %2283 = vmatpush1.bf16.msra.mxu0 0
    %2284 = vmatprep.subr.bf16.mxu0 0
    %2285 = vmatpush1.bf16.msra.mxu0 0
    %2286 = vmatprep.mubr.bf16.mxu0 0
    %2287 = vmatmul.mubr.bf16.gmra.mrb[0].mxu0 %v2252
    %v2288 = vpop.f32.mrb[0].mxu0
    %v2289 = vadd.f32 %v2237, %v2288
    %v2290 = vpop.f32.mrb[0].mxu0
    %v2291 = vpop.f32.mrb[0].mxu0
    %v2292 = vadd.f32 %v2237, %v2291
    %v2293 = vpop.f32.mrb[0].mxu0
    %2294 = vdwg.mxu0
    %v2297 = vcombine.high %v2289, %v2289
    %v2299 = vunpack.c.l.s4 1983009808
    %v2300 = vunpack.c.0.s8 %v2299
    %v2301 = vlaneseq
    %v2302 = vshrl.u32 %v2301, 7
    %v2303 = vsub.s32 %v2300, %v2302
    %v2304 = vrot.slane %v2289, %v2303
    %v2306 = vunpack.c.l.s4 1983009808
    %v2307 = vunpack.c.0.s8 %v2306
    %v2308 = vlaneseq
    %v2309 = vshrl.u32 %v2308, 7
    %v2310 = vsub.s32 %v2307, %v2309
    %v2311 = vrot.slane %v2297, %v2310
    %v2312 = vcombine.high %v2304, %v2304
    %v2313 = vcombine.high %v2311, %v2311
    %v2314 = vcombine.high %v2292, %v2292
    %v2316 = vunpack.c.l.s4 1983009808
    %v2317 = vunpack.c.0.s8 %v2316
    %v2318 = vlaneseq
    %v2319 = vshrl.u32 %v2318, 7
    %v2320 = vsub.s32 %v2317, %v2319
    %v2321 = vrot.slane %v2292, %v2320
    %v2323 = vunpack.c.l.s4 1983009808
    %v2324 = vunpack.c.0.s8 %v2323
    %v2325 = vlaneseq
    %v2326 = vshrl.u32 %v2325, 7
    %v2327 = vsub.s32 %v2324, %v2326
    %v2328 = vrot.slane %v2314, %v2327
    %v2329 = vcombine.high %v2321, %v2321
    %v2330 = vcombine.high %v2328, %v2328
    %v2339 = vadd.f32 %v60, %v2304
    %v2340 = vadd.f32 %v61, %v2312
    %v2341 = vadd.f32 %v62, %v2311
    %v2342 = vadd.f32 %v63, %v2313
    %v2343 = vadd.f32 %v64, %v2321
    %v2344 = vadd.f32 %v65, %v2329
    %v2345 = vadd.f32 %v66, %v2328
    %v2346 = vadd.f32 %v67, %v2330
    %v2347 = vld [vmem:[%s9] sm:$0x1]
    %v2348 = vld [vmem:[%s10] sm:$0x1]
    %v2357 = vcombine.low %v2339, %v2340
    %v2358 = vcombine.low %v2341, %v2342
    %v2360 = vunpack.c.l.s4 1983009808
    %v2361 = vunpack.c.0.s8 %v2360
    %v2362 = vlaneseq
    %v2363 = vshrl.u32 %v2362, 7
    %v2364 = vsub.s32 %v2361, %v2363
    %v2365 = vrot.slane %v2357, %v2364
    %v2367 = vunpack.c.l.s4 1983009808
    %v2368 = vunpack.c.0.s8 %v2367
    %v2369 = vlaneseq
    %v2370 = vshrl.u32 %v2369, 7
    %v2371 = vsub.s32 %v2368, %v2370
    %v2372 = vrot.slane %v2358, %v2371
    %v2373 = vcombine.low %v2365, %v2372
    %v2374 = vcombine.low %v2343, %v2344
    %v2375 = vcombine.low %v2345, %v2346
    %v2377 = vunpack.c.l.s4 1983009808
    %v2378 = vunpack.c.0.s8 %v2377
    %v2379 = vlaneseq
    %v2380 = vshrl.u32 %v2379, 7
    %v2381 = vsub.s32 %v2378, %v2380
    %v2382 = vrot.slane %v2374, %v2381
    %v2384 = vunpack.c.l.s4 1983009808
    %v2385 = vunpack.c.0.s8 %v2384
    %v2386 = vlaneseq
    %v2387 = vshrl.u32 %v2386, 7
    %v2388 = vsub.s32 %v2385, %v2387
    %v2389 = vrot.slane %v2375, %v2388
    %v2390 = vcombine.low %v2382, %v2389
    %v2393 = vsel %vm136, %v2373, 0.0
    %2394 = vadd.xlane.f32.xlu0 %v2393
    %v2395 = vpop.xlane.xlu0 %2394
    %v2396 = vsel %vm136, %v2390, 0.0
    %2397 = vadd.xlane.f32.xlu0 %v2396
    %v2398 = vpop.xlane.xlu0 %2397
    %v2399 = vrcp.pop 32.0
    %v2400 = vmul.f32 %v2395, %v2399
    %v2401 = vmul.f32 %v2398, %v2399
    %v2405 = vunpack.c.l.s4 269488144
    %v2406 = vunpack.c.0.s8 %v2405
    %v2407 = vlaneseq
    %v2408 = vshrl.u32 %v2407, 7
    %v2409 = vsub.s32 %v2406, %v2408
    %v2410 = vrot.slane %v2400, %v2409
    %v2412 = vunpack.c.l.s4 842150450
    %v2413 = vunpack.c.0.s8 %v2412
    %v2414 = vlaneseq
    %v2415 = vshrl.u32 %v2414, 7
    %v2416 = vsub.s32 %v2413, %v2415
    %v2417 = vrot.slane %v2400, %v2416
    %v2419 = vunpack.c.l.s4 1414812756
    %v2420 = vunpack.c.0.s8 %v2419
    %v2421 = vlaneseq
    %v2422 = vshrl.u32 %v2421, 7
    %v2423 = vsub.s32 %v2420, %v2422
    %v2424 = vrot.slane %v2400, %v2423
    %v2426 = vunpack.c.l.s4 1987475062
    %v2427 = vunpack.c.0.s8 %v2426
    %v2428 = vlaneseq
    %v2429 = vshrl.u32 %v2428, 7
    %v2430 = vsub.s32 %v2427, %v2429
    %v2431 = vrot.slane %v2400, %v2430
    %v2433 = vunpack.c.l.s4 269488144
    %v2434 = vunpack.c.0.s8 %v2433
    %v2435 = vlaneseq
    %v2436 = vshrl.u32 %v2435, 7
    %v2437 = vsub.s32 %v2434, %v2436
    %v2438 = vrot.slane %v2401, %v2437
    %v2440 = vunpack.c.l.s4 842150450
    %v2441 = vunpack.c.0.s8 %v2440
    %v2442 = vlaneseq
    %v2443 = vshrl.u32 %v2442, 7
    %v2444 = vsub.s32 %v2441, %v2443
    %v2445 = vrot.slane %v2401, %v2444
    %v2447 = vunpack.c.l.s4 1414812756
    %v2448 = vunpack.c.0.s8 %v2447
    %v2449 = vlaneseq
    %v2450 = vshrl.u32 %v2449, 7
    %v2451 = vsub.s32 %v2448, %v2450
    %v2452 = vrot.slane %v2401, %v2451
    %v2454 = vunpack.c.l.s4 1987475062
    %v2455 = vunpack.c.0.s8 %v2454
    %v2456 = vlaneseq
    %v2457 = vshrl.u32 %v2456, 7
    %v2458 = vsub.s32 %v2455, %v2457
    %v2459 = vrot.slane %v2401, %v2458
    %v2468 = vsub.f32 %v2339, %v2410
    %v2469 = vsub.f32 %v2340, %v2417
    %v2470 = vsub.f32 %v2341, %v2424
    %v2471 = vsub.f32 %v2342, %v2431
    %v2472 = vsub.f32 %v2343, %v2438
    %v2473 = vsub.f32 %v2344, %v2445
    %v2474 = vsub.f32 %v2345, %v2452
    %v2475 = vsub.f32 %v2346, %v2459
    %v2476 = vmul.f32 %v2468, %v2468
    %v2477 = vmul.f32 %v2469, %v2469
    %v2478 = vmul.f32 %v2470, %v2470
    %v2479 = vmul.f32 %v2471, %v2471
    %v2480 = vmul.f32 %v2472, %v2472
    %v2481 = vmul.f32 %v2473, %v2473
    %v2482 = vmul.f32 %v2474, %v2474
    %v2483 = vmul.f32 %v2475, %v2475
    %v2492 = vcombine.low %v2476, %v2477
    %v2493 = vcombine.low %v2478, %v2479
    %v2495 = vunpack.c.l.s4 1983009808
    %v2496 = vunpack.c.0.s8 %v2495
    %v2497 = vlaneseq
    %v2498 = vshrl.u32 %v2497, 7
    %v2499 = vsub.s32 %v2496, %v2498
    %v2500 = vrot.slane %v2492, %v2499
    %v2502 = vunpack.c.l.s4 1983009808
    %v2503 = vunpack.c.0.s8 %v2502
    %v2504 = vlaneseq
    %v2505 = vshrl.u32 %v2504, 7
    %v2506 = vsub.s32 %v2503, %v2505
    %v2507 = vrot.slane %v2493, %v2506
    %v2508 = vcombine.low %v2500, %v2507
    %v2509 = vcombine.low %v2480, %v2481
    %v2510 = vcombine.low %v2482, %v2483
    %v2512 = vunpack.c.l.s4 1983009808
    %v2513 = vunpack.c.0.s8 %v2512
    %v2514 = vlaneseq
    %v2515 = vshrl.u32 %v2514, 7
    %v2516 = vsub.s32 %v2513, %v2515
    %v2517 = vrot.slane %v2509, %v2516
    %v2519 = vunpack.c.l.s4 1983009808
    %v2520 = vunpack.c.0.s8 %v2519
    %v2521 = vlaneseq
    %v2522 = vshrl.u32 %v2521, 7
    %v2523 = vsub.s32 %v2520, %v2522
    %v2524 = vrot.slane %v2510, %v2523
    %v2525 = vcombine.low %v2517, %v2524
    %v2528 = vsel %vm136, %v2508, 0.0
    %2529 = vadd.xlane.f32.xlu0 %v2528
    %v2530 = vpop.xlane.xlu0 %2529
    %v2531 = vsel %vm136, %v2525, 0.0
    %2532 = vadd.xlane.f32.xlu0 %v2531
    %v2533 = vpop.xlane.xlu0 %2532
    %v2534 = vmul.f32 %v2530, %v2399
    %v2535 = vmul.f32 %v2533, %v2399
    %v2536 = vadd.f32 %v2534, 1e-05
    %v2537 = vadd.f32 %v2535, 1e-05
    %v2538 = vrsqrt.pop %v2536
    %v2539 = vrsqrt.pop %v2537
    %v2543 = vunpack.c.l.s4 269488144
    %v2544 = vunpack.c.0.s8 %v2543
    %v2545 = vlaneseq
    %v2546 = vshrl.u32 %v2545, 7
    %v2547 = vsub.s32 %v2544, %v2546
    %v2548 = vrot.slane %v2538, %v2547
    %v2550 = vunpack.c.l.s4 842150450
    %v2551 = vunpack.c.0.s8 %v2550
    %v2552 = vlaneseq
    %v2553 = vshrl.u32 %v2552, 7
    %v2554 = vsub.s32 %v2551, %v2553
    %v2555 = vrot.slane %v2538, %v2554
    %v2557 = vunpack.c.l.s4 1414812756
    %v2558 = vunpack.c.0.s8 %v2557
    %v2559 = vlaneseq
    %v2560 = vshrl.u32 %v2559, 7
    %v2561 = vsub.s32 %v2558, %v2560
    %v2562 = vrot.slane %v2538, %v2561
    %v2564 = vunpack.c.l.s4 1987475062
    %v2565 = vunpack.c.0.s8 %v2564
    %v2566 = vlaneseq
    %v2567 = vshrl.u32 %v2566, 7
    %v2568 = vsub.s32 %v2565, %v2567
    %v2569 = vrot.slane %v2538, %v2568
    %v2571 = vunpack.c.l.s4 269488144
    %v2572 = vunpack.c.0.s8 %v2571
    %v2573 = vlaneseq
    %v2574 = vshrl.u32 %v2573, 7
    %v2575 = vsub.s32 %v2572, %v2574
    %v2576 = vrot.slane %v2539, %v2575
    %v2578 = vunpack.c.l.s4 842150450
    %v2579 = vunpack.c.0.s8 %v2578
    %v2580 = vlaneseq
    %v2581 = vshrl.u32 %v2580, 7
    %v2582 = vsub.s32 %v2579, %v2581
    %v2583 = vrot.slane %v2539, %v2582
    %v2585 = vunpack.c.l.s4 1414812756
    %v2586 = vunpack.c.0.s8 %v2585
    %v2587 = vlaneseq
    %v2588 = vshrl.u32 %v2587, 7
    %v2589 = vsub.s32 %v2586, %v2588
    %v2590 = vrot.slane %v2539, %v2589
    %v2592 = vunpack.c.l.s4 1987475062
    %v2593 = vunpack.c.0.s8 %v2592
    %v2594 = vlaneseq
    %v2595 = vshrl.u32 %v2594, 7
    %v2596 = vsub.s32 %v2593, %v2595
    %v2597 = vrot.slane %v2539, %v2596
    %v2606 = vmul.f32 %v2468, %v2548
    %v2607 = vmul.f32 %v2469, %v2555
    %v2608 = vmul.f32 %v2470, %v2562
    %v2609 = vmul.f32 %v2471, %v2569
    %v2610 = vmul.f32 %v2472, %v2576
    %v2611 = vmul.f32 %v2473, %v2583
    %v2612 = vmul.f32 %v2474, %v2590
    %v2613 = vmul.f32 %v2475, %v2597
    %v2615 = vlaneseq
    %v2616 = vshrl.u32 %v2615, 7
    %v2617 = vsub.s32 0, %v2616
    %v2618 = vrot.slane %v2347, %v2617
    %v2619 = vcombine.high %v2618, %v2618
    %v2621 = vunpack.c.l.s4 1983009808
    %v2622 = vunpack.c.0.s8 %v2621
    %v2623 = vlaneseq
    %v2624 = vshrl.u32 %v2623, 7
    %v2625 = vsub.s32 %v2622, %v2624
    %v2626 = vrot.slane %v2618, %v2625
    %v2628 = vunpack.c.l.s4 1983009808
    %v2629 = vunpack.c.0.s8 %v2628
    %v2630 = vlaneseq
    %v2631 = vshrl.u32 %v2630, 7
    %v2632 = vsub.s32 %v2629, %v2631
    %v2633 = vrot.slane %v2619, %v2632
    %v2634 = vcombine.high %v2626, %v2626
    %v2635 = vcombine.high %v2633, %v2633
    %v2640 = vmul.f32 %v2606, %v2626
    %v2641 = vmul.f32 %v2607, %v2634
    %v2642 = vmul.f32 %v2608, %v2633
    %v2643 = vmul.f32 %v2609, %v2635
    %v2644 = vmul.f32 %v2610, %v2626
    %v2645 = vmul.f32 %v2611, %v2634
    %v2646 = vmul.f32 %v2612, %v2633
    %v2647 = vmul.f32 %v2613, %v2635
    %v2649 = vlaneseq
    %v2650 = vshrl.u32 %v2649, 7
    %v2651 = vsub.s32 0, %v2650
    %v2652 = vrot.slane %v2348, %v2651
    %v2653 = vcombine.high %v2652, %v2652
    %v2655 = vunpack.c.l.s4 1983009808
    %v2656 = vunpack.c.0.s8 %v2655
    %v2657 = vlaneseq
    %v2658 = vshrl.u32 %v2657, 7
    %v2659 = vsub.s32 %v2656, %v2658
    %v2660 = vrot.slane %v2652, %v2659
    %v2662 = vunpack.c.l.s4 1983009808
    %v2663 = vunpack.c.0.s8 %v2662
    %v2664 = vlaneseq
    %v2665 = vshrl.u32 %v2664, 7
    %v2666 = vsub.s32 %v2663, %v2665
    %v2667 = vrot.slane %v2653, %v2666
    %v2668 = vcombine.high %v2660, %v2660
    %v2669 = vcombine.high %v2667, %v2667
    %v2674 = vadd.f32 %v2640, %v2660
    %v2675 = vadd.f32 %v2641, %v2668
    %v2676 = vadd.f32 %v2642, %v2667
    %v2677 = vadd.f32 %v2643, %v2669
    %v2678 = vadd.f32 %v2644, %v2660
    %v2679 = vadd.f32 %v2645, %v2668
    %v2680 = vadd.f32 %v2646, %v2667
    %v2681 = vadd.f32 %v2647, %v2669
    %v2690 = vcombine.low %v2674, %v2675
    %v2691 = vcombine.low %v2676, %v2677
    %v2693 = vunpack.c.l.s4 1983009808
    %v2694 = vunpack.c.0.s8 %v2693
    %v2695 = vlaneseq
    %v2696 = vshrl.u32 %v2695, 7
    %v2697 = vsub.s32 %v2694, %v2696
    %v2698 = vrot.slane %v2690, %v2697
    %v2700 = vunpack.c.l.s4 1983009808
    %v2701 = vunpack.c.0.s8 %v2700
    %v2702 = vlaneseq
    %v2703 = vshrl.u32 %v2702, 7
    %v2704 = vsub.s32 %v2701, %v2703
    %v2705 = vrot.slane %v2691, %v2704
    %v2706 = vcombine.low %v2698, %v2705
    %v2707 = vcombine.low %v2678, %v2679
    %v2708 = vcombine.low %v2680, %v2681
    %v2710 = vunpack.c.l.s4 1983009808
    %v2711 = vunpack.c.0.s8 %v2710
    %v2712 = vlaneseq
    %v2713 = vshrl.u32 %v2712, 7
    %v2714 = vsub.s32 %v2711, %v2713
    %v2715 = vrot.slane %v2707, %v2714
    %v2717 = vunpack.c.l.s4 1983009808
    %v2718 = vunpack.c.0.s8 %v2717
    %v2719 = vlaneseq
    %v2720 = vshrl.u32 %v2719, 7
    %v2721 = vsub.s32 %v2718, %v2720
    %v2722 = vrot.slane %v2708, %v2721
    %v2723 = vcombine.low %v2715, %v2722
    %v2726 = vpack.c.bf16 %v2723, %v2706
    %v2727 = vld [vmem:[#allocation2] sm:$0xf]
    %v2728 = vld [vmem:[#allocation2 + $0x4] sm:$0xf]
    %v2729 = vld [vmem:[#allocation2 + $0x8] sm:$0xf]
    %v2730 = vld [vmem:[#allocation2 + $0xc] sm:$0xf]
    %v2731 = vld [vmem:[%s6] sm:$0x1]
    %v2733 = vlaneseq
    %v2734 = vshrl.u32 %v2733, 7
    %v2735 = vsub.s32 0, %v2734
    %v2736 = vrot.slane %v2731, %v2735
    %v2742 = vunpack.c.l.b16 %v2727
    %v2743 = vunpack.c.l.b16 %v2728
    %v2744 = vunpack.c.l.b16 %v2729
    %v2745 = vunpack.c.l.b16 %v2730
    %v2746 = vpack.c.b16 %v2743, %v2742
    %v2747 = vpack.c.b16 %v2745, %v2744
    %v2751 = vsel %vm136, %v2726, 0
    %2753 = vmatprep.subr.bf16.mxu0 0
    %2754 = vmatpush1.bf16.msra.mxu0 %v2746
    %2755 = vmatprep.subr.bf16.mxu0 0
    %2756 = vmatpush1.bf16.msra.mxu0 %v2747
    %2757 = vmatprep.subr.bf16.mxu0 0
    %2758 = vmatpush1.bf16.msra.mxu0 0
    %2759 = vmatprep.subr.bf16.mxu0 0
    %2760 = vmatpush1.bf16.msra.mxu0 0
    %2761 = vmatprep.subr.bf16.mxu0 0
    %2762 = vmatpush1.bf16.msra.mxu0 0
    %2763 = vmatprep.subr.bf16.mxu0 0
    %2764 = vmatpush1.bf16.msra.mxu0 0
    %2765 = vmatprep.subr.bf16.mxu0 0
    %2766 = vmatpush1.bf16.msra.mxu0 0
    %2767 = vmatprep.subr.bf16.mxu0 0
    %2768 = vmatpush1.bf16.msra.mxu0 0
    %2769 = vmatprep.subr.bf16.mxu0 0
    %2770 = vmatpush1.bf16.msra.mxu0 0
    %2771 = vmatprep.subr.bf16.mxu0 0
    %2772 = vmatpush1.bf16.msra.mxu0 0
    %2773 = vmatprep.subr.bf16.mxu0 0
    %2774 = vmatpush1.bf16.msra.mxu0 0
    %2775 = vmatprep.subr.bf16.mxu0 0
    %2776 = vmatpush1.bf16.msra.mxu0 0
    %2777 = vmatprep.subr.bf16.mxu0 0
    %2778 = vmatpush1.bf16.msra.mxu0 0
    %2779 = vmatprep.subr.bf16.mxu0 0
    %2780 = vmatpush1.bf16.msra.mxu0 0
    %2781 = vmatprep.subr.bf16.mxu0 0
    %2782 = vmatpush1.bf16.msra.mxu0 0
    %2783 = vmatprep.subr.bf16.mxu0 0
    %2784 = vmatpush1.bf16.msra.mxu0 0
    %2785 = vmatprep.mubr.bf16.mxu0 0
    %2786 = vmatmul.mubr.bf16.gmra.mrb[0].mxu0 %v2751
    %v2787 = vpop.f32.mrb[0].mxu0
    %v2788 = vadd.f32 %v2736, %v2787
    %v2789 = vpop.f32.mrb[0].mxu0
    %v2790 = vpop.f32.mrb[0].mxu0
    %v2791 = vadd.f32 %v2736, %v2790
    %v2792 = vpop.f32.mrb[0].mxu0
    %2793 = vdwg.mxu0
    %v2794 = vmax.f32 %v2788, 0.0
    %v2795 = vmax.f32 %v2791, 0.0
    %v2796 = vpack.c.bf16 %v2795, %v2794
    %v2797 = vld [vmem:[%s7] sm:$0xf]
    %v2798 = vld [vmem:[%s7 + $0x4] sm:$0xf]
    %v2799 = vld [vmem:[%s7 + $0x8] sm:$0xf]
    %v2800 = vld [vmem:[%s7 + $0xc] sm:$0xf]
    %v2801 = vld [vmem:[%s7 + $0x10] sm:$0xf]
    %v2802 = vld [vmem:[%s7 + $0x14] sm:$0xf]
    %v2803 = vld [vmem:[%s7 + $0x18] sm:$0xf]
    %v2804 = vld [vmem:[%s7 + $0x1c] sm:$0xf]
    %v2805 = vld [vmem:[%s8] sm:$0x1]
    %v2807 = vlaneseq
    %v2808 = vshrl.u32 %v2807, 7
    %v2809 = vsub.s32 0, %v2808
    %v2810 = vrot.slane %v2805, %v2809
    %v2820 = vunpack.c.l.b16 %v2797
    %v2821 = vunpack.c.l.b16 %v2798
    %v2822 = vunpack.c.l.b16 %v2799
    %v2823 = vunpack.c.l.b16 %v2800
    %v2824 = vunpack.c.l.b16 %v2801
    %v2825 = vunpack.c.l.b16 %v2802
    %v2826 = vunpack.c.l.b16 %v2803
    %v2827 = vunpack.c.l.b16 %v2804
    %v2828 = vpack.c.b16 %v2821, %v2820
    %v2829 = vpack.c.b16 %v2823, %v2822
    %v2830 = vpack.c.b16 %v2825, %v2824
    %v2831 = vpack.c.b16 %v2827, %v2826
    %vm2836 = vcmask 523264
    %v2838 = vsel %vm2836, %v2796, 0
    %2840 = vmatprep.subr.bf16.mxu0 0
    %2841 = vmatpush1.bf16.msra.mxu0 %v2828
    %2842 = vmatprep.subr.bf16.mxu0 0
    %2843 = vmatpush1.bf16.msra.mxu0 %v2829
    %2844 = vmatprep.subr.bf16.mxu0 0
    %2845 = vmatpush1.bf16.msra.mxu0 %v2830
    %2846 = vmatprep.subr.bf16.mxu0 0
    %2847 = vmatpush1.bf16.msra.mxu0 %v2831
    %2848 = vmatprep.subr.bf16.mxu0 0
    %2849 = vmatpush1.bf16.msra.mxu0 0
    %2850 = vmatprep.subr.bf16.mxu0 0
    %2851 = vmatpush1.bf16.msra.mxu0 0
    %2852 = vmatprep.subr.bf16.mxu0 0
    %2853 = vmatpush1.bf16.msra.mxu0 0
    %2854 = vmatprep.subr.bf16.mxu0 0
    %2855 = vmatpush1.bf16.msra.mxu0 0
    %2856 = vmatprep.subr.bf16.mxu0 0
    %2857 = vmatpush1.bf16.msra.mxu0 0
    %2858 = vmatprep.subr.bf16.mxu0 0
    %2859 = vmatpush1.bf16.msra.mxu0 0
    %2860 = vmatprep.subr.bf16.mxu0 0
    %2861 = vmatpush1.bf16.msra.mxu0 0
    %2862 = vmatprep.subr.bf16.mxu0 0
    %2863 = vmatpush1.bf16.msra.mxu0 0
    %2864 = vmatprep.subr.bf16.mxu0 0
    %2865 = vmatpush1.bf16.msra.mxu0 0
    %2866 = vmatprep.subr.bf16.mxu0 0
    %2867 = vmatpush1.bf16.msra.mxu0 0
    %2868 = vmatprep.subr.bf16.mxu0 0
    %2869 = vmatpush1.bf16.msra.mxu0 0
    %2870 = vmatprep.subr.bf16.mxu0 0
    %2871 = vmatpush1.bf16.msra.mxu0 0
    %2872 = vmatprep.mubr.bf16.mxu0 0
    %2873 = vmatmul.mubr.bf16.gmra.mrb[0].mxu0 %v2838
    %v2874 = vpop.f32.mrb[0].mxu0
    %v2875 = vadd.f32 %v2810, %v2874
    %v2876 = vpop.f32.mrb[0].mxu0
    %v2877 = vpop.f32.mrb[0].mxu0
    %v2878 = vadd.f32 %v2810, %v2877
    %v2879 = vpop.f32.mrb[0].mxu0
    %2880 = vdwg.mxu0
    %v2883 = vcombine.high %v2875, %v2875
    %v2885 = vunpack.c.l.s4 1983009808
    %v2886 = vunpack.c.0.s8 %v2885
    %v2887 = vlaneseq
    %v2888 = vshrl.u32 %v2887, 7
    %v2889 = vsub.s32 %v2886, %v2888
    %v2890 = vrot.slane %v2875, %v2889
    %v2892 = vunpack.c.l.s4 1983009808
    %v2893 = vunpack.c.0.s8 %v2892
    %v2894 = vlaneseq
    %v2895 = vshrl.u32 %v2894, 7
    %v2896 = vsub.s32 %v2893, %v2895
    %v2897 = vrot.slane %v2883, %v2896
    %v2898 = vcombine.high %v2890, %v2890
    %v2899 = vcombine.high %v2897, %v2897
    %v2900 = vcombine.high %v2878, %v2878
    %v2902 = vunpack.c.l.s4 1983009808
    %v2903 = vunpack.c.0.s8 %v2902
    %v2904 = vlaneseq
    %v2905 = vshrl.u32 %v2904, 7
    %v2906 = vsub.s32 %v2903, %v2905
    %v2907 = vrot.slane %v2878, %v2906
    %v2909 = vunpack.c.l.s4 1983009808
    %v2910 = vunpack.c.0.s8 %v2909
    %v2911 = vlaneseq
    %v2912 = vshrl.u32 %v2911, 7
    %v2913 = vsub.s32 %v2910, %v2912
    %v2914 = vrot.slane %v2900, %v2913
    %v2915 = vcombine.high %v2907, %v2907
    %v2916 = vcombine.high %v2914, %v2914
    %v2925 = vadd.f32 %v2674, %v2890
    %v2926 = vadd.f32 %v2675, %v2898
    %v2927 = vadd.f32 %v2676, %v2897
    %v2928 = vadd.f32 %v2677, %v2899
    %v2929 = vadd.f32 %v2678, %v2907
    %v2930 = vadd.f32 %v2679, %v2915
    %v2931 = vadd.f32 %v2680, %v2914
    %v2932 = vadd.f32 %v2681, %v2916
    %v2933 = vld [vmem:[%s11] sm:$0x1]
    %v2934 = vld [vmem:[%s12] sm:$0x1]
    %v2943 = vcombine.low %v2925, %v2926
    %v2944 = vcombine.low %v2927, %v2928
    %v2946 = vunpack.c.l.s4 1983009808
    %v2947 = vunpack.c.0.s8 %v2946
    %v2948 = vlaneseq
    %v2949 = vshrl.u32 %v2948, 7
    %v2950 = vsub.s32 %v2947, %v2949
    %v2951 = vrot.slane %v2943, %v2950
    %v2953 = vunpack.c.l.s4 1983009808
    %v2954 = vunpack.c.0.s8 %v2953
    %v2955 = vlaneseq
    %v2956 = vshrl.u32 %v2955, 7
    %v2957 = vsub.s32 %v2954, %v2956
    %v2958 = vrot.slane %v2944, %v2957
    %v2959 = vcombine.low %v2951, %v2958
    %v2960 = vcombine.low %v2929, %v2930
    %v2961 = vcombine.low %v2931, %v2932
    %v2963 = vunpack.c.l.s4 1983009808
    %v2964 = vunpack.c.0.s8 %v2963
    %v2965 = vlaneseq
    %v2966 = vshrl.u32 %v2965, 7
    %v2967 = vsub.s32 %v2964, %v2966
    %v2968 = vrot.slane %v2960, %v2967
    %v2970 = vunpack.c.l.s4 1983009808
    %v2971 = vunpack.c.0.s8 %v2970
    %v2972 = vlaneseq
    %v2973 = vshrl.u32 %v2972, 7
    %v2974 = vsub.s32 %v2971, %v2973
    %v2975 = vrot.slane %v2961, %v2974
    %v2976 = vcombine.low %v2968, %v2975
    %v2979 = vsel %vm136, %v2959, 0.0
    %2980 = vadd.xlane.f32.xlu0 %v2979
    %v2981 = vpop.xlane.xlu0 %2980
    %v2982 = vsel %vm136, %v2976, 0.0
    %2983 = vadd.xlane.f32.xlu0 %v2982
    %v2984 = vpop.xlane.xlu0 %2983
    %v2985 = vmul.f32 %v2981, %v2399
    %v2986 = vmul.f32 %v2984, %v2399
    %v2990 = vunpack.c.l.s4 269488144
    %v2991 = vunpack.c.0.s8 %v2990
    %v2992 = vlaneseq
    %v2993 = vshrl.u32 %v2992, 7
    %v2994 = vsub.s32 %v2991, %v2993
    %v2995 = vrot.slane %v2985, %v2994
    %v2997 = vunpack.c.l.s4 842150450
    %v2998 = vunpack.c.0.s8 %v2997
    %v2999 = vlaneseq
    %v3000 = vshrl.u32 %v2999, 7
    %v3001 = vsub.s32 %v2998, %v3000
    %v3002 = vrot.slane %v2985, %v3001
    %v3004 = vunpack.c.l.s4 1414812756
    %v3005 = vunpack.c.0.s8 %v3004
    %v3006 = vlaneseq
    %v3007 = vshrl.u32 %v3006, 7
    %v3008 = vsub.s32 %v3005, %v3007
    %v3009 = vrot.slane %v2985, %v3008
    %v3011 = vunpack.c.l.s4 1987475062
    %v3012 = vunpack.c.0.s8 %v3011
    %v3013 = vlaneseq
    %v3014 = vshrl.u32 %v3013, 7
    %v3015 = vsub.s32 %v3012, %v3014
    %v3016 = vrot.slane %v2985, %v3015
    %v3018 = vunpack.c.l.s4 269488144
    %v3019 = vunpack.c.0.s8 %v3018
    %v3020 = vlaneseq
    %v3021 = vshrl.u32 %v3020, 7
    %v3022 = vsub.s32 %v3019, %v3021
    %v3023 = vrot.slane %v2986, %v3022
    %v3025 = vunpack.c.l.s4 842150450
    %v3026 = vunpack.c.0.s8 %v3025
    %v3027 = vlaneseq
    %v3028 = vshrl.u32 %v3027, 7
    %v3029 = vsub.s32 %v3026, %v3028
    %v3030 = vrot.slane %v2986, %v3029
    %v3032 = vunpack.c.l.s4 1414812756
    %v3033 = vunpack.c.0.s8 %v3032
    %v3034 = vlaneseq
    %v3035 = vshrl.u32 %v3034, 7
    %v3036 = vsub.s32 %v3033, %v3035
    %v3037 = vrot.slane %v2986, %v3036
    %v3039 = vunpack.c.l.s4 1987475062
    %v3040 = vunpack.c.0.s8 %v3039
    %v3041 = vlaneseq
    %v3042 = vshrl.u32 %v3041, 7
    %v3043 = vsub.s32 %v3040, %v3042
    %v3044 = vrot.slane %v2986, %v3043
    %v3053 = vsub.f32 %v2925, %v2995
    %v3054 = vsub.f32 %v2926, %v3002
    %v3055 = vsub.f32 %v2927, %v3009
    %v3056 = vsub.f32 %v2928, %v3016
    %v3057 = vsub.f32 %v2929, %v3023
    %v3058 = vsub.f32 %v2930, %v3030
    %v3059 = vsub.f32 %v2931, %v3037
    %v3060 = vsub.f32 %v2932, %v3044
    %v3061 = vmul.f32 %v3053, %v3053
    %v3062 = vmul.f32 %v3054, %v3054
    %v3063 = vmul.f32 %v3055, %v3055
    %v3064 = vmul.f32 %v3056, %v3056
    %v3065 = vmul.f32 %v3057, %v3057
    %v3066 = vmul.f32 %v3058, %v3058
    %v3067 = vmul.f32 %v3059, %v3059
    %v3068 = vmul.f32 %v3060, %v3060
    %v3077 = vcombine.low %v3061, %v3062
    %v3078 = vcombine.low %v3063, %v3064
    %v3080 = vunpack.c.l.s4 1983009808
    %v3081 = vunpack.c.0.s8 %v3080
    %v3082 = vlaneseq
    %v3083 = vshrl.u32 %v3082, 7
    %v3084 = vsub.s32 %v3081, %v3083
    %v3085 = vrot.slane %v3077, %v3084
    %v3087 = vunpack.c.l.s4 1983009808
    %v3088 = vunpack.c.0.s8 %v3087
    %v3089 = vlaneseq
    %v3090 = vshrl.u32 %v3089, 7
    %v3091 = vsub.s32 %v3088, %v3090
    %v3092 = vrot.slane %v3078, %v3091
    %v3093 = vcombine.low %v3085, %v3092
    %v3094 = vcombine.low %v3065, %v3066
    %v3095 = vcombine.low %v3067, %v3068
    %v3097 = vunpack.c.l.s4 1983009808
    %v3098 = vunpack.c.0.s8 %v3097
    %v3099 = vlaneseq
    %v3100 = vshrl.u32 %v3099, 7
    %v3101 = vsub.s32 %v3098, %v3100
    %v3102 = vrot.slane %v3094, %v3101
    %v3104 = vunpack.c.l.s4 1983009808
    %v3105 = vunpack.c.0.s8 %v3104
    %v3106 = vlaneseq
    %v3107 = vshrl.u32 %v3106, 7
    %v3108 = vsub.s32 %v3105, %v3107
    %v3109 = vrot.slane %v3095, %v3108
    %v3110 = vcombine.low %v3102, %v3109
    %v3113 = vsel %vm136, %v3093, 0.0
    %3114 = vadd.xlane.f32.xlu0 %v3113
    %v3115 = vpop.xlane.xlu0 %3114
    %v3116 = vsel %vm136, %v3110, 0.0
    %3117 = vadd.xlane.f32.xlu0 %v3116
    %v3118 = vpop.xlane.xlu0 %3117
    %v3119 = vmul.f32 %v3115, %v2399
    %v3120 = vmul.f32 %v3118, %v2399
    %v3121 = vadd.f32 %v3119, 1e-05
    %v3122 = vadd.f32 %v3120, 1e-05
    %v3123 = vrsqrt.pop %v3121
    %v3124 = vrsqrt.pop %v3122
    %v3128 = vunpack.c.l.s4 269488144
    %v3129 = vunpack.c.0.s8 %v3128
    %v3130 = vlaneseq
    %v3131 = vshrl.u32 %v3130, 7
    %v3132 = vsub.s32 %v3129, %v3131
    %v3133 = vrot.slane %v3123, %v3132
    %v3135 = vunpack.c.l.s4 842150450
    %v3136 = vunpack.c.0.s8 %v3135
    %v3137 = vlaneseq
    %v3138 = vshrl.u32 %v3137, 7
    %v3139 = vsub.s32 %v3136, %v3138
    %v3140 = vrot.slane %v3123, %v3139
    %v3142 = vunpack.c.l.s4 1414812756
    %v3143 = vunpack.c.0.s8 %v3142
    %v3144 = vlaneseq
    %v3145 = vshrl.u32 %v3144, 7
    %v3146 = vsub.s32 %v3143, %v3145
    %v3147 = vrot.slane %v3123, %v3146
    %v3149 = vunpack.c.l.s4 1987475062
    %v3150 = vunpack.c.0.s8 %v3149
    %v3151 = vlaneseq
    %v3152 = vshrl.u32 %v3151, 7
    %v3153 = vsub.s32 %v3150, %v3152
    %v3154 = vrot.slane %v3123, %v3153
    %v3156 = vunpack.c.l.s4 269488144
    %v3157 = vunpack.c.0.s8 %v3156
    %v3158 = vlaneseq
    %v3159 = vshrl.u32 %v3158, 7
    %v3160 = vsub.s32 %v3157, %v3159
    %v3161 = vrot.slane %v3124, %v3160
    %v3163 = vunpack.c.l.s4 842150450
    %v3164 = vunpack.c.0.s8 %v3163
    %v3165 = vlaneseq
    %v3166 = vshrl.u32 %v3165, 7
    %v3167 = vsub.s32 %v3164, %v3166
    %v3168 = vrot.slane %v3124, %v3167
    %v3170 = vunpack.c.l.s4 1414812756
    %v3171 = vunpack.c.0.s8 %v3170
    %v3172 = vlaneseq
    %v3173 = vshrl.u32 %v3172, 7
    %v3174 = vsub.s32 %v3171, %v3173
    %v3175 = vrot.slane %v3124, %v3174
    %v3177 = vunpack.c.l.s4 1987475062
    %v3178 = vunpack.c.0.s8 %v3177
    %v3179 = vlaneseq
    %v3180 = vshrl.u32 %v3179, 7
    %v3181 = vsub.s32 %v3178, %v3180
    %v3182 = vrot.slane %v3124, %v3181
    %v3191 = vmul.f32 %v3053, %v3133
    %v3192 = vmul.f32 %v3054, %v3140
    %v3193 = vmul.f32 %v3055, %v3147
    %v3194 = vmul.f32 %v3056, %v3154
    %v3195 = vmul.f32 %v3057, %v3161
    %v3196 = vmul.f32 %v3058, %v3168
    %v3197 = vmul.f32 %v3059, %v3175
    %v3198 = vmul.f32 %v3060, %v3182
    %v3200 = vlaneseq
    %v3201 = vshrl.u32 %v3200, 7
    %v3202 = vsub.s32 0, %v3201
    %v3203 = vrot.slane %v2933, %v3202
    %v3204 = vcombine.high %v3203, %v3203
    %v3206 = vunpack.c.l.s4 1983009808
    %v3207 = vunpack.c.0.s8 %v3206
    %v3208 = vlaneseq
    %v3209 = vshrl.u32 %v3208, 7
    %v3210 = vsub.s32 %v3207, %v3209
    %v3211 = vrot.slane %v3203, %v3210
    %v3213 = vunpack.c.l.s4 1983009808
    %v3214 = vunpack.c.0.s8 %v3213
    %v3215 = vlaneseq
    %v3216 = vshrl.u32 %v3215, 7
    %v3217 = vsub.s32 %v3214, %v3216
    %v3218 = vrot.slane %v3204, %v3217
    %v3219 = vcombine.high %v3211, %v3211
    %v3220 = vcombine.high %v3218, %v3218
    %v3225 = vmul.f32 %v3191, %v3211
    %v3226 = vmul.f32 %v3192, %v3219
    %v3227 = vmul.f32 %v3193, %v3218
    %v3228 = vmul.f32 %v3194, %v3220
    %v3229 = vmul.f32 %v3195, %v3211
    %v3230 = vmul.f32 %v3196, %v3219
    %v3231 = vmul.f32 %v3197, %v3218
    %v3232 = vmul.f32 %v3198, %v3220
    %v3234 = vlaneseq
    %v3235 = vshrl.u32 %v3234, 7
    %v3236 = vsub.s32 0, %v3235
    %v3237 = vrot.slane %v2934, %v3236
    %v3238 = vcombine.high %v3237, %v3237
    %v3240 = vunpack.c.l.s4 1983009808
    %v3241 = vunpack.c.0.s8 %v3240
    %v3242 = vlaneseq
    %v3243 = vshrl.u32 %v3242, 7
    %v3244 = vsub.s32 %v3241, %v3243
    %v3245 = vrot.slane %v3237, %v3244
    %v3247 = vunpack.c.l.s4 1983009808
    %v3248 = vunpack.c.0.s8 %v3247
    %v3249 = vlaneseq
    %v3250 = vshrl.u32 %v3249, 7
    %v3251 = vsub.s32 %v3248, %v3250
    %v3252 = vrot.slane %v3238, %v3251
    %v3253 = vcombine.high %v3245, %v3245
    %v3254 = vcombine.high %v3252, %v3252
    %v3259 = vadd.f32 %v3225, %v3245
    %v3260 = vadd.f32 %v3226, %v3253
    %v3261 = vadd.f32 %v3227, %v3252
    %v3262 = vadd.f32 %v3228, %v3254
    %v3263 = vadd.f32 %v3229, %v3245
    %v3264 = vadd.f32 %v3230, %v3253
    %v3265 = vadd.f32 %v3231, %v3252
    %v3266 = vadd.f32 %v3232, %v3254
    %vm3267 = vcmask 254976
    %3268 = vst.msk [vmem:[#allocation5] sm:$0x3] %vm3267, %v3259
    %3269 = vst.msk [vmem:[#allocation5 + $0x2] sm:$0x3] %vm3267, %v3260
    %3270 = vst.msk [vmem:[#allocation5 + $0x4] sm:$0x3] %vm3267, %v3261
    %3271 = vst.msk [vmem:[#allocation5 + $0x6] sm:$0x3] %vm3267, %v3262
    %3272 = vst.msk [vmem:[#allocation5 + $0x8] sm:$0x3] %vm3267, %v3263
    %3273 = vst.msk [vmem:[#allocation5 + $0xa] sm:$0x3] %vm3267, %v3264
    %3274 = vst.msk [vmem:[#allocation5 + $0xc] sm:$0x3] %vm3267, %v3265
    %3275 = vst.msk [vmem:[#allocation5 + $0xe] sm:$0x3] %vm3267, %v3266
    // Predicated region
    $region58: #{tpu_custom_call.1} parent=1 // pred_check
      _
    $region59: #{tpu_custom_call.1} parent=1 // pred_check_branch
      %3277 = sbr.rel (0) target = $region61
    $region60: #{tpu_custom_call.1} parent=1 // pred_region
      %s3279 = ssub.s32 256, 256
      %3280 = vsyncadd [#allocation4], %s3279
      %s3281 = sshll.u32 [#allocation5], 4
      %s3282 = int_to_ptr.vmem [resolvable:$true] %s3281
      %3287 = dma.vmem_to_hbm [thread:$0]  %s3282, 256, %s13, [#allocation4], 32, 32, 2
    $region61: #{tpu_custom_call.1} parent=1 // pred_fallthru
      _
    // Predicated region
    $region62: #{tpu_custom_call.1} parent=1 // pred_check
      _
    $region63: #{tpu_custom_call.1} parent=1 // pred_check_branch
      %3289 = sbr.rel (0) target = $region65
    $region64: #{tpu_custom_call.1} parent=1 // pred_region
      %3290 = dma.done [#allocation4], 256
    $region65: #{tpu_custom_call.1} parent=1 // pred_fallthru
      _
    %3291 = vsyncpa [#allocation3], 1
    %3292 = vsyncpa [#allocation4], 1

</llo_original>
